<compile_context>
chip_gen: v6e
topology: v6e:2x2x1
jax: 0.10.0
libtpu: 0.0.40
codegen_flags: <defaults>
</compile_context>

<pallas_src>
import functools
import math

import numpy as np
import jax
import jax.numpy as jnp
from jax import lax
from jax.experimental import pallas as pl
from jax.experimental.pallas import tpu as pltpu


# ----------------------------------------------------------------------------
# Fused decoder-stack kernel.  grid = (num_layers,), serial ("arbitrary"):
# the hidden state lives in VMEM scratch across layer steps.
# ----------------------------------------------------------------------------
def _decoder_stack_kernel(
        # inputs
        x0_ref, enc_ref, dlen_ref, elen_ref,
        sa_wqkv_ref, sa_bqkv_ref, sa_g_ref, sa_b_ref,
        ca_wq_ref, ca_bq_ref, ca_wkv_ref, ca_bkv_ref, ca_g_ref, ca_b_ref,
        ff_w1_ref, ff_b1_ref, ff_w2_ref, ff_b2_ref, ff_g_ref, ff_b_ref,
        fc_g_ref, fc_b_ref, fc_w_ref,
        # outputs
        logp_ref, attn_ref,
        # scratch
        x_vmem,
        *, num_heads, ln_eps):
    layer = pl.program_id(0)
    n_layers = pl.num_programs(0)

    B, T, D = x_vmem.shape
    S = enc_ref.shape[1]
    H = num_heads
    dh = D // H
    scale = 1.0 / math.sqrt(dh)          # openspeech ScaledDotProductAttention
    f32 = jnp.float32

    # first layer: pull the embedded inputs into the carried VMEM state
    @pl.when(layer == 0)
    def _():
        x_vmem[...] = x0_ref[...]

    def layer_norm(z, g, b):              # z: (N, feat); nn.LayerNorm semantics
        m = jnp.mean(z, axis=-1, keepdims=True)
        v = jnp.mean(jnp.square(z - m), axis=-1, keepdims=True)
        return (z - m) * lax.rsqrt(v + ln_eps) * g + b

    def attention(q, k, v, mask, write_attn):
        # q: (B, Tq, D); k, v: (B, Tk, D); mask: (B, Tq, Tk) bool (True == drop)
        parts = []
        for h in range(H):                       # short static loop over heads
            sl = slice(h * dh, (h + 1) * dh)
            s = jnp.einsum("btd,bsd->bts", q[:, :, sl], k[:, :, sl],
                           preferred_element_type=f32) * scale
            s = jnp.where(mask, -1e9, s)
            s = s - jnp.max(s, axis=-1, keepdims=True)
            e = jnp.exp(s)
            p = e / jnp.sum(e, axis=-1, keepdims=True)
            if write_attn:                       # only cross-attn probs are kept
                attn_ref[h] = p                  # (B, Tq, Tk)
            parts.append(jnp.einsum("bts,bsd->btd", p, v[:, :, sl],
                                    preferred_element_type=f32))
        return jnp.concatenate(parts, axis=-1)   # (B, Tq, D)

    x = x_vmem[...]                              # (B, T, D)

    # ------------------ self-attention + AddNorm ---------------------------
    qkv = (jnp.dot(x.reshape(B * T, D), sa_wqkv_ref[...],
                   preferred_element_type=f32) + sa_bqkv_ref[...])
    qkv = qkv.reshape(B, T, 3 * D)
    row = lax.broadcasted_iota(jnp.int32, (B, T, T), 1)
    col = lax.broadcasted_iota(jnp.int32, (B, T, T), 2)
    self_mask = jnp.logical_or(col > row, col >= dlen_ref[...])   # causal | pad
    ctx = attention(qkv[:, :, :D], qkv[:, :, D:2 * D], qkv[:, :, 2 * D:],
                    self_mask, write_attn=False)  # self-attn probs discarded
    x = layer_norm((ctx + x).reshape(B * T, D),
                   sa_g_ref[...], sa_b_ref[...]).reshape(B, T, D)

    # ------------------ encoder-decoder attention + AddNorm ----------------
    q2 = (jnp.dot(x.reshape(B * T, D), ca_wq_ref[...],
                  preferred_element_type=f32) + ca_bq_ref[...]).reshape(B, T, D)
    kv = (jnp.dot(enc_ref[...].reshape(B * S, D), ca_wkv_ref[...],
                  preferred_element_type=f32) + ca_bkv_ref[...]).reshape(B, S, 2 * D)
    ecol = lax.broadcasted_iota(jnp.int32, (B, T, S), 2)
    enc_mask = ecol >= elen_ref[...]                               # encoder pad
    ctx2 = attention(q2, kv[:, :, :D], kv[:, :, D:], enc_mask, write_attn=True)
    x = layer_norm((ctx2 + x).reshape(B * T, D),
                   ca_g_ref[...], ca_b_ref[...]).reshape(B, T, D)

    # ------------------ position-wise feed forward + AddNorm ---------------
    h1 = jnp.maximum(
        jnp.dot(x.reshape(B * T, D), ff_w1_ref[...],
                preferred_element_type=f32) + ff_b1_ref[...], 0.0)
    ff = jnp.dot(h1, ff_w2_ref[...], preferred_element_type=f32) + ff_b2_ref[...]
    x = layer_norm(ff + x.reshape(B * T, D),
                   ff_g_ref[...], ff_b_ref[...]).reshape(B, T, D)

    x_vmem[...] = x                                # carry to next layer step

    # ------------------ fc head: LayerNorm -> Linear(no bias) -> log_softmax
    @pl.when(layer == n_layers - 1)
    def _():
        hf = layer_norm(x.reshape(B * T, D), fc_g_ref[...], fc_b_ref[...])
        logits = jnp.dot(hf, fc_w_ref[...], preferred_element_type=f32)
        m = jnp.max(logits, axis=-1, keepdims=True)
        sh = logits - m
        lse = jnp.log(jnp.sum(jnp.exp(sh), axis=-1, keepdims=True))
        logp_ref[...] = (sh - lse).reshape(B, T, logits.shape[-1])


# ----------------------------------------------------------------------------
# wrapper: embedding/PE glue + single pallas_call over the layer grid
# ----------------------------------------------------------------------------
def speech_transformer_decoder_forward(params, encoder_outputs, decoder_inputs,
                                       target_lengths, encoder_output_lengths,
                                       num_heads):
    B, T = decoder_inputs.shape
    D = params["emb"].shape[1]
    S = encoder_outputs.shape[1]
    C = params["fc_w"].shape[1]
    L = params["sa_wqkv"].shape[0]
    F = params["ff_w1"].shape[2]
    H = num_heads

    # embedding (gather is JAX glue) * sqrt(D) + sinusoidal PE; dropout = identity
    x0 = params["emb"][decoder_inputs] * math.sqrt(D) + params["pe"][:T][None]

    dlen = target_lengths.reshape(B, 1, 1).astype(jnp.int32)
    elen = encoder_output_lengths.reshape(B, 1, 1).astype(jnp.int32)

    full3 = lambda l: (0, 0, 0)
    perl3 = lambda l: (l, 0, 0)

    grid_spec = pltpu.PrefetchScalarGridSpec(
        num_scalar_prefetch=0,
        grid=(L,),
        in_specs=[
            pl.BlockSpec((B, T, D), full3),            # embedded decoder inputs
            pl.BlockSpec((B, S, D), full3),            # encoder outputs
            pl.BlockSpec((B, 1, 1), full3),            # decoder lengths
            pl.BlockSpec((B, 1, 1), full3),            # encoder lengths
            pl.BlockSpec((None, D, 3 * D), perl3),     # self-attn W_qkv (packed)
            pl.BlockSpec((None, 1, 3 * D), perl3),     # self-attn b_qkv
            pl.BlockSpec((None, 1, D), perl3),         # self-attn AddNorm gamma
            pl.BlockSpec((None, 1, D), perl3),         # self-attn AddNorm beta
            pl.BlockSpec((None, D, D), perl3),         # cross-attn W_q
            pl.BlockSpec((None, 1, D), perl3),         # cross-attn b_q
            pl.BlockSpec((None, D, 2 * D), perl3),     # cross-attn W_kv (packed)
            pl.BlockSpec((None, 1, 2 * D), perl3),     # cross-attn b_kv
            pl.BlockSpec((None, 1, D), perl3),         # cross-attn AddNorm gamma
            pl.BlockSpec((None, 1, D), perl3),         # cross-attn AddNorm beta
            pl.BlockSpec((None, D, F), perl3),         # ff W1
            pl.BlockSpec((None, 1, F), perl3),         # ff b1
            pl.BlockSpec((None, F, D), perl3),         # ff W2
            pl.BlockSpec((None, 1, D), perl3),         # ff b2
            pl.BlockSpec((None, 1, D), perl3),         # ff AddNorm gamma
            pl.BlockSpec((None, 1, D), perl3),         # ff AddNorm beta
            pl.BlockSpec((1, D), lambda l: (0, 0)),    # fc LayerNorm gamma
            pl.BlockSpec((1, D), lambda l: (0, 0)),    # fc LayerNorm beta
            pl.BlockSpec((D, C), lambda l: (0, 0)),    # fc weight (no bias)
        ],
        out_specs=(
            pl.BlockSpec((B, T, C), full3),                      # log-probs
            pl.BlockSpec((H, B, T, S), lambda l: (0, 0, 0, 0)),  # last-layer attn
        ),
        scratch_shapes=[pltpu.VMEM((B, T, D), jnp.float32)],     # carried state
    )

    kernel = functools.partial(_decoder_stack_kernel, num_heads=H, ln_eps=1e-5)

    logp, attn = pl.pallas_call(
        kernel,
        grid_spec=grid_spec,
        out_shape=(
            jax.ShapeDtypeStruct((B, T, C), jnp.float32),
            jax.ShapeDtypeStruct((H, B, T, S), jnp.float32),
        ),
        compiler_params=pltpu.CompilerParams(
            dimension_semantics=("arbitrary",),     # layers are sequential
            vmem_limit_bytes=32 * 1024 * 1024),
    )(x0, encoder_outputs, dlen, elen,
      params["sa_wqkv"], params["sa_bqkv"], params["sa_ln_g"], params["sa_ln_b"],
      params["ca_wq"], params["ca_bq"], params["ca_wkv"], params["ca_bkv"],
      params["ca_ln_g"], params["ca_ln_b"],
      params["ff_w1"], params["ff_b1"], params["ff_w2"], params["ff_b2"],
      params["ff_ln_g"], params["ff_ln_b"],
      params["fc_ln_g"], params["fc_ln_b"], params["fc_w"])

    # TODO(synk): openspeech's MultiHeadAttention returns attn as (B*H, T, S);
    # we return the equivalent (B, H, T, S) layout.
    attn = jnp.transpose(attn, (1, 0, 2, 3))
    return logp, attn


# ----------------------------------------------------------------------------
# deterministic synthetic parameters (no checkpoint), per-layer weights stacked
# ----------------------------------------------------------------------------
def init_params(key, num_classes, d_model, d_ff, num_layers, num_heads,
                pad_id, max_len):
    D, F, L, C = d_model, d_ff, num_layers, num_classes
    keys = jax.random.split(key, 16)
    it = iter(keys)

    def nrm(shape, scale=0.1):
        return scale * jax.random.normal(next(it), shape, dtype=jnp.float32)

    emb = nrm((C, D), 1.0 / math.sqrt(D))
    emb = emb.at[pad_id].set(0.0)                  # padding_idx row

    pos = np.arange(max_len)[:, None].astype(np.float32)
    div = np.exp(np.arange(0, D, 2).astype(np.float32) * -(math.log(10000.0) / D))
    pe = np.zeros((max_len, D), np.float32)
    pe[:, 0::2] = np.sin(pos * div)
    pe[:, 1::2] = np.cos(pos * div)

    return dict(
        emb=emb, pe=jnp.asarray(pe),
        sa_wqkv=nrm((L, D, 3 * D)), sa_bqkv=nrm((L, 1, 3 * D), 0.02),
        sa_ln_g=jnp.ones((L, 1, D), jnp.float32),
        sa_ln_b=jnp.zeros((L, 1, D), jnp.float32),
        ca_wq=nrm((L, D, D)), ca_bq=nrm((L, 1, D), 0.02),
        ca_wkv=nrm((L, D, 2 * D)), ca_bkv=nrm((L, 1, 2 * D), 0.02),
        ca_ln_g=jnp.ones((L, 1, D), jnp.float32),
        ca_ln_b=jnp.zeros((L, 1, D), jnp.float32),
        ff_w1=nrm((L, D, F)), ff_b1=nrm((L, 1, F), 0.02),
        ff_w2=nrm((L, F, D)), ff_b2=nrm((L, 1, D), 0.02),
        ff_ln_g=jnp.ones((L, 1, D), jnp.float32),
        ff_ln_b=jnp.zeros((L, 1, D), jnp.float32),
        fc_ln_g=jnp.ones((1, D), jnp.float32),
        fc_ln_b=jnp.zeros((1, D), jnp.float32),
        fc_w=nrm((D, C)),
    )


# ----------------------------------------------------------------------------
# pure-JAX reference for the correctness check
# ----------------------------------------------------------------------------
def reference_forward(params, encoder_outputs, decoder_inputs,
                      target_lengths, encoder_output_lengths, num_heads):
    hp = lax.Precision.HIGHEST
    D = params["emb"].shape[1]
    B, T = decoder_inputs.shape
    S = encoder_outputs.shape[1]
    H = num_heads
    dh = D // H
    scale = 1.0 / math.sqrt(dh)
    L = params["sa_wqkv"].shape[0]

    def ln(x, g, b, eps=1e-5):
        m = jnp.mean(x, -1, keepdims=True)
        v = jnp.mean(jnp.square(x - m), -1, keepdims=True)
        return (x - m) / jnp.sqrt(v + eps) * g + b

    def mha(q, k, v, mask):
        Tq, Tk = q.shape[1], k.shape[1]
        qh = q.reshape(B, Tq, H, dh).transpose(0, 2, 1, 3)
        kh = k.reshape(B, Tk, H, dh).transpose(0, 2, 1, 3)
        vh = v.reshape(B, Tk, H, dh).transpose(0, 2, 1, 3)
        s = jnp.einsum("bhtd,bhsd->bhts", qh, kh, precision=hp) * scale
        s = jnp.where(mask[:, None], -1e9, s)
        p = jax.nn.softmax(s, -1)
        ctx = jnp.einsum("bhts,bhsd->bhtd", p, vh, precision=hp)
        return ctx.transpose(0, 2, 1, 3).reshape(B, Tq, D), p

    x = params["emb"][decoder_inputs] * math.sqrt(D) + params["pe"][:T][None]

    causal = jnp.arange(T)[None, :] > jnp.arange(T)[:, None]        # (T, T)
    dpad = jnp.arange(T)[None, :] >= target_lengths[:, None]        # (B, T)
    self_mask = causal[None] | dpad[:, None, :]                     # (B, T, T)
    epad = jnp.arange(S)[None, :] >= encoder_output_lengths[:, None]
    enc_mask = jnp.broadcast_to(epad[:, None, :], (B, T, S))

    attn = None
    for l in range(L):
        qkv = jnp.dot(x, params["sa_wqkv"][l], precision=hp) + params["sa_bqkv"][l]
        ctx, _ = mha(qkv[..., :D], qkv[..., D:2 * D], qkv[..., 2 * D:], self_mask)
        x = ln(ctx + x, params["sa_ln_g"][l], params["sa_ln_b"][l])

        q2 = jnp.dot(x, params["ca_wq"][l], precision=hp) + params["ca_bq"][l]
        kv = jnp.dot(encoder_outputs, params["ca_wkv"][l], precision=hp) + params["ca_bkv"][l]
        ctx2, attn = mha(q2, kv[..., :D], kv[..., D:], enc_mask)
        x = ln(ctx2 + x, params["ca_ln_g"][l], params["ca_ln_b"][l])

        h1 = jax.nn.relu(jnp.dot(x, params["ff_w1"][l], precision=hp) + params["ff_b1"][l])
        ff = jnp.dot(h1, params["ff_w2"][l], precision=hp) + params["ff_b2"][l]
        x = ln(ff + x, params["ff_ln_g"][l], params["ff_ln_b"][l])

    hx = ln(x, params["fc_ln_g"], params["fc_ln_b"])
    logits = jnp.dot(hx, params["fc_w"], precision=hp)
    return jax.nn.log_softmax(logits, -1), attn


# ----------------------------------------------------------------------------
if __name__ == "__main__":
    num_classes = 32
    d_model = 32
    d_ff = 64
    num_layers = 2
    num_heads = 4
    pad_id, eos_id = 0, 3
    B, T, S = 2, 8, 16

    root = jax.random.PRNGKey(0)
    k_par, k_enc, k_tgt = jax.random.split(root, 3)

    params = init_params(k_par, num_classes, d_model, d_ff, num_layers,
                         num_heads, pad_id, max_len=64)
    encoder_outputs = jax.random.normal(k_enc, (B, S, d_model), dtype=jnp.float32)

    # targets with a trailing eos column so the eos filter actually removes tokens
    body = np.asarray(jax.random.randint(k_tgt, (B, T), 4, num_classes))
    targets = np.concatenate([body, np.full((B, 1), eos_id, body.dtype)], axis=1)
    # targets[targets != eos_id].view(B, -1): data-dependent output shape ->
    # done host-side, mirroring the PyTorch forward exactly.
    decoder_inputs = jnp.asarray(targets[targets != eos_id].reshape(B, -1))

    target_lengths = jnp.full((B,), decoder_inputs.shape[1], dtype=jnp.int32)
    encoder_output_lengths = jnp.asarray([S, S - 4], dtype=jnp.int32)

    fwd = jax.jit(speech_transformer_decoder_forward, static_argnums=5)
    logp, attn = fwd(params, encoder_outputs, decoder_inputs,
                     target_lengths, encoder_output_lengths, num_heads)
    logp = jax.block_until_ready(logp)
    attn = jax.block_until_ready(attn)

    ref_logp, ref_attn = reference_forward(params, encoder_outputs, decoder_inputs,
                                           target_lengths, encoder_output_lengths,
                                           num_heads)
    np.testing.assert_allclose(np.asarray(logp), np.asarray(ref_logp),
                               rtol=5e-3, atol=5e-3)
    np.testing.assert_allclose(np.asarray(attn), np.asarray(ref_attn),
                               rtol=5e-3, atol=5e-3)
    print("KERNEL_OK")
</pallas_src>

<mosaic_0001>
module attributes {stable_mosaic.version = 11 : i64} {
  func.func @_decoder_stack_kernel(%arg0: i32, %arg1: memref<2x8x32xf32, #tpu.memory_space<vmem>>, %arg2: memref<2x16x32xf32, #tpu.memory_space<vmem>>, %arg3: memref<2x1x1xi32, #tpu.memory_space<vmem>>, %arg4: memref<2x1x1xi32, #tpu.memory_space<vmem>>, %arg5: memref<1x32x96xf32, #tpu.memory_space<vmem>>, %arg6: memref<1x1x96xf32, #tpu.memory_space<vmem>>, %arg7: memref<1x1x32xf32, #tpu.memory_space<vmem>>, %arg8: memref<1x1x32xf32, #tpu.memory_space<vmem>>, %arg9: memref<1x32x32xf32, #tpu.memory_space<vmem>>, %arg10: memref<1x1x32xf32, #tpu.memory_space<vmem>>, %arg11: memref<1x32x64xf32, #tpu.memory_space<vmem>>, %arg12: memref<1x1x64xf32, #tpu.memory_space<vmem>>, %arg13: memref<1x1x32xf32, #tpu.memory_space<vmem>>, %arg14: memref<1x1x32xf32, #tpu.memory_space<vmem>>, %arg15: memref<1x32x64xf32, #tpu.memory_space<vmem>>, %arg16: memref<1x1x64xf32, #tpu.memory_space<vmem>>, %arg17: memref<1x64x32xf32, #tpu.memory_space<vmem>>, %arg18: memref<1x1x32xf32, #tpu.memory_space<vmem>>, %arg19: memref<1x1x32xf32, #tpu.memory_space<vmem>>, %arg20: memref<1x1x32xf32, #tpu.memory_space<vmem>>, %arg21: memref<1x32xf32, #tpu.memory_space<vmem>>, %arg22: memref<1x32xf32, #tpu.memory_space<vmem>>, %arg23: memref<32x32xf32, #tpu.memory_space<vmem>>, %arg24: memref<2x8x32xf32, #tpu.memory_space<vmem>>, %arg25: memref<4x2x8x16xf32, #tpu.memory_space<vmem>>, %arg26: memref<2x8x32xf32, #tpu.memory_space<vmem>>) attributes {dimension_semantics = [#tpu.dimension_semantics<arbitrary>], iteration_bounds = array<i64: 2>, scalar_prefetch = 0 : i64, scratch_operands = 1 : i64, tpu.core_type = #tpu.core_type<tc>, window_params = [{pipeline_mode = #tpu.pipeline_mode<synchronous>, transform_indices = @transform_0, window_bounds = array<i64: 2, 8, 32>}, {pipeline_mode = #tpu.pipeline_mode<synchronous>, transform_indices = @transform_1, window_bounds = array<i64: 2, 16, 32>}, {pipeline_mode = #tpu.pipeline_mode<synchronous>, transform_indices = @transform_2, window_bounds = array<i64: 2, 1, 1>}, {pipeline_mode = #tpu.pipeline_mode<synchronous>, transform_indices = @transform_3, window_bounds = array<i64: 2, 1, 1>}, {transform_indices = @transform_4, window_bounds = array<i64: 1, 32, 96>}, {transform_indices = @transform_5, window_bounds = array<i64: 1, 1, 96>}, {transform_indices = @transform_6, window_bounds = array<i64: 1, 1, 32>}, {transform_indices = @transform_7, window_bounds = array<i64: 1, 1, 32>}, {transform_indices = @transform_8, window_bounds = array<i64: 1, 32, 32>}, {transform_indices = @transform_9, window_bounds = array<i64: 1, 1, 32>}, {transform_indices = @transform_10, window_bounds = array<i64: 1, 32, 64>}, {transform_indices = @transform_11, window_bounds = array<i64: 1, 1, 64>}, {transform_indices = @transform_12, window_bounds = array<i64: 1, 1, 32>}, {transform_indices = @transform_13, window_bounds = array<i64: 1, 1, 32>}, {transform_indices = @transform_14, window_bounds = array<i64: 1, 32, 64>}, {transform_indices = @transform_15, window_bounds = array<i64: 1, 1, 64>}, {transform_indices = @transform_16, window_bounds = array<i64: 1, 64, 32>}, {transform_indices = @transform_17, window_bounds = array<i64: 1, 1, 32>}, {transform_indices = @transform_18, window_bounds = array<i64: 1, 1, 32>}, {transform_indices = @transform_19, window_bounds = array<i64: 1, 1, 32>}, {pipeline_mode = #tpu.pipeline_mode<synchronous>, transform_indices = @transform_20, window_bounds = array<i64: 1, 32>}, {pipeline_mode = #tpu.pipeline_mode<synchronous>, transform_indices = @transform_21, window_bounds = array<i64: 1, 32>}, {pipeline_mode = #tpu.pipeline_mode<synchronous>, transform_indices = @transform_22, window_bounds = array<i64: 32, 32>}, {pipeline_mode = #tpu.pipeline_mode<synchronous>, transform_indices = @transform_23, window_bounds = array<i64: 2, 8, 32>}, {pipeline_mode = #tpu.pipeline_mode<synchronous>, transform_indices = @transform_24, window_bounds = array<i64: 4, 2, 8, 16>}]} {
    %c0_i32 = arith.constant 0 : i32
    %0 = arith.cmpi eq, %arg0, %c0_i32 : i32
    %1 = arith.extui %0 : i1 to i32
    %c0_i32_0 = arith.constant 0 : i32
    %2 = arith.cmpi ne, %1, %c0_i32_0 : i32
    scf.if %2 {
      %c0_145 = arith.constant 0 : index
      %c0_146 = arith.constant 0 : index
      %c0_147 = arith.constant 0 : index
      %314 = vector.load %arg1[%c0_145, %c0_146, %c0_147] : memref<2x8x32xf32, #tpu.memory_space<vmem>>, vector<2x8x32xf32>
      %c0_148 = arith.constant 0 : index
      %c0_149 = arith.constant 0 : index
      %c0_150 = arith.constant 0 : index
      %315 = vector.load %arg26[%c0_148, %c0_149, %c0_150] : memref<2x8x32xf32, #tpu.memory_space<vmem>>, vector<2x8x32xf32>
      tpu.vector_store %arg26[%c0_148, %c0_149, %c0_150], %314 {strides = array<i32>} : memref<2x8x32xf32, #tpu.memory_space<vmem>>, vector<2x8x32xf32>,
    } else {
    }
    %c0 = arith.constant 0 : index
    %c0_1 = arith.constant 0 : index
    %c0_2 = arith.constant 0 : index
    %3 = vector.load %arg26[%c0, %c0_1, %c0_2] : memref<2x8x32xf32, #tpu.memory_space<vmem>>, vector<2x8x32xf32>
    %4 = vector.shape_cast %3 : vector<2x8x32xf32> to vector<16x32xf32>
    %c0_3 = arith.constant 0 : index
    %c0_4 = arith.constant 0 : index
    %c0_5 = arith.constant 0 : index
    %5 = vector.load %arg5[%c0_3, %c0_4, %c0_5] : memref<1x32x96xf32, #tpu.memory_space<vmem>>, vector<1x32x96xf32>
    %6 = vector.shape_cast %5 : vector<1x32x96xf32> to vector<32x96xf32>
    %cst = arith.constant dense<0.000000e+00> : vector<16x96xf32>
    %7 = tpu.matmul %4, %6, %cst {dimension_numbers = #tpu.dot_dimension_numbers<[1], [0], [0], [1], [0, 0, 1, 1], [], []>} : vector<16x32xf32>, vector<32x96xf32>, vector<16x96xf32> -> vector<16x96xf32>
    %c0_6 = arith.constant 0 : index
    %c0_7 = arith.constant 0 : index
    %c0_8 = arith.constant 0 : index
    %8 = vector.load %arg6[%c0_6, %c0_7, %c0_8] : memref<1x1x96xf32, #tpu.memory_space<vmem>>, vector<1x1x96xf32>
    %9 = vector.shape_cast %8 : vector<1x1x96xf32> to vector<1x96xf32>
    %10 = vector.broadcast %9 : vector<1x96xf32> to vector<16x96xf32>
    %11 = arith.addf %7, %10 : vector<16x96xf32>
    %12 = vector.shape_cast %11 : vector<16x96xf32> to vector<2x8x96xf32>
    %13 = tpu.iota {dimensions = array<i32: 1>} : vector<2x8x8xi32>
    %14 = tpu.iota {dimensions = array<i32: 2>} : vector<2x8x8xi32>
    %15 = arith.cmpi sgt, %14, %13 : vector<2x8x8xi32>
    %c0_9 = arith.constant 0 : index
    %c0_10 = arith.constant 0 : index
    %c0_11 = arith.constant 0 : index
    %16 = vector.load %arg3[%c0_9, %c0_10, %c0_11] : memref<2x1x1xi32, #tpu.memory_space<vmem>>, vector<2x1x1xi32>
    %17 = vector.broadcast %16 : vector<2x1x1xi32> to vector<2x8x8xi32>
    %18 = arith.cmpi sge, %14, %17 : vector<2x8x8xi32>
    %19 = arith.ori %15, %18 : vector<2x8x8xi1>
    %20 = vector.extract_strided_slice %12 {offsets = [0, 0, 0], sizes = [2, 8, 32], strides = [1, 1, 1]} : vector<2x8x96xf32> to vector<2x8x32xf32>
    %21 = vector.extract_strided_slice %12 {offsets = [0, 0, 32], sizes = [2, 8, 32], strides = [1, 1, 1]} : vector<2x8x96xf32> to vector<2x8x32xf32>
    %22 = vector.extract_strided_slice %12 {offsets = [0, 0, 64], sizes = [2, 8, 32], strides = [1, 1, 1]} : vector<2x8x96xf32> to vector<2x8x32xf32>
    %23 = vector.extract_strided_slice %20 {offsets = [0, 0, 0], sizes = [2, 8, 8], strides = [1, 1, 1]} : vector<2x8x32xf32> to vector<2x8x8xf32>
    %24 = vector.extract_strided_slice %21 {offsets = [0, 0, 0], sizes = [2, 8, 8], strides = [1, 1, 1]} : vector<2x8x32xf32> to vector<2x8x8xf32>
    "tpu.trace_start"() <{level = 10 : i32, message = "btd,bsd->bts"}> : () -> ()
    %cst_12 = arith.constant dense<0.000000e+00> : vector<2x8x8xf32>
    %25 = tpu.matmul %23, %24, %cst_12 {dimension_numbers = #tpu.dot_dimension_numbers<[2], [2], [1], [1], [0, 0, 0, 1, 1, 1], [0], [0]>} : vector<2x8x8xf32>, vector<2x8x8xf32>, vector<2x8x8xf32> -> vector<2x8x8xf32>
    "tpu.trace_stop"() : () -> ()
    %cst_13 = arith.constant 0.353553385 : f32
    %26 = vector.broadcast %cst_13 : f32 to vector<2x8x8xf32>
    %27 = arith.mulf %25, %26 : vector<2x8x8xf32>
    %cst_14 = arith.constant -1.000000e+09 : f32
    %28 = vector.broadcast %cst_14 : f32 to vector<2x8x8xf32>
    %29 = arith.select %19, %28, %27 : vector<2x8x8xi1>, vector<2x8x8xf32>
    %cst_15 = arith.constant dense<0xFF800000> : vector<2x8xf32>
    %30 = vector.multi_reduction <maximumf>, %29, %cst_15 [2] : vector<2x8x8xf32> to vector<2x8xf32>
    %31 = vector.shape_cast %30 : vector<2x8xf32> to vector<2x8x1xf32>
    %32 = vector.broadcast %31 : vector<2x8x1xf32> to vector<2x8x8xf32>
    %33 = arith.subf %29, %32 : vector<2x8x8xf32>
    %34 = math.exp %33 : vector<2x8x8xf32>
    %cst_16 = arith.constant dense<0.000000e+00> : vector<2x8xf32>
    %35 = vector.multi_reduction <add>, %34, %cst_16 [2] : vector<2x8x8xf32> to vector<2x8xf32>
    %36 = vector.shape_cast %35 : vector<2x8xf32> to vector<2x8x1xf32>
    %37 = vector.broadcast %36 : vector<2x8x1xf32> to vector<2x8x8xf32>
    %38 = arith.divf %34, %37 : vector<2x8x8xf32>
    %39 = vector.extract_strided_slice %22 {offsets = [0, 0, 0], sizes = [2, 8, 8], strides = [1, 1, 1]} : vector<2x8x32xf32> to vector<2x8x8xf32>
    "tpu.trace_start"() <{level = 10 : i32, message = "bts,bsd->btd"}> : () -> ()
    %cst_17 = arith.constant dense<0.000000e+00> : vector<2x8x8xf32>
    %40 = tpu.matmul %38, %39, %cst_17 {dimension_numbers = #tpu.dot_dimension_numbers<[2], [1], [1], [2], [0, 0, 0, 1, 1, 2], [0], [0]>} : vector<2x8x8xf32>, vector<2x8x8xf32>, vector<2x8x8xf32> -> vector<2x8x8xf32>
    "tpu.trace_stop"() : () -> ()
    %41 = vector.extract_strided_slice %20 {offsets = [0, 0, 8], sizes = [2, 8, 8], strides = [1, 1, 1]} : vector<2x8x32xf32> to vector<2x8x8xf32>
    %42 = vector.extract_strided_slice %21 {offsets = [0, 0, 8], sizes = [2, 8, 8], strides = [1, 1, 1]} : vector<2x8x32xf32> to vector<2x8x8xf32>
    "tpu.trace_start"() <{level = 10 : i32, message = "btd,bsd->bts"}> : () -> ()
    %cst_18 = arith.constant dense<0.000000e+00> : vector<2x8x8xf32>
    %43 = tpu.matmul %41, %42, %cst_18 {dimension_numbers = #tpu.dot_dimension_numbers<[2], [2], [1], [1], [0, 0, 0, 1, 1, 1], [0], [0]>} : vector<2x8x8xf32>, vector<2x8x8xf32>, vector<2x8x8xf32> -> vector<2x8x8xf32>
    "tpu.trace_stop"() : () -> ()
    %cst_19 = arith.constant 0.353553385 : f32
    %44 = vector.broadcast %cst_19 : f32 to vector<2x8x8xf32>
    %45 = arith.mulf %43, %44 : vector<2x8x8xf32>
    %cst_20 = arith.constant -1.000000e+09 : f32
    %46 = vector.broadcast %cst_20 : f32 to vector<2x8x8xf32>
    %47 = arith.select %19, %46, %45 : vector<2x8x8xi1>, vector<2x8x8xf32>
    %cst_21 = arith.constant dense<0xFF800000> : vector<2x8xf32>
    %48 = vector.multi_reduction <maximumf>, %47, %cst_21 [2] : vector<2x8x8xf32> to vector<2x8xf32>
    %49 = vector.shape_cast %48 : vector<2x8xf32> to vector<2x8x1xf32>
    %50 = vector.broadcast %49 : vector<2x8x1xf32> to vector<2x8x8xf32>
    %51 = arith.subf %47, %50 : vector<2x8x8xf32>
    %52 = math.exp %51 : vector<2x8x8xf32>
    %cst_22 = arith.constant dense<0.000000e+00> : vector<2x8xf32>
    %53 = vector.multi_reduction <add>, %52, %cst_22 [2] : vector<2x8x8xf32> to vector<2x8xf32>
    %54 = vector.shape_cast %53 : vector<2x8xf32> to vector<2x8x1xf32>
    %55 = vector.broadcast %54 : vector<2x8x1xf32> to vector<2x8x8xf32>
    %56 = arith.divf %52, %55 : vector<2x8x8xf32>
    %57 = vector.extract_strided_slice %22 {offsets = [0, 0, 8], sizes = [2, 8, 8], strides = [1, 1, 1]} : vector<2x8x32xf32> to vector<2x8x8xf32>
    "tpu.trace_start"() <{level = 10 : i32, message = "bts,bsd->btd"}> : () -> ()
    %cst_23 = arith.constant dense<0.000000e+00> : vector<2x8x8xf32>
    %58 = tpu.matmul %56, %57, %cst_23 {dimension_numbers = #tpu.dot_dimension_numbers<[2], [1], [1], [2], [0, 0, 0, 1, 1, 2], [0], [0]>} : vector<2x8x8xf32>, vector<2x8x8xf32>, vector<2x8x8xf32> -> vector<2x8x8xf32>
    "tpu.trace_stop"() : () -> ()
    %59 = vector.extract_strided_slice %20 {offsets = [0, 0, 16], sizes = [2, 8, 8], strides = [1, 1, 1]} : vector<2x8x32xf32> to vector<2x8x8xf32>
    %60 = vector.extract_strided_slice %21 {offsets = [0, 0, 16], sizes = [2, 8, 8], strides = [1, 1, 1]} : vector<2x8x32xf32> to vector<2x8x8xf32>
    "tpu.trace_start"() <{level = 10 : i32, message = "btd,bsd->bts"}> : () -> ()
    %cst_24 = arith.constant dense<0.000000e+00> : vector<2x8x8xf32>
    %61 = tpu.matmul %59, %60, %cst_24 {dimension_numbers = #tpu.dot_dimension_numbers<[2], [2], [1], [1], [0, 0, 0, 1, 1, 1], [0], [0]>} : vector<2x8x8xf32>, vector<2x8x8xf32>, vector<2x8x8xf32> -> vector<2x8x8xf32>
    "tpu.trace_stop"() : () -> ()
    %cst_25 = arith.constant 0.353553385 : f32
    %62 = vector.broadcast %cst_25 : f32 to vector<2x8x8xf32>
    %63 = arith.mulf %61, %62 : vector<2x8x8xf32>
    %cst_26 = arith.constant -1.000000e+09 : f32
    %64 = vector.broadcast %cst_26 : f32 to vector<2x8x8xf32>
    %65 = arith.select %19, %64, %63 : vector<2x8x8xi1>, vector<2x8x8xf32>
    %cst_27 = arith.constant dense<0xFF800000> : vector<2x8xf32>
    %66 = vector.multi_reduction <maximumf>, %65, %cst_27 [2] : vector<2x8x8xf32> to vector<2x8xf32>
    %67 = vector.shape_cast %66 : vector<2x8xf32> to vector<2x8x1xf32>
    %68 = vector.broadcast %67 : vector<2x8x1xf32> to vector<2x8x8xf32>
    %69 = arith.subf %65, %68 : vector<2x8x8xf32>
    %70 = math.exp %69 : vector<2x8x8xf32>
    %cst_28 = arith.constant dense<0.000000e+00> : vector<2x8xf32>
    %71 = vector.multi_reduction <add>, %70, %cst_28 [2] : vector<2x8x8xf32> to vector<2x8xf32>
    %72 = vector.shape_cast %71 : vector<2x8xf32> to vector<2x8x1xf32>
    %73 = vector.broadcast %72 : vector<2x8x1xf32> to vector<2x8x8xf32>
    %74 = arith.divf %70, %73 : vector<2x8x8xf32>
    %75 = vector.extract_strided_slice %22 {offsets = [0, 0, 16], sizes = [2, 8, 8], strides = [1, 1, 1]} : vector<2x8x32xf32> to vector<2x8x8xf32>
    "tpu.trace_start"() <{level = 10 : i32, message = "bts,bsd->btd"}> : () -> ()
    %cst_29 = arith.constant dense<0.000000e+00> : vector<2x8x8xf32>
    %76 = tpu.matmul %74, %75, %cst_29 {dimension_numbers = #tpu.dot_dimension_numbers<[2], [1], [1], [2], [0, 0, 0, 1, 1, 2], [0], [0]>} : vector<2x8x8xf32>, vector<2x8x8xf32>, vector<2x8x8xf32> -> vector<2x8x8xf32>
    "tpu.trace_stop"() : () -> ()
    %77 = vector.extract_strided_slice %20 {offsets = [0, 0, 24], sizes = [2, 8, 8], strides = [1, 1, 1]} : vector<2x8x32xf32> to vector<2x8x8xf32>
    %78 = vector.extract_strided_slice %21 {offsets = [0, 0, 24], sizes = [2, 8, 8], strides = [1, 1, 1]} : vector<2x8x32xf32> to vector<2x8x8xf32>
    "tpu.trace_start"() <{level = 10 : i32, message = "btd,bsd->bts"}> : () -> ()
    %cst_30 = arith.constant dense<0.000000e+00> : vector<2x8x8xf32>
    %79 = tpu.matmul %77, %78, %cst_30 {dimension_numbers = #tpu.dot_dimension_numbers<[2], [2], [1], [1], [0, 0, 0, 1, 1, 1], [0], [0]>} : vector<2x8x8xf32>, vector<2x8x8xf32>, vector<2x8x8xf32> -> vector<2x8x8xf32>
    "tpu.trace_stop"() : () -> ()
    %cst_31 = arith.constant 0.353553385 : f32
    %80 = vector.broadcast %cst_31 : f32 to vector<2x8x8xf32>
    %81 = arith.mulf %79, %80 : vector<2x8x8xf32>
    %cst_32 = arith.constant -1.000000e+09 : f32
    %82 = vector.broadcast %cst_32 : f32 to vector<2x8x8xf32>
    %83 = arith.select %19, %82, %81 : vector<2x8x8xi1>, vector<2x8x8xf32>
    %cst_33 = arith.constant dense<0xFF800000> : vector<2x8xf32>
    %84 = vector.multi_reduction <maximumf>, %83, %cst_33 [2] : vector<2x8x8xf32> to vector<2x8xf32>
    %85 = vector.shape_cast %84 : vector<2x8xf32> to vector<2x8x1xf32>
    %86 = vector.broadcast %85 : vector<2x8x1xf32> to vector<2x8x8xf32>
    %87 = arith.subf %83, %86 : vector<2x8x8xf32>
    %88 = math.exp %87 : vector<2x8x8xf32>
    %cst_34 = arith.constant dense<0.000000e+00> : vector<2x8xf32>
    %89 = vector.multi_reduction <add>, %88, %cst_34 [2] : vector<2x8x8xf32> to vector<2x8xf32>
    %90 = vector.shape_cast %89 : vector<2x8xf32> to vector<2x8x1xf32>
    %91 = vector.broadcast %90 : vector<2x8x1xf32> to vector<2x8x8xf32>
    %92 = arith.divf %88, %91 : vector<2x8x8xf32>
    %93 = vector.extract_strided_slice %22 {offsets = [0, 0, 24], sizes = [2, 8, 8], strides = [1, 1, 1]} : vector<2x8x32xf32> to vector<2x8x8xf32>
    "tpu.trace_start"() <{level = 10 : i32, message = "bts,bsd->btd"}> : () -> ()
    %cst_35 = arith.constant dense<0.000000e+00> : vector<2x8x8xf32>
    %94 = tpu.matmul %92, %93, %cst_35 {dimension_numbers = #tpu.dot_dimension_numbers<[2], [1], [1], [2], [0, 0, 0, 1, 1, 2], [0], [0]>} : vector<2x8x8xf32>, vector<2x8x8xf32>, vector<2x8x8xf32> -> vector<2x8x8xf32>
    "tpu.trace_stop"() : () -> ()
    %95 = tpu.concatenate %40, %58, %76, %94 in 2 : vector<2x8x8xf32>, vector<2x8x8xf32>, vector<2x8x8xf32>, vector<2x8x8xf32> -> vector<2x8x32xf32>
    %96 = arith.addf %95, %3 : vector<2x8x32xf32>
    %97 = vector.shape_cast %96 : vector<2x8x32xf32> to vector<16x32xf32>
    %c0_36 = arith.constant 0 : index
    %c0_37 = arith.constant 0 : index
    %c0_38 = arith.constant 0 : index
    %98 = vector.load %arg7[%c0_36, %c0_37, %c0_38] : memref<1x1x32xf32, #tpu.memory_space<vmem>>, vector<1x1x32xf32>
    %99 = vector.shape_cast %98 : vector<1x1x32xf32> to vector<1x32xf32>
    %c0_39 = arith.constant 0 : index
    %c0_40 = arith.constant 0 : index
    %c0_41 = arith.constant 0 : index
    %100 = vector.load %arg8[%c0_39, %c0_40, %c0_41] : memref<1x1x32xf32, #tpu.memory_space<vmem>>, vector<1x1x32xf32>
    %101 = vector.shape_cast %100 : vector<1x1x32xf32> to vector<1x32xf32>
    %cst_42 = arith.constant dense<0.000000e+00> : vector<16xf32>
    %102 = vector.multi_reduction <add>, %97, %cst_42 [1] : vector<16x32xf32> to vector<16xf32>
    %103 = vector.shape_cast %102 : vector<16xf32> to vector<16x1xf32>
    %cst_43 = arith.constant 3.200000e+01 : f32
    %104 = vector.broadcast %cst_43 : f32 to vector<16x1xf32>
    %105 = arith.divf %103, %104 : vector<16x1xf32>
    %106 = vector.broadcast %105 : vector<16x1xf32> to vector<16x32xf32>
    %107 = arith.subf %97, %106 : vector<16x32xf32>
    %108 = arith.mulf %107, %107 : vector<16x32xf32>
    %cst_44 = arith.constant dense<0.000000e+00> : vector<16xf32>
    %109 = vector.multi_reduction <add>, %108, %cst_44 [1] : vector<16x32xf32> to vector<16xf32>
    %110 = vector.shape_cast %109 : vector<16xf32> to vector<16x1xf32>
    %cst_45 = arith.constant 3.200000e+01 : f32
    %111 = vector.broadcast %cst_45 : f32 to vector<16x1xf32>
    %112 = arith.divf %110, %111 : vector<16x1xf32>
    %113 = vector.broadcast %105 : vector<16x1xf32> to vector<16x32xf32>
    %114 = arith.subf %97, %113 : vector<16x32xf32>
    %cst_46 = arith.constant 9.99999974E-6 : f32
    %115 = vector.broadcast %cst_46 : f32 to vector<16x1xf32>
    %116 = arith.addf %112, %115 : vector<16x1xf32>
    %117 = math.rsqrt %116 : vector<16x1xf32>
    %118 = vector.broadcast %117 : vector<16x1xf32> to vector<16x32xf32>
    %119 = arith.mulf %114, %118 : vector<16x32xf32>
    %120 = vector.broadcast %99 : vector<1x32xf32> to vector<16x32xf32>
    %121 = arith.mulf %119, %120 : vector<16x32xf32>
    %122 = vector.broadcast %101 : vector<1x32xf32> to vector<16x32xf32>
    %123 = arith.addf %121, %122 : vector<16x32xf32>
    %124 = vector.shape_cast %123 : vector<16x32xf32> to vector<2x8x32xf32>
    %125 = vector.shape_cast %124 : vector<2x8x32xf32> to vector<16x32xf32>
    %c0_47 = arith.constant 0 : index
    %c0_48 = arith.constant 0 : index
    %c0_49 = arith.constant 0 : index
    %126 = vector.load %arg9[%c0_47, %c0_48, %c0_49] : memref<1x32x32xf32, #tpu.memory_space<vmem>>, vector<1x32x32xf32>
    %127 = vector.shape_cast %126 : vector<1x32x32xf32> to vector<32x32xf32>
    %cst_50 = arith.constant dense<0.000000e+00> : vector<16x32xf32>
    %128 = tpu.matmul %125, %127, %cst_50 {dimension_numbers = #tpu.dot_dimension_numbers<[1], [0], [0], [1], [0, 0, 1, 1], [], []>} : vector<16x32xf32>, vector<32x32xf32>, vector<16x32xf32> -> vector<16x32xf32>
    %c0_51 = arith.constant 0 : index
    %c0_52 = arith.constant 0 : index
    %c0_53 = arith.constant 0 : index
    %129 = vector.load %arg10[%c0_51, %c0_52, %c0_53] : memref<1x1x32xf32, #tpu.memory_space<vmem>>, vector<1x1x32xf32>
    %130 = vector.shape_cast %129 : vector<1x1x32xf32> to vector<1x32xf32>
    %131 = vector.broadcast %130 : vector<1x32xf32> to vector<16x32xf32>
    %132 = arith.addf %128, %131 : vector<16x32xf32>
    %133 = vector.shape_cast %132 : vector<16x32xf32> to vector<2x8x32xf32>
    %c0_54 = arith.constant 0 : index
    %c0_55 = arith.constant 0 : index
    %c0_56 = arith.constant 0 : index
    %134 = vector.load %arg2[%c0_54, %c0_55, %c0_56] : memref<2x16x32xf32, #tpu.memory_space<vmem>>, vector<2x16x32xf32>
    %135 = vector.shape_cast %134 : vector<2x16x32xf32> to vector<32x32xf32>
    %c0_57 = arith.constant 0 : index
    %c0_58 = arith.constant 0 : index
    %c0_59 = arith.constant 0 : index
    %136 = vector.load %arg11[%c0_57, %c0_58, %c0_59] : memref<1x32x64xf32, #tpu.memory_space<vmem>>, vector<1x32x64xf32>
    %137 = vector.shape_cast %136 : vector<1x32x64xf32> to vector<32x64xf32>
    %cst_60 = arith.constant dense<0.000000e+00> : vector<32x64xf32>
    %138 = tpu.matmul %135, %137, %cst_60 {dimension_numbers = #tpu.dot_dimension_numbers<[1], [0], [0], [1], [0, 0, 1, 1], [], []>} : vector<32x32xf32>, vector<32x64xf32>, vector<32x64xf32> -> vector<32x64xf32>
    %c0_61 = arith.constant 0 : index
    %c0_62 = arith.constant 0 : index
    %c0_63 = arith.constant 0 : index
    %139 = vector.load %arg12[%c0_61, %c0_62, %c0_63] : memref<1x1x64xf32, #tpu.memory_space<vmem>>, vector<1x1x64xf32>
    %140 = vector.shape_cast %139 : vector<1x1x64xf32> to vector<1x64xf32>
    %141 = vector.broadcast %140 : vector<1x64xf32> to vector<32x64xf32>
    %142 = arith.addf %138, %141 : vector<32x64xf32>
    %143 = vector.shape_cast %142 : vector<32x64xf32> to vector<2x16x64xf32>
    %144 = tpu.iota {dimensions = array<i32: 2>} : vector<2x8x16xi32>
    %c0_64 = arith.constant 0 : index
    %c0_65 = arith.constant 0 : index
    %c0_66 = arith.constant 0 : index
    %145 = vector.load %arg4[%c0_64, %c0_65, %c0_66] : memref<2x1x1xi32, #tpu.memory_space<vmem>>, vector<2x1x1xi32>
    %146 = vector.broadcast %145 : vector<2x1x1xi32> to vector<2x8x16xi32>
    %147 = arith.cmpi sge, %144, %146 : vector<2x8x16xi32>
    %148 = vector.extract_strided_slice %143 {offsets = [0, 0, 0], sizes = [2, 16, 32], strides = [1, 1, 1]} : vector<2x16x64xf32> to vector<2x16x32xf32>
    %149 = vector.extract_strided_slice %143 {offsets = [0, 0, 32], sizes = [2, 16, 32], strides = [1, 1, 1]} : vector<2x16x64xf32> to vector<2x16x32xf32>
    %150 = vector.extract_strided_slice %133 {offsets = [0, 0, 0], sizes = [2, 8, 8], strides = [1, 1, 1]} : vector<2x8x32xf32> to vector<2x8x8xf32>
    %151 = vector.extract_strided_slice %148 {offsets = [0, 0, 0], sizes = [2, 16, 8], strides = [1, 1, 1]} : vector<2x16x32xf32> to vector<2x16x8xf32>
    "tpu.trace_start"() <{level = 10 : i32, message = "btd,bsd->bts"}> : () -> ()
    %cst_67 = arith.constant dense<0.000000e+00> : vector<2x8x16xf32>
    %152 = tpu.matmul %150, %151, %cst_67 {dimension_numbers = #tpu.dot_dimension_numbers<[2], [2], [1], [1], [0, 0, 0, 1, 1, 1], [0], [0]>} : vector<2x8x8xf32>, vector<2x16x8xf32>, vector<2x8x16xf32> -> vector<2x8x16xf32>
    "tpu.trace_stop"() : () -> ()
    %cst_68 = arith.constant 0.353553385 : f32
    %153 = vector.broadcast %cst_68 : f32 to vector<2x8x16xf32>
    %154 = arith.mulf %152, %153 : vector<2x8x16xf32>
    %cst_69 = arith.constant -1.000000e+09 : f32
    %155 = vector.broadcast %cst_69 : f32 to vector<2x8x16xf32>
    %156 = arith.select %147, %155, %154 : vector<2x8x16xi1>, vector<2x8x16xf32>
    %cst_70 = arith.constant dense<0xFF800000> : vector<2x8xf32>
    %157 = vector.multi_reduction <maximumf>, %156, %cst_70 [2] : vector<2x8x16xf32> to vector<2x8xf32>
    %158 = vector.shape_cast %157 : vector<2x8xf32> to vector<2x8x1xf32>
    %159 = vector.broadcast %158 : vector<2x8x1xf32> to vector<2x8x16xf32>
    %160 = arith.subf %156, %159 : vector<2x8x16xf32>
    %161 = math.exp %160 : vector<2x8x16xf32>
    %cst_71 = arith.constant dense<0.000000e+00> : vector<2x8xf32>
    %162 = vector.multi_reduction <add>, %161, %cst_71 [2] : vector<2x8x16xf32> to vector<2x8xf32>
    %163 = vector.shape_cast %162 : vector<2x8xf32> to vector<2x8x1xf32>
    %164 = vector.broadcast %163 : vector<2x8x1xf32> to vector<2x8x16xf32>
    %165 = arith.divf %161, %164 : vector<2x8x16xf32>
    %c0_72 = arith.constant 0 : index
    %c0_73 = arith.constant 0 : index
    %c0_74 = arith.constant 0 : index
    %c0_75 = arith.constant 0 : index
    %166 = vector.load %arg25[%c0_72, %c0_73, %c0_74, %c0_75] : memref<4x2x8x16xf32, #tpu.memory_space<vmem>>, vector<1x2x8x16xf32>
    %167 = vector.shape_cast %166 : vector<1x2x8x16xf32> to vector<2x8x16xf32>
    %168 = vector.shape_cast %165 : vector<2x8x16xf32> to vector<1x2x8x16xf32>
    tpu.vector_store %arg25[%c0_72, %c0_73, %c0_74, %c0_75], %168 {strides = array<i32>} : memref<4x2x8x16xf32, #tpu.memory_space<vmem>>, vector<1x2x8x16xf32>,
    %169 = vector.extract_strided_slice %149 {offsets = [0, 0, 0], sizes = [2, 16, 8], strides = [1, 1, 1]} : vector<2x16x32xf32> to vector<2x16x8xf32>
    "tpu.trace_start"() <{level = 10 : i32, message = "bts,bsd->btd"}> : () -> ()
    %cst_76 = arith.constant dense<0.000000e+00> : vector<2x8x8xf32>
    %170 = tpu.matmul %165, %169, %cst_76 {dimension_numbers = #tpu.dot_dimension_numbers<[2], [1], [1], [2], [0, 0, 0, 1, 1, 2], [0], [0]>} : vector<2x8x16xf32>, vector<2x16x8xf32>, vector<2x8x8xf32> -> vector<2x8x8xf32>
    "tpu.trace_stop"() : () -> ()
    %171 = vector.extract_strided_slice %133 {offsets = [0, 0, 8], sizes = [2, 8, 8], strides = [1, 1, 1]} : vector<2x8x32xf32> to vector<2x8x8xf32>
    %172 = vector.extract_strided_slice %148 {offsets = [0, 0, 8], sizes = [2, 16, 8], strides = [1, 1, 1]} : vector<2x16x32xf32> to vector<2x16x8xf32>
    "tpu.trace_start"() <{level = 10 : i32, message = "btd,bsd->bts"}> : () -> ()
    %cst_77 = arith.constant dense<0.000000e+00> : vector<2x8x16xf32>
    %173 = tpu.matmul %171, %172, %cst_77 {dimension_numbers = #tpu.dot_dimension_numbers<[2], [2], [1], [1], [0, 0, 0, 1, 1, 1], [0], [0]>} : vector<2x8x8xf32>, vector<2x16x8xf32>, vector<2x8x16xf32> -> vector<2x8x16xf32>
    "tpu.trace_stop"() : () -> ()
    %cst_78 = arith.constant 0.353553385 : f32
    %174 = vector.broadcast %cst_78 : f32 to vector<2x8x16xf32>
    %175 = arith.mulf %173, %174 : vector<2x8x16xf32>
    %cst_79 = arith.constant -1.000000e+09 : f32
    %176 = vector.broadcast %cst_79 : f32 to vector<2x8x16xf32>
    %177 = arith.select %147, %176, %175 : vector<2x8x16xi1>, vector<2x8x16xf32>
    %cst_80 = arith.constant dense<0xFF800000> : vector<2x8xf32>
    %178 = vector.multi_reduction <maximumf>, %177, %cst_80 [2] : vector<2x8x16xf32> to vector<2x8xf32>
    %179 = vector.shape_cast %178 : vector<2x8xf32> to vector<2x8x1xf32>
    %180 = vector.broadcast %179 : vector<2x8x1xf32> to vector<2x8x16xf32>
    %181 = arith.subf %177, %180 : vector<2x8x16xf32>
    %182 = math.exp %181 : vector<2x8x16xf32>
    %cst_81 = arith.constant dense<0.000000e+00> : vector<2x8xf32>
    %183 = vector.multi_reduction <add>, %182, %cst_81 [2] : vector<2x8x16xf32> to vector<2x8xf32>
    %184 = vector.shape_cast %183 : vector<2x8xf32> to vector<2x8x1xf32>
    %185 = vector.broadcast %184 : vector<2x8x1xf32> to vector<2x8x16xf32>
    %186 = arith.divf %182, %185 : vector<2x8x16xf32>
    %c1 = arith.constant 1 : index
    %c0_82 = arith.constant 0 : index
    %c0_83 = arith.constant 0 : index
    %c0_84 = arith.constant 0 : index
    %187 = vector.load %arg25[%c1, %c0_82, %c0_83, %c0_84] : memref<4x2x8x16xf32, #tpu.memory_space<vmem>>, vector<1x2x8x16xf32>
    %188 = vector.shape_cast %187 : vector<1x2x8x16xf32> to vector<2x8x16xf32>
    %189 = vector.shape_cast %186 : vector<2x8x16xf32> to vector<1x2x8x16xf32>
    tpu.vector_store %arg25[%c1, %c0_82, %c0_83, %c0_84], %189 {strides = array<i32>} : memref<4x2x8x16xf32, #tpu.memory_space<vmem>>, vector<1x2x8x16xf32>,
    %190 = vector.extract_strided_slice %149 {offsets = [0, 0, 8], sizes = [2, 16, 8], strides = [1, 1, 1]} : vector<2x16x32xf32> to vector<2x16x8xf32>
    "tpu.trace_start"() <{level = 10 : i32, message = "bts,bsd->btd"}> : () -> ()
    %cst_85 = arith.constant dense<0.000000e+00> : vector<2x8x8xf32>
    %191 = tpu.matmul %186, %190, %cst_85 {dimension_numbers = #tpu.dot_dimension_numbers<[2], [1], [1], [2], [0, 0, 0, 1, 1, 2], [0], [0]>} : vector<2x8x16xf32>, vector<2x16x8xf32>, vector<2x8x8xf32> -> vector<2x8x8xf32>
    "tpu.trace_stop"() : () -> ()
    %192 = vector.extract_strided_slice %133 {offsets = [0, 0, 16], sizes = [2, 8, 8], strides = [1, 1, 1]} : vector<2x8x32xf32> to vector<2x8x8xf32>
    %193 = vector.extract_strided_slice %148 {offsets = [0, 0, 16], sizes = [2, 16, 8], strides = [1, 1, 1]} : vector<2x16x32xf32> to vector<2x16x8xf32>
    "tpu.trace_start"() <{level = 10 : i32, message = "btd,bsd->bts"}> : () -> ()
    %cst_86 = arith.constant dense<0.000000e+00> : vector<2x8x16xf32>
    %194 = tpu.matmul %192, %193, %cst_86 {dimension_numbers = #tpu.dot_dimension_numbers<[2], [2], [1], [1], [0, 0, 0, 1, 1, 1], [0], [0]>} : vector<2x8x8xf32>, vector<2x16x8xf32>, vector<2x8x16xf32> -> vector<2x8x16xf32>
    "tpu.trace_stop"() : () -> ()
    %cst_87 = arith.constant 0.353553385 : f32
    %195 = vector.broadcast %cst_87 : f32 to vector<2x8x16xf32>
    %196 = arith.mulf %194, %195 : vector<2x8x16xf32>
    %cst_88 = arith.constant -1.000000e+09 : f32
    %197 = vector.broadcast %cst_88 : f32 to vector<2x8x16xf32>
    %198 = arith.select %147, %197, %196 : vector<2x8x16xi1>, vector<2x8x16xf32>
    %cst_89 = arith.constant dense<0xFF800000> : vector<2x8xf32>
    %199 = vector.multi_reduction <maximumf>, %198, %cst_89 [2] : vector<2x8x16xf32> to vector<2x8xf32>
    %200 = vector.shape_cast %199 : vector<2x8xf32> to vector<2x8x1xf32>
    %201 = vector.broadcast %200 : vector<2x8x1xf32> to vector<2x8x16xf32>
    %202 = arith.subf %198, %201 : vector<2x8x16xf32>
    %203 = math.exp %202 : vector<2x8x16xf32>
    %cst_90 = arith.constant dense<0.000000e+00> : vector<2x8xf32>
    %204 = vector.multi_reduction <add>, %203, %cst_90 [2] : vector<2x8x16xf32> to vector<2x8xf32>
    %205 = vector.shape_cast %204 : vector<2x8xf32> to vector<2x8x1xf32>
    %206 = vector.broadcast %205 : vector<2x8x1xf32> to vector<2x8x16xf32>
    %207 = arith.divf %203, %206 : vector<2x8x16xf32>
    %c2 = arith.constant 2 : index
    %c0_91 = arith.constant 0 : index
    %c0_92 = arith.constant 0 : index
    %c0_93 = arith.constant 0 : index
    %208 = vector.load %arg25[%c2, %c0_91, %c0_92, %c0_93] : memref<4x2x8x16xf32, #tpu.memory_space<vmem>>, vector<1x2x8x16xf32>
    %209 = vector.shape_cast %208 : vector<1x2x8x16xf32> to vector<2x8x16xf32>
    %210 = vector.shape_cast %207 : vector<2x8x16xf32> to vector<1x2x8x16xf32>
    tpu.vector_store %arg25[%c2, %c0_91, %c0_92, %c0_93], %210 {strides = array<i32>} : memref<4x2x8x16xf32, #tpu.memory_space<vmem>>, vector<1x2x8x16xf32>,
    %211 = vector.extract_strided_slice %149 {offsets = [0, 0, 16], sizes = [2, 16, 8], strides = [1, 1, 1]} : vector<2x16x32xf32> to vector<2x16x8xf32>
    "tpu.trace_start"() <{level = 10 : i32, message = "bts,bsd->btd"}> : () -> ()
    %cst_94 = arith.constant dense<0.000000e+00> : vector<2x8x8xf32>
    %212 = tpu.matmul %207, %211, %cst_94 {dimension_numbers = #tpu.dot_dimension_numbers<[2], [1], [1], [2], [0, 0, 0, 1, 1, 2], [0], [0]>} : vector<2x8x16xf32>, vector<2x16x8xf32>, vector<2x8x8xf32> -> vector<2x8x8xf32>
    "tpu.trace_stop"() : () -> ()
    %213 = vector.extract_strided_slice %133 {offsets = [0, 0, 24], sizes = [2, 8, 8], strides = [1, 1, 1]} : vector<2x8x32xf32> to vector<2x8x8xf32>
    %214 = vector.extract_strided_slice %148 {offsets = [0, 0, 24], sizes = [2, 16, 8], strides = [1, 1, 1]} : vector<2x16x32xf32> to vector<2x16x8xf32>
    "tpu.trace_start"() <{level = 10 : i32, message = "btd,bsd->bts"}> : () -> ()
    %cst_95 = arith.constant dense<0.000000e+00> : vector<2x8x16xf32>
    %215 = tpu.matmul %213, %214, %cst_95 {dimension_numbers = #tpu.dot_dimension_numbers<[2], [2], [1], [1], [0, 0, 0, 1, 1, 1], [0], [0]>} : vector<2x8x8xf32>, vector<2x16x8xf32>, vector<2x8x16xf32> -> vector<2x8x16xf32>
    "tpu.trace_stop"() : () -> ()
    %cst_96 = arith.constant 0.353553385 : f32
    %216 = vector.broadcast %cst_96 : f32 to vector<2x8x16xf32>
    %217 = arith.mulf %215, %216 : vector<2x8x16xf32>
    %cst_97 = arith.constant -1.000000e+09 : f32
    %218 = vector.broadcast %cst_97 : f32 to vector<2x8x16xf32>
    %219 = arith.select %147, %218, %217 : vector<2x8x16xi1>, vector<2x8x16xf32>
    %cst_98 = arith.constant dense<0xFF800000> : vector<2x8xf32>
    %220 = vector.multi_reduction <maximumf>, %219, %cst_98 [2] : vector<2x8x16xf32> to vector<2x8xf32>
    %221 = vector.shape_cast %220 : vector<2x8xf32> to vector<2x8x1xf32>
    %222 = vector.broadcast %221 : vector<2x8x1xf32> to vector<2x8x16xf32>
    %223 = arith.subf %219, %222 : vector<2x8x16xf32>
    %224 = math.exp %223 : vector<2x8x16xf32>
    %cst_99 = arith.constant dense<0.000000e+00> : vector<2x8xf32>
    %225 = vector.multi_reduction <add>, %224, %cst_99 [2] : vector<2x8x16xf32> to vector<2x8xf32>
    %226 = vector.shape_cast %225 : vector<2x8xf32> to vector<2x8x1xf32>
    %227 = vector.broadcast %226 : vector<2x8x1xf32> to vector<2x8x16xf32>
    %228 = arith.divf %224, %227 : vector<2x8x16xf32>
    %c3 = arith.constant 3 : index
    %c0_100 = arith.constant 0 : index
    %c0_101 = arith.constant 0 : index
    %c0_102 = arith.constant 0 : index
    %229 = vector.load %arg25[%c3, %c0_100, %c0_101, %c0_102] : memref<4x2x8x16xf32, #tpu.memory_space<vmem>>, vector<1x2x8x16xf32>
    %230 = vector.shape_cast %229 : vector<1x2x8x16xf32> to vector<2x8x16xf32>
    %231 = vector.shape_cast %228 : vector<2x8x16xf32> to vector<1x2x8x16xf32>
    tpu.vector_store %arg25[%c3, %c0_100, %c0_101, %c0_102], %231 {strides = array<i32>} : memref<4x2x8x16xf32, #tpu.memory_space<vmem>>, vector<1x2x8x16xf32>,
    %232 = vector.extract_strided_slice %149 {offsets = [0, 0, 24], sizes = [2, 16, 8], strides = [1, 1, 1]} : vector<2x16x32xf32> to vector<2x16x8xf32>
    "tpu.trace_start"() <{level = 10 : i32, message = "bts,bsd->btd"}> : () -> ()
    %cst_103 = arith.constant dense<0.000000e+00> : vector<2x8x8xf32>
    %233 = tpu.matmul %228, %232, %cst_103 {dimension_numbers = #tpu.dot_dimension_numbers<[2], [1], [1], [2], [0, 0, 0, 1, 1, 2], [0], [0]>} : vector<2x8x16xf32>, vector<2x16x8xf32>, vector<2x8x8xf32> -> vector<2x8x8xf32>
    "tpu.trace_stop"() : () -> ()
    %234 = tpu.concatenate %170, %191, %212, %233 in 2 : vector<2x8x8xf32>, vector<2x8x8xf32>, vector<2x8x8xf32>, vector<2x8x8xf32> -> vector<2x8x32xf32>
    %235 = arith.addf %234, %124 : vector<2x8x32xf32>
    %236 = vector.shape_cast %235 : vector<2x8x32xf32> to vector<16x32xf32>
    %c0_104 = arith.constant 0 : index
    %c0_105 = arith.constant 0 : index
    %c0_106 = arith.constant 0 : index
    %237 = vector.load %arg13[%c0_104, %c0_105, %c0_106] : memref<1x1x32xf32, #tpu.memory_space<vmem>>, vector<1x1x32xf32>
    %238 = vector.shape_cast %237 : vector<1x1x32xf32> to vector<1x32xf32>
    %c0_107 = arith.constant 0 : index
    %c0_108 = arith.constant 0 : index
    %c0_109 = arith.constant 0 : index
    %239 = vector.load %arg14[%c0_107, %c0_108, %c0_109] : memref<1x1x32xf32, #tpu.memory_space<vmem>>, vector<1x1x32xf32>
    %240 = vector.shape_cast %239 : vector<1x1x32xf32> to vector<1x32xf32>
    %cst_110 = arith.constant dense<0.000000e+00> : vector<16xf32>
    %241 = vector.multi_reduction <add>, %236, %cst_110 [1] : vector<16x32xf32> to vector<16xf32>
    %242 = vector.shape_cast %241 : vector<16xf32> to vector<16x1xf32>
    %cst_111 = arith.constant 3.200000e+01 : f32
    %243 = vector.broadcast %cst_111 : f32 to vector<16x1xf32>
    %244 = arith.divf %242, %243 : vector<16x1xf32>
    %245 = vector.broadcast %244 : vector<16x1xf32> to vector<16x32xf32>
    %246 = arith.subf %236, %245 : vector<16x32xf32>
    %247 = arith.mulf %246, %246 : vector<16x32xf32>
    %cst_112 = arith.constant dense<0.000000e+00> : vector<16xf32>
    %248 = vector.multi_reduction <add>, %247, %cst_112 [1] : vector<16x32xf32> to vector<16xf32>
    %249 = vector.shape_cast %248 : vector<16xf32> to vector<16x1xf32>
    %cst_113 = arith.constant 3.200000e+01 : f32
    %250 = vector.broadcast %cst_113 : f32 to vector<16x1xf32>
    %251 = arith.divf %249, %250 : vector<16x1xf32>
    %252 = vector.broadcast %244 : vector<16x1xf32> to vector<16x32xf32>
    %253 = arith.subf %236, %252 : vector<16x32xf32>
    %cst_114 = arith.constant 9.99999974E-6 : f32
    %254 = vector.broadcast %cst_114 : f32 to vector<16x1xf32>
    %255 = arith.addf %251, %254 : vector<16x1xf32>
    %256 = math.rsqrt %255 : vector<16x1xf32>
    %257 = vector.broadcast %256 : vector<16x1xf32> to vector<16x32xf32>
    %258 = arith.mulf %253, %257 : vector<16x32xf32>
    %259 = vector.broadcast %238 : vector<1x32xf32> to vector<16x32xf32>
    %260 = arith.mulf %258, %259 : vector<16x32xf32>
    %261 = vector.broadcast %240 : vector<1x32xf32> to vector<16x32xf32>
    %262 = arith.addf %260, %261 : vector<16x32xf32>
    %263 = vector.shape_cast %262 : vector<16x32xf32> to vector<2x8x32xf32>
    %264 = vector.shape_cast %263 : vector<2x8x32xf32> to vector<16x32xf32>
    %c0_115 = arith.constant 0 : index
    %c0_116 = arith.constant 0 : index
    %c0_117 = arith.constant 0 : index
    %265 = vector.load %arg15[%c0_115, %c0_116, %c0_117] : memref<1x32x64xf32, #tpu.memory_space<vmem>>, vector<1x32x64xf32>
    %266 = vector.shape_cast %265 : vector<1x32x64xf32> to vector<32x64xf32>
    %cst_118 = arith.constant dense<0.000000e+00> : vector<16x64xf32>
    %267 = tpu.matmul %264, %266, %cst_118 {dimension_numbers = #tpu.dot_dimension_numbers<[1], [0], [0], [1], [0, 0, 1, 1], [], []>} : vector<16x32xf32>, vector<32x64xf32>, vector<16x64xf32> -> vector<16x64xf32>
    %c0_119 = arith.constant 0 : index
    %c0_120 = arith.constant 0 : index
    %c0_121 = arith.constant 0 : index
    %268 = vector.load %arg16[%c0_119, %c0_120, %c0_121] : memref<1x1x64xf32, #tpu.memory_space<vmem>>, vector<1x1x64xf32>
    %269 = vector.shape_cast %268 : vector<1x1x64xf32> to vector<1x64xf32>
    %270 = vector.broadcast %269 : vector<1x64xf32> to vector<16x64xf32>
    %271 = arith.addf %267, %270 : vector<16x64xf32>
    %cst_122 = arith.constant 0.000000e+00 : f32
    %272 = vector.broadcast %cst_122 : f32 to vector<16x64xf32>
    %273 = arith.maximumf %271, %272 : vector<16x64xf32>
    %c0_123 = arith.constant 0 : index
    %c0_124 = arith.constant 0 : index
    %c0_125 = arith.constant 0 : index
    %274 = vector.load %arg17[%c0_123, %c0_124, %c0_125] : memref<1x64x32xf32, #tpu.memory_space<vmem>>, vector<1x64x32xf32>
    %275 = vector.shape_cast %274 : vector<1x64x32xf32> to vector<64x32xf32>
    %cst_126 = arith.constant dense<0.000000e+00> : vector<16x32xf32>
    %276 = tpu.matmul %273, %275, %cst_126 {dimension_numbers = #tpu.dot_dimension_numbers<[1], [0], [0], [1], [0, 0, 1, 1], [], []>} : vector<16x64xf32>, vector<64x32xf32>, vector<16x32xf32> -> vector<16x32xf32>
    %c0_127 = arith.constant 0 : index
    %c0_128 = arith.constant 0 : index
    %c0_129 = arith.constant 0 : index
    %277 = vector.load %arg18[%c0_127, %c0_128, %c0_129] : memref<1x1x32xf32, #tpu.memory_space<vmem>>, vector<1x1x32xf32>
    %278 = vector.shape_cast %277 : vector<1x1x32xf32> to vector<1x32xf32>
    %279 = vector.broadcast %278 : vector<1x32xf32> to vector<16x32xf32>
    %280 = arith.addf %276, %279 : vector<16x32xf32>
    %281 = vector.shape_cast %263 : vector<2x8x32xf32> to vector<16x32xf32>
    %282 = arith.addf %280, %281 : vector<16x32xf32>
    %c0_130 = arith.constant 0 : index
    %c0_131 = arith.constant 0 : index
    %c0_132 = arith.constant 0 : index
    %283 = vector.load %arg19[%c0_130, %c0_131, %c0_132] : memref<1x1x32xf32, #tpu.memory_space<vmem>>, vector<1x1x32xf32>
    %284 = vector.shape_cast %283 : vector<1x1x32xf32> to vector<1x32xf32>
    %c0_133 = arith.constant 0 : index
    %c0_134 = arith.constant 0 : index
    %c0_135 = arith.constant 0 : index
    %285 = vector.load %arg20[%c0_133, %c0_134, %c0_135] : memref<1x1x32xf32, #tpu.memory_space<vmem>>, vector<1x1x32xf32>
    %286 = vector.shape_cast %285 : vector<1x1x32xf32> to vector<1x32xf32>
    %cst_136 = arith.constant dense<0.000000e+00> : vector<16xf32>
    %287 = vector.multi_reduction <add>, %282, %cst_136 [1] : vector<16x32xf32> to vector<16xf32>
    %288 = vector.shape_cast %287 : vector<16xf32> to vector<16x1xf32>
    %cst_137 = arith.constant 3.200000e+01 : f32
    %289 = vector.broadcast %cst_137 : f32 to vector<16x1xf32>
    %290 = arith.divf %288, %289 : vector<16x1xf32>
    %291 = vector.broadcast %290 : vector<16x1xf32> to vector<16x32xf32>
    %292 = arith.subf %282, %291 : vector<16x32xf32>
    %293 = arith.mulf %292, %292 : vector<16x32xf32>
    %cst_138 = arith.constant dense<0.000000e+00> : vector<16xf32>
    %294 = vector.multi_reduction <add>, %293, %cst_138 [1] : vector<16x32xf32> to vector<16xf32>
    %295 = vector.shape_cast %294 : vector<16xf32> to vector<16x1xf32>
    %cst_139 = arith.constant 3.200000e+01 : f32
    %296 = vector.broadcast %cst_139 : f32 to vector<16x1xf32>
    %297 = arith.divf %295, %296 : vector<16x1xf32>
    %298 = vector.broadcast %290 : vector<16x1xf32> to vector<16x32xf32>
    %299 = arith.subf %282, %298 : vector<16x32xf32>
    %cst_140 = arith.constant 9.99999974E-6 : f32
    %300 = vector.broadcast %cst_140 : f32 to vector<16x1xf32>
    %301 = arith.addf %297, %300 : vector<16x1xf32>
    %302 = math.rsqrt %301 : vector<16x1xf32>
    %303 = vector.broadcast %302 : vector<16x1xf32> to vector<16x32xf32>
    %304 = arith.mulf %299, %303 : vector<16x32xf32>
    %305 = vector.broadcast %284 : vector<1x32xf32> to vector<16x32xf32>
    %306 = arith.mulf %304, %305 : vector<16x32xf32>
    %307 = vector.broadcast %286 : vector<1x32xf32> to vector<16x32xf32>
    %308 = arith.addf %306, %307 : vector<16x32xf32>
    %309 = vector.shape_cast %308 : vector<16x32xf32> to vector<2x8x32xf32>
    %c0_141 = arith.constant 0 : index
    %c0_142 = arith.constant 0 : index
    %c0_143 = arith.constant 0 : index
    %310 = vector.load %arg26[%c0_141, %c0_142, %c0_143] : memref<2x8x32xf32, #tpu.memory_space<vmem>>, vector<2x8x32xf32>
    tpu.vector_store %arg26[%c0_141, %c0_142, %c0_143], %309 {strides = array<i32>} : memref<2x8x32xf32, #tpu.memory_space<vmem>>, vector<2x8x32xf32>,
    %c1_i32 = arith.constant 1 : i32
    %311 = arith.cmpi eq, %arg0, %c1_i32 : i32
    %312 = arith.extui %311 : i1 to i32
    %c0_i32_144 = arith.constant 0 : i32
    %313 = arith.cmpi ne, %312, %c0_i32_144 : i32
    scf.if %313 {
      %314 = vector.shape_cast %309 : vector<2x8x32xf32> to vector<16x32xf32>
      %c0_145 = arith.constant 0 : index
      %c0_146 = arith.constant 0 : index
      %315 = vector.load %arg21[%c0_145, %c0_146] : memref<1x32xf32, #tpu.memory_space<vmem>>, vector<1x32xf32>
      %c0_147 = arith.constant 0 : index
      %c0_148 = arith.constant 0 : index
      %316 = vector.load %arg22[%c0_147, %c0_148] : memref<1x32xf32, #tpu.memory_space<vmem>>, vector<1x32xf32>
      %cst_149 = arith.constant dense<0.000000e+00> : vector<16xf32>
      %317 = vector.multi_reduction <add>, %314, %cst_149 [1] : vector<16x32xf32> to vector<16xf32>
      %318 = vector.shape_cast %317 : vector<16xf32> to vector<16x1xf32>
      %cst_150 = arith.constant 3.200000e+01 : f32
      %319 = vector.broadcast %cst_150 : f32 to vector<16x1xf32>
      %320 = arith.divf %318, %319 : vector<16x1xf32>
      %321 = vector.broadcast %320 : vector<16x1xf32> to vector<16x32xf32>
      %322 = arith.subf %314, %321 : vector<16x32xf32>
      %323 = arith.mulf %322, %322 : vector<16x32xf32>
      %cst_151 = arith.constant dense<0.000000e+00> : vector<16xf32>
      %324 = vector.multi_reduction <add>, %323, %cst_151 [1] : vector<16x32xf32> to vector<16xf32>
      %325 = vector.shape_cast %324 : vector<16xf32> to vector<16x1xf32>
      %cst_152 = arith.constant 3.200000e+01 : f32
      %326 = vector.broadcast %cst_152 : f32 to vector<16x1xf32>
      %327 = arith.divf %325, %326 : vector<16x1xf32>
      %328 = vector.broadcast %320 : vector<16x1xf32> to vector<16x32xf32>
      %329 = arith.subf %314, %328 : vector<16x32xf32>
      %cst_153 = arith.constant 9.99999974E-6 : f32
      %330 = vector.broadcast %cst_153 : f32 to vector<16x1xf32>
      %331 = arith.addf %327, %330 : vector<16x1xf32>
      %332 = math.rsqrt %331 : vector<16x1xf32>
      %333 = vector.broadcast %332 : vector<16x1xf32> to vector<16x32xf32>
      %334 = arith.mulf %329, %333 : vector<16x32xf32>
      %335 = vector.broadcast %315 : vector<1x32xf32> to vector<16x32xf32>
      %336 = arith.mulf %334, %335 : vector<16x32xf32>
      %337 = vector.broadcast %316 : vector<1x32xf32> to vector<16x32xf32>
      %338 = arith.addf %336, %337 : vector<16x32xf32>
      %c0_154 = arith.constant 0 : index
      %c0_155 = arith.constant 0 : index
      %339 = vector.load %arg23[%c0_154, %c0_155] : memref<32x32xf32, #tpu.memory_space<vmem>>, vector<32x32xf32>
      %cst_156 = arith.constant dense<0.000000e+00> : vector<16x32xf32>
      %340 = tpu.matmul %338, %339, %cst_156 {dimension_numbers = #tpu.dot_dimension_numbers<[1], [0], [0], [1], [0, 0, 1, 1], [], []>} : vector<16x32xf32>, vector<32x32xf32>, vector<16x32xf32> -> vector<16x32xf32>
      %cst_157 = arith.constant dense<0xFF800000> : vector<16xf32>
      %341 = vector.multi_reduction <maximumf>, %340, %cst_157 [1] : vector<16x32xf32> to vector<16xf32>
      %342 = vector.shape_cast %341 : vector<16xf32> to vector<16x1xf32>
      %343 = vector.broadcast %342 : vector<16x1xf32> to vector<16x32xf32>
      %344 = arith.subf %340, %343 : vector<16x32xf32>
      %345 = math.exp %344 : vector<16x32xf32>
      %cst_158 = arith.constant dense<0.000000e+00> : vector<16xf32>
      %346 = vector.multi_reduction <add>, %345, %cst_158 [1] : vector<16x32xf32> to vector<16xf32>
      %347 = vector.shape_cast %346 : vector<16xf32> to vector<16x1xf32>
      %348 = math.log %347 : vector<16x1xf32>
      %349 = vector.broadcast %348 : vector<16x1xf32> to vector<16x32xf32>
      %350 = arith.subf %344, %349 : vector<16x32xf32>
      %351 = vector.shape_cast %350 : vector<16x32xf32> to vector<2x8x32xf32>
      %c0_159 = arith.constant 0 : index
      %c0_160 = arith.constant 0 : index
      %c0_161 = arith.constant 0 : index
      %352 = vector.load %arg24[%c0_159, %c0_160, %c0_161] : memref<2x8x32xf32, #tpu.memory_space<vmem>>, vector<2x8x32xf32>
      tpu.vector_store %arg24[%c0_159, %c0_160, %c0_161], %351 {strides = array<i32>} : memref<2x8x32xf32, #tpu.memory_space<vmem>>, vector<2x8x32xf32>,
    } else {
    }
    return
  }
  func.func @transform_0(%arg0: i32) -> (i32, i32, i32) {
    %c0_i32 = arith.constant 0 : i32
    %c0_i32_0 = arith.constant 0 : i32
    %c0_i32_1 = arith.constant 0 : i32
    %c0_i32_2 = arith.constant 0 : i32
    return %c0_i32, %c0_i32_0, %c0_i32_1 : i32, i32, i32
  }
  func.func @transform_1(%arg0: i32) -> (i32, i32, i32) {
    %c0_i32 = arith.constant 0 : i32
    %c0_i32_0 = arith.constant 0 : i32
    %c0_i32_1 = arith.constant 0 : i32
    %c0_i32_2 = arith.constant 0 : i32
    return %c0_i32, %c0_i32_0, %c0_i32_1 : i32, i32, i32
  }
  func.func @transform_2(%arg0: i32) -> (i32, i32, i32) {
    %c0_i32 = arith.constant 0 : i32
    %c0_i32_0 = arith.constant 0 : i32
    %c0_i32_1 = arith.constant 0 : i32
    %c0_i32_2 = arith.constant 0 : i32
    return %c0_i32, %c0_i32_0, %c0_i32_1 : i32, i32, i32
  }
  func.func @transform_3(%arg0: i32) -> (i32, i32, i32) {
    %c0_i32 = arith.constant 0 : i32
    %c0_i32_0 = arith.constant 0 : i32
    %c0_i32_1 = arith.constant 0 : i32
    %c0_i32_2 = arith.constant 0 : i32
    return %c0_i32, %c0_i32_0, %c0_i32_1 : i32, i32, i32
  }
  func.func @transform_4(%arg0: i32) -> (i32, i32, i32) {
    %c0_i32 = arith.constant 0 : i32
    %c0_i32_0 = arith.constant 0 : i32
    %c0_i32_1 = arith.constant 0 : i32
    return %arg0, %c0_i32, %c0_i32_0 : i32, i32, i32
  }
  func.func @transform_5(%arg0: i32) -> (i32, i32, i32) {
    %c0_i32 = arith.constant 0 : i32
    %c0_i32_0 = arith.constant 0 : i32
    %c0_i32_1 = arith.constant 0 : i32
    return %arg0, %c0_i32, %c0_i32_0 : i32, i32, i32
  }
  func.func @transform_6(%arg0: i32) -> (i32, i32, i32) {
    %c0_i32 = arith.constant 0 : i32
    %c0_i32_0 = arith.constant 0 : i32
    %c0_i32_1 = arith.constant 0 : i32
    return %arg0, %c0_i32, %c0_i32_0 : i32, i32, i32
  }
  func.func @transform_7(%arg0: i32) -> (i32, i32, i32) {
    %c0_i32 = arith.constant 0 : i32
    %c0_i32_0 = arith.constant 0 : i32
    %c0_i32_1 = arith.constant 0 : i32
    return %arg0, %c0_i32, %c0_i32_0 : i32, i32, i32
  }
  func.func @transform_8(%arg0: i32) -> (i32, i32, i32) {
    %c0_i32 = arith.constant 0 : i32
    %c0_i32_0 = arith.constant 0 : i32
    %c0_i32_1 = arith.constant 0 : i32
    return %arg0, %c0_i32, %c0_i32_0 : i32, i32, i32
  }
  func.func @transform_9(%arg0: i32) -> (i32, i32, i32) {
    %c0_i32 = arith.constant 0 : i32
    %c0_i32_0 = arith.constant 0 : i32
    %c0_i32_1 = arith.constant 0 : i32
    return %arg0, %c0_i32, %c0_i32_0 : i32, i32, i32
  }
  func.func @transform_10(%arg0: i32) -> (i32, i32, i32) {
    %c0_i32 = arith.constant 0 : i32
    %c0_i32_0 = arith.constant 0 : i32
    %c0_i32_1 = arith.constant 0 : i32
    return %arg0, %c0_i32, %c0_i32_0 : i32, i32, i32
  }
  func.func @transform_11(%arg0: i32) -> (i32, i32, i32) {
    %c0_i32 = arith.constant 0 : i32
    %c0_i32_0 = arith.constant 0 : i32
    %c0_i32_1 = arith.constant 0 : i32
    return %arg0, %c0_i32, %c0_i32_0 : i32, i32, i32
  }
  func.func @transform_12(%arg0: i32) -> (i32, i32, i32) {
    %c0_i32 = arith.constant 0 : i32
    %c0_i32_0 = arith.constant 0 : i32
    %c0_i32_1 = arith.constant 0 : i32
    return %arg0, %c0_i32, %c0_i32_0 : i32, i32, i32
  }
  func.func @transform_13(%arg0: i32) -> (i32, i32, i32) {
    %c0_i32 = arith.constant 0 : i32
    %c0_i32_0 = arith.constant 0 : i32
    %c0_i32_1 = arith.constant 0 : i32
    return %arg0, %c0_i32, %c0_i32_0 : i32, i32, i32
  }
  func.func @transform_14(%arg0: i32) -> (i32, i32, i32) {
    %c0_i32 = arith.constant 0 : i32
    %c0_i32_0 = arith.constant 0 : i32
    %c0_i32_1 = arith.constant 0 : i32
    return %arg0, %c0_i32, %c0_i32_0 : i32, i32, i32
  }
  func.func @transform_15(%arg0: i32) -> (i32, i32, i32) {
    %c0_i32 = arith.constant 0 : i32
    %c0_i32_0 = arith.constant 0 : i32
    %c0_i32_1 = arith.constant 0 : i32
    return %arg0, %c0_i32, %c0_i32_0 : i32, i32, i32
  }
  func.func @transform_16(%arg0: i32) -> (i32, i32, i32) {
    %c0_i32 = arith.constant 0 : i32
    %c0_i32_0 = arith.constant 0 : i32
    %c0_i32_1 = arith.constant 0 : i32
    return %arg0, %c0_i32, %c0_i32_0 : i32, i32, i32
  }
  func.func @transform_17(%arg0: i32) -> (i32, i32, i32) {
    %c0_i32 = arith.constant 0 : i32
    %c0_i32_0 = arith.constant 0 : i32
    %c0_i32_1 = arith.constant 0 : i32
    return %arg0, %c0_i32, %c0_i32_0 : i32, i32, i32
  }
  func.func @transform_18(%arg0: i32) -> (i32, i32, i32) {
    %c0_i32 = arith.constant 0 : i32
    %c0_i32_0 = arith.constant 0 : i32
    %c0_i32_1 = arith.constant 0 : i32
    return %arg0, %c0_i32, %c0_i32_0 : i32, i32, i32
  }
  func.func @transform_19(%arg0: i32) -> (i32, i32, i32) {
    %c0_i32 = arith.constant 0 : i32
    %c0_i32_0 = arith.constant 0 : i32
    %c0_i32_1 = arith.constant 0 : i32
    return %arg0, %c0_i32, %c0_i32_0 : i32, i32, i32
  }
  func.func @transform_20(%arg0: i32) -> (i32, i32) {
    %c0_i32 = arith.constant 0 : i32
    %c0_i32_0 = arith.constant 0 : i32
    %c0_i32_1 = arith.constant 0 : i32
    return %c0_i32, %c0_i32_0 : i32, i32
  }
  func.func @transform_21(%arg0: i32) -> (i32, i32) {
    %c0_i32 = arith.constant 0 : i32
    %c0_i32_0 = arith.constant 0 : i32
    %c0_i32_1 = arith.constant 0 : i32
    return %c0_i32, %c0_i32_0 : i32, i32
  }
  func.func @transform_22(%arg0: i32) -> (i32, i32) {
    %c0_i32 = arith.constant 0 : i32
    %c0_i32_0 = arith.constant 0 : i32
    %c0_i32_1 = arith.constant 0 : i32
    return %c0_i32, %c0_i32_0 : i32, i32
  }
  func.func @transform_23(%arg0: i32) -> (i32, i32, i32) {
    %c0_i32 = arith.constant 0 : i32
    %c0_i32_0 = arith.constant 0 : i32
    %c0_i32_1 = arith.constant 0 : i32
    %c0_i32_2 = arith.constant 0 : i32
    return %c0_i32, %c0_i32_0, %c0_i32_1 : i32, i32, i32
  }
  func.func @transform_24(%arg0: i32) -> (i32, i32, i32, i32) {
    %c0_i32 = arith.constant 0 : i32
    %c0_i32_0 = arith.constant 0 : i32
    %c0_i32_1 = arith.constant 0 : i32
    %c0_i32_2 = arith.constant 0 : i32
    %c0_i32_3 = arith.constant 0 : i32
    return %c0_i32, %c0_i32_0, %c0_i32_1, %c0_i32_2 : i32, i32, i32, i32
  }
}

</mosaic_0001>

<llo_original>
// kernel: speech_transformer_decoder_forward.1
$region0: #{speech_transformer_decoder_forward.1}
  #allocation0 [shape = 'u32[]', space=smem, size = 0x4, offset = 0x4, fixed_abs, tag = 'smem constant byte address 0x4 - core index']
  #allocation1 [shape = 'u32[144,128]{1,0:T(1,128)}', space=vmem, size = 0x12000, scoped, tag = 'internal scratch']
  #allocation2 [shape = 'f32[2,8,32]{2,1,0:T(8,128)}', space=vmem, size = 0x2000, scoped, tag = 'scratch operand']
  %s0 = inlined_call_operand.vmem [shape: f32[2,8,32], index: 0, kind: input, shape index: {}]
  %s1 = inlined_call_operand.vmem [shape: f32[2,16,32], index: 1, kind: input, shape index: {}]
  %s2 = inlined_call_operand.vmem [shape: s32[2,1,1], index: 2, kind: input, shape index: {}]
  %s3 = inlined_call_operand.vmem [shape: s32[2,1,1], index: 3, kind: input, shape index: {}]
  %s4 = inlined_call_operand.vmem [shape: f32[2,32,96], index: 4, kind: input, shape index: {}]
  %s5 = inlined_call_operand.vmem [shape: f32[2,1,96], index: 5, kind: input, shape index: {}]
  %s6 = inlined_call_operand.vmem [shape: f32[2,1,32], index: 6, kind: input, shape index: {}]
  %s7 = inlined_call_operand.vmem [shape: f32[2,1,32], index: 7, kind: input, shape index: {}]
  %s8 = inlined_call_operand.vmem [shape: f32[2,32,32], index: 8, kind: input, shape index: {}]
  %s9 = inlined_call_operand.vmem [shape: f32[2,1,32], index: 9, kind: input, shape index: {}]
  %s10 = inlined_call_operand.vmem [shape: f32[2,32,64], index: 10, kind: input, shape index: {}]
  %s11 = inlined_call_operand.vmem [shape: f32[2,1,64], index: 11, kind: input, shape index: {}]
  %s12 = inlined_call_operand.vmem [shape: f32[2,1,32], index: 12, kind: input, shape index: {}]
  %s13 = inlined_call_operand.vmem [shape: f32[2,1,32], index: 13, kind: input, shape index: {}]
  %s14 = inlined_call_operand.vmem [shape: f32[2,32,64], index: 14, kind: input, shape index: {}]
  %s15 = inlined_call_operand.vmem [shape: f32[2,1,64], index: 15, kind: input, shape index: {}]
  %s16 = inlined_call_operand.vmem [shape: f32[2,64,32], index: 16, kind: input, shape index: {}]
  %s17 = inlined_call_operand.vmem [shape: f32[2,1,32], index: 17, kind: input, shape index: {}]
  %s18 = inlined_call_operand.vmem [shape: f32[2,1,32], index: 18, kind: input, shape index: {}]
  %s19 = inlined_call_operand.vmem [shape: f32[2,1,32], index: 19, kind: input, shape index: {}]
  %s20 = inlined_call_operand.vmem [shape: f32[1,32], index: 20, kind: input, shape index: {}]
  %s21 = inlined_call_operand.vmem [shape: f32[1,32], index: 21, kind: input, shape index: {}]
  %s22 = inlined_call_operand.vmem [shape: f32[32,32], index: 22, kind: input, shape index: {}]
  %s23 = inlined_call_operand.hbm [shape: f32[2,8,32], index: 23, kind: output, shape index: {0}]
  %s24 = inlined_call_operand.vmem [shape: f32[4,2,8,16], index: 24, kind: output, shape index: {1}]
  %25 = xla_tuple %s23, %s24
  %s26 = sld [smem:[#allocation0]]
  $region141: #{speech_transformer_decoder_forward.1} parent=0
    _
  %s28 = ssub.s32 1, %s26
  %s29 = scalar_select 0, %s28, %s26
  $region1: #{speech_transformer_decoder_forward.1} parent=0
    #allocation3 [shape = 'u8[8192]{0}', space=vmem, size = 0x2000, scoped, tag = 'output window, operand 0, single buffered']
    #allocation4 [shape = 's32[2]{0}', space=sflag, size = 0x8, scoped, tag = 'scoped memory for speech_transformer_decoder_forward.1']
    %30 = vsyncpa [#allocation4], 0
    loop: start=0, step=1, limit=4
    $region2: #{speech_transformer_decoder_forward.1} parent=1 // loop_pre_header
      _
    $region3: #{speech_transformer_decoder_forward.1} parent=1 // loop_header
      %s32 = sphi 0, %s36
      %p33 = scmp.ge.s32.totalorder %s32, 4
      %s40 = sphi 0, %s40
      %s42 = sphi 0, %s40
      %s43 = sphi 0, %s42
      %s57 = sphi 0, %s43
      %s61 = sphi 0, %s61
      %s63 = sphi 0, %s61
      %s64 = sphi 0, %s63
      %s78 = sphi 0, %s64
      %s82 = sphi 0, %s82
      %s84 = sphi 0, %s82
      %s85 = sphi 0, %s84
      %s99 = sphi 0, %s85
      %s103 = sphi 0, %s103
      %s105 = sphi 0, %s103
      %s106 = sphi 0, %s105
      %s120 = sphi 0, %s106
      %s126 = sphi 0, %s128
      %s129 = sphi 0, %s126
      %s130 = sphi 0, %s129
      %s146 = sphi 0, %s130
      %s152 = sphi 0, %s154
      %s155 = sphi 0, %s152
      %s156 = sphi 0, %s155
      %s172 = sphi 0, %s156
      %s178 = sphi 0, %s180
      %s181 = sphi 0, %s178
      %s182 = sphi 0, %s181
      %s198 = sphi 0, %s182
      %s204 = sphi 0, %s206
      %s207 = sphi 0, %s204
      %s208 = sphi 0, %s207
      %s224 = sphi 0, %s208
      %s230 = sphi 0, %s232
      %s233 = sphi 0, %s230
      %s234 = sphi 0, %s233
      %s250 = sphi 0, %s234
      %s256 = sphi 0, %s258
      %s259 = sphi 0, %s256
      %s260 = sphi 0, %s259
      %s276 = sphi 0, %s260
      %s282 = sphi 0, %s284
      %s285 = sphi 0, %s282
      %s286 = sphi 0, %s285
      %s302 = sphi 0, %s286
      %s308 = sphi 0, %s310
      %s311 = sphi 0, %s308
      %s312 = sphi 0, %s311
      %s328 = sphi 0, %s312
      %s334 = sphi 0, %s336
      %s337 = sphi 0, %s334
      %s338 = sphi 0, %s337
      %s354 = sphi 0, %s338
      %s360 = sphi 0, %s362
      %s363 = sphi 0, %s360
      %s364 = sphi 0, %s363
      %s380 = sphi 0, %s364
      %s386 = sphi 0, %s388
      %s389 = sphi 0, %s386
      %s390 = sphi 0, %s389
      %s406 = sphi 0, %s390
      %s412 = sphi 0, %s414
      %s415 = sphi 0, %s412
      %s416 = sphi 0, %s415
      %s432 = sphi 0, %s416
      %s438 = sphi 0, %s440
      %s441 = sphi 0, %s438
      %s442 = sphi 0, %s441
      %s458 = sphi 0, %s442
      %s464 = sphi 0, %s466
      %s467 = sphi 0, %s464
      %s468 = sphi 0, %s467
      %s484 = sphi 0, %s468
      %s490 = sphi 0, %s492
      %s493 = sphi 0, %s490
      %s494 = sphi 0, %s493
      %s510 = sphi 0, %s494
      %s516 = sphi 0, %s518
      %s519 = sphi 0, %s516
      %s520 = sphi 0, %s519
      %s536 = sphi 0, %s520
      %s540 = sphi 0, %s540
      %s542 = sphi 0, %s540
      %s543 = sphi 0, %s542
      %s557 = sphi 0, %s543
      %s561 = sphi 0, %s561
      %s563 = sphi 0, %s561
      %s564 = sphi 0, %s563
      %s578 = sphi 0, %s564
      %s582 = sphi 0, %s582
      %s584 = sphi 0, %s582
      %s585 = sphi 0, %s584
      %s599 = sphi 0, %s585
      %s603 = sphi 0, %s603
      %s605 = sphi 0, %s603
      %s606 = sphi 0, %s605
      %s620 = sphi 0, %s606
      %s624 = sphi 0, %s624
      %s626 = sphi 0, %s624
      %s627 = sphi 0, %s626
      %s641 = sphi 0, %s627
    $region4: #{speech_transformer_decoder_forward.1} parent=1 // loop_header_branch
      %35 = sbr.rel (%p33) target = $region8
    $region5: #{speech_transformer_decoder_forward.1} parent=1 // loop_body
      %s37 = ssub.s32 %s32, 1
      %s38 = ssub.s32 %s32, 2
      %s39 = sadd.s32 %s32, 1
      %s41 = sadd.s32 %s40, 1
      %p44 = scmp.eq.s32.totalorder %s32, 1
      %p45 = scmp.ne.s32.totalorder %s40, %s42
      %p46 = scmp.eq.s32.totalorder %s32, 0
      %p47 = por %p45, %p46
      %p48 = scmp.ne.s32.totalorder %s40, %s42
      %p49 = scmp.eq.s32.totalorder %s37, 1
      %p50 = por %p48, %p49
      %p51 = scmp.ne.s32.totalorder %s42, %s43
      %p52 = scmp.eq.s32.totalorder %s37, 0
      %p53 = por %p51, %p52
      %p54 = scmp.ne.s32.totalorder %s42, %s43
      %p55 = scmp.eq.s32.totalorder %s38, 1
      %p56 = por %p54, %p55
      %p58 = scmp.ne.s32.totalorder %s43, %s57
      %p59 = scmp.eq.s32.totalorder %s38, 0
      %p60 = por %p58, %p59
      %s62 = sadd.s32 %s61, 1
      %p65 = scmp.eq.s32.totalorder %s32, 1
      %p66 = scmp.ne.s32.totalorder %s61, %s63
      %p67 = scmp.eq.s32.totalorder %s32, 0
      %p68 = por %p66, %p67
      %p69 = scmp.ne.s32.totalorder %s61, %s63
      %p70 = scmp.eq.s32.totalorder %s37, 1
      %p71 = por %p69, %p70
      %p72 = scmp.ne.s32.totalorder %s63, %s64
      %p73 = scmp.eq.s32.totalorder %s37, 0
      %p74 = por %p72, %p73
      %p75 = scmp.ne.s32.totalorder %s63, %s64
      %p76 = scmp.eq.s32.totalorder %s38, 1
      %p77 = por %p75, %p76
      %p79 = scmp.ne.s32.totalorder %s64, %s78
      %p80 = scmp.eq.s32.totalorder %s38, 0
      %p81 = por %p79, %p80
      %s83 = sadd.s32 %s82, 1
      %p86 = scmp.eq.s32.totalorder %s32, 1
      %p87 = scmp.ne.s32.totalorder %s82, %s84
      %p88 = scmp.eq.s32.totalorder %s32, 0
      %p89 = por %p87, %p88
      %p90 = scmp.ne.s32.totalorder %s82, %s84
      %p91 = scmp.eq.s32.totalorder %s37, 1
      %p92 = por %p90, %p91
      %p93 = scmp.ne.s32.totalorder %s84, %s85
      %p94 = scmp.eq.s32.totalorder %s37, 0
      %p95 = por %p93, %p94
      %p96 = scmp.ne.s32.totalorder %s84, %s85
      %p97 = scmp.eq.s32.totalorder %s38, 1
      %p98 = por %p96, %p97
      %p100 = scmp.ne.s32.totalorder %s85, %s99
      %p101 = scmp.eq.s32.totalorder %s38, 0
      %p102 = por %p100, %p101
      %s104 = sadd.s32 %s103, 1
      %p107 = scmp.eq.s32.totalorder %s32, 1
      %p108 = scmp.ne.s32.totalorder %s103, %s105
      %p109 = scmp.eq.s32.totalorder %s32, 0
      %p110 = por %p108, %p109
      %p111 = scmp.ne.s32.totalorder %s103, %s105
      %p112 = scmp.eq.s32.totalorder %s37, 1
      %p113 = por %p111, %p112
      %p114 = scmp.ne.s32.totalorder %s105, %s106
      %p115 = scmp.eq.s32.totalorder %s37, 0
      %p116 = por %p114, %p115
      %p117 = scmp.ne.s32.totalorder %s105, %s106
      %p118 = scmp.eq.s32.totalorder %s38, 1
      %p119 = por %p117, %p118
      %p121 = scmp.ne.s32.totalorder %s106, %s120
      %p122 = scmp.eq.s32.totalorder %s38, 0
      %p123 = por %p121, %p122
      %s124 = ssub.s32 %s32, %s39
      %p125 = scmp.eq.s32.totalorder %s124, 0
      %s127 = sadd.s32 %s126, 1
      %s128 = scalar_select %p125, %s126, %s127
      %p131 = pneg %p125
      %p132 = scmp.eq.s32.totalorder %s32, 1
      %p133 = por %p131, %p132
      %p134 = scmp.ne.s32.totalorder %s126, %s129
      %p135 = scmp.eq.s32.totalorder %s32, 0
      %p136 = por %p134, %p135
      %p137 = scmp.ne.s32.totalorder %s126, %s129
      %p138 = scmp.eq.s32.totalorder %s37, 1
      %p139 = por %p137, %p138
      %p140 = scmp.ne.s32.totalorder %s129, %s130
      %p141 = scmp.eq.s32.totalorder %s37, 0
      %p142 = por %p140, %p141
      %p143 = scmp.ne.s32.totalorder %s129, %s130
      %p144 = scmp.eq.s32.totalorder %s38, 1
      %p145 = por %p143, %p144
      %p147 = scmp.ne.s32.totalorder %s130, %s146
      %p148 = scmp.eq.s32.totalorder %s38, 0
      %p149 = por %p147, %p148
      %s150 = ssub.s32 %s32, %s39
      %p151 = scmp.eq.s32.totalorder %s150, 0
      %s153 = sadd.s32 %s152, 1
      %s154 = scalar_select %p151, %s152, %s153
      %p157 = pneg %p151
      %p158 = scmp.eq.s32.totalorder %s32, 1
      %p159 = por %p157, %p158
      %p160 = scmp.ne.s32.totalorder %s152, %s155
      %p161 = scmp.eq.s32.totalorder %s32, 0
      %p162 = por %p160, %p161
      %p163 = scmp.ne.s32.totalorder %s152, %s155
      %p164 = scmp.eq.s32.totalorder %s37, 1
      %p165 = por %p163, %p164
      %p166 = scmp.ne.s32.totalorder %s155, %s156
      %p167 = scmp.eq.s32.totalorder %s37, 0
      %p168 = por %p166, %p167
      %p169 = scmp.ne.s32.totalorder %s155, %s156
      %p170 = scmp.eq.s32.totalorder %s38, 1
      %p171 = por %p169, %p170
      %p173 = scmp.ne.s32.totalorder %s156, %s172
      %p174 = scmp.eq.s32.totalorder %s38, 0
      %p175 = por %p173, %p174
      %s176 = ssub.s32 %s32, %s39
      %p177 = scmp.eq.s32.totalorder %s176, 0
      %s179 = sadd.s32 %s178, 1
      %s180 = scalar_select %p177, %s178, %s179
      %p183 = pneg %p177
      %p184 = scmp.eq.s32.totalorder %s32, 1
      %p185 = por %p183, %p184
      %p186 = scmp.ne.s32.totalorder %s178, %s181
      %p187 = scmp.eq.s32.totalorder %s32, 0
      %p188 = por %p186, %p187
      %p189 = scmp.ne.s32.totalorder %s178, %s181
      %p190 = scmp.eq.s32.totalorder %s37, 1
      %p191 = por %p189, %p190
      %p192 = scmp.ne.s32.totalorder %s181, %s182
      %p193 = scmp.eq.s32.totalorder %s37, 0
      %p194 = por %p192, %p193
      %p195 = scmp.ne.s32.totalorder %s181, %s182
      %p196 = scmp.eq.s32.totalorder %s38, 1
      %p197 = por %p195, %p196
      %p199 = scmp.ne.s32.totalorder %s182, %s198
      %p200 = scmp.eq.s32.totalorder %s38, 0
      %p201 = por %p199, %p200
      %s202 = ssub.s32 %s32, %s39
      %p203 = scmp.eq.s32.totalorder %s202, 0
      %s205 = sadd.s32 %s204, 1
      %s206 = scalar_select %p203, %s204, %s205
      %p209 = pneg %p203
      %p210 = scmp.eq.s32.totalorder %s32, 1
      %p211 = por %p209, %p210
      %p212 = scmp.ne.s32.totalorder %s204, %s207
      %p213 = scmp.eq.s32.totalorder %s32, 0
      %p214 = por %p212, %p213
      %p215 = scmp.ne.s32.totalorder %s204, %s207
      %p216 = scmp.eq.s32.totalorder %s37, 1
      %p217 = por %p215, %p216
      %p218 = scmp.ne.s32.totalorder %s207, %s208
      %p219 = scmp.eq.s32.totalorder %s37, 0
      %p220 = por %p218, %p219
      %p221 = scmp.ne.s32.totalorder %s207, %s208
      %p222 = scmp.eq.s32.totalorder %s38, 1
      %p223 = por %p221, %p222
      %p225 = scmp.ne.s32.totalorder %s208, %s224
      %p226 = scmp.eq.s32.totalorder %s38, 0
      %p227 = por %p225, %p226
      %s228 = ssub.s32 %s32, %s39
      %p229 = scmp.eq.s32.totalorder %s228, 0
      %s231 = sadd.s32 %s230, 1
      %s232 = scalar_select %p229, %s230, %s231
      %p235 = pneg %p229
      %p236 = scmp.eq.s32.totalorder %s32, 1
      %p237 = por %p235, %p236
      %p238 = scmp.ne.s32.totalorder %s230, %s233
      %p239 = scmp.eq.s32.totalorder %s32, 0
      %p240 = por %p238, %p239
      %p241 = scmp.ne.s32.totalorder %s230, %s233
      %p242 = scmp.eq.s32.totalorder %s37, 1
      %p243 = por %p241, %p242
      %p244 = scmp.ne.s32.totalorder %s233, %s234
      %p245 = scmp.eq.s32.totalorder %s37, 0
      %p246 = por %p244, %p245
      %p247 = scmp.ne.s32.totalorder %s233, %s234
      %p248 = scmp.eq.s32.totalorder %s38, 1
      %p249 = por %p247, %p248
      %p251 = scmp.ne.s32.totalorder %s234, %s250
      %p252 = scmp.eq.s32.totalorder %s38, 0
      %p253 = por %p251, %p252
      %s254 = ssub.s32 %s32, %s39
      %p255 = scmp.eq.s32.totalorder %s254, 0
      %s257 = sadd.s32 %s256, 1
      %s258 = scalar_select %p255, %s256, %s257
      %p261 = pneg %p255
      %p262 = scmp.eq.s32.totalorder %s32, 1
      %p263 = por %p261, %p262
      %p264 = scmp.ne.s32.totalorder %s256, %s259
      %p265 = scmp.eq.s32.totalorder %s32, 0
      %p266 = por %p264, %p265
      %p267 = scmp.ne.s32.totalorder %s256, %s259
      %p268 = scmp.eq.s32.totalorder %s37, 1
      %p269 = por %p267, %p268
      %p270 = scmp.ne.s32.totalorder %s259, %s260
      %p271 = scmp.eq.s32.totalorder %s37, 0
      %p272 = por %p270, %p271
      %p273 = scmp.ne.s32.totalorder %s259, %s260
      %p274 = scmp.eq.s32.totalorder %s38, 1
      %p275 = por %p273, %p274
      %p277 = scmp.ne.s32.totalorder %s260, %s276
      %p278 = scmp.eq.s32.totalorder %s38, 0
      %p279 = por %p277, %p278
      %s280 = ssub.s32 %s32, %s39
      %p281 = scmp.eq.s32.totalorder %s280, 0
      %s283 = sadd.s32 %s282, 1
      %s284 = scalar_select %p281, %s282, %s283
      %p287 = pneg %p281
      %p288 = scmp.eq.s32.totalorder %s32, 1
      %p289 = por %p287, %p288
      %p290 = scmp.ne.s32.totalorder %s282, %s285
      %p291 = scmp.eq.s32.totalorder %s32, 0
      %p292 = por %p290, %p291
      %p293 = scmp.ne.s32.totalorder %s282, %s285
      %p294 = scmp.eq.s32.totalorder %s37, 1
      %p295 = por %p293, %p294
      %p296 = scmp.ne.s32.totalorder %s285, %s286
      %p297 = scmp.eq.s32.totalorder %s37, 0
      %p298 = por %p296, %p297
      %p299 = scmp.ne.s32.totalorder %s285, %s286
      %p300 = scmp.eq.s32.totalorder %s38, 1
      %p301 = por %p299, %p300
      %p303 = scmp.ne.s32.totalorder %s286, %s302
      %p304 = scmp.eq.s32.totalorder %s38, 0
      %p305 = por %p303, %p304
      %s306 = ssub.s32 %s32, %s39
      %p307 = scmp.eq.s32.totalorder %s306, 0
      %s309 = sadd.s32 %s308, 1
      %s310 = scalar_select %p307, %s308, %s309
      %p313 = pneg %p307
      %p314 = scmp.eq.s32.totalorder %s32, 1
      %p315 = por %p313, %p314
      %p316 = scmp.ne.s32.totalorder %s308, %s311
      %p317 = scmp.eq.s32.totalorder %s32, 0
      %p318 = por %p316, %p317
      %p319 = scmp.ne.s32.totalorder %s308, %s311
      %p320 = scmp.eq.s32.totalorder %s37, 1
      %p321 = por %p319, %p320
      %p322 = scmp.ne.s32.totalorder %s311, %s312
      %p323 = scmp.eq.s32.totalorder %s37, 0
      %p324 = por %p322, %p323
      %p325 = scmp.ne.s32.totalorder %s311, %s312
      %p326 = scmp.eq.s32.totalorder %s38, 1
      %p327 = por %p325, %p326
      %p329 = scmp.ne.s32.totalorder %s312, %s328
      %p330 = scmp.eq.s32.totalorder %s38, 0
      %p331 = por %p329, %p330
      %s332 = ssub.s32 %s32, %s39
      %p333 = scmp.eq.s32.totalorder %s332, 0
      %s335 = sadd.s32 %s334, 1
      %s336 = scalar_select %p333, %s334, %s335
      %p339 = pneg %p333
      %p340 = scmp.eq.s32.totalorder %s32, 1
      %p341 = por %p339, %p340
      %p342 = scmp.ne.s32.totalorder %s334, %s337
      %p343 = scmp.eq.s32.totalorder %s32, 0
      %p344 = por %p342, %p343
      %p345 = scmp.ne.s32.totalorder %s334, %s337
      %p346 = scmp.eq.s32.totalorder %s37, 1
      %p347 = por %p345, %p346
      %p348 = scmp.ne.s32.totalorder %s337, %s338
      %p349 = scmp.eq.s32.totalorder %s37, 0
      %p350 = por %p348, %p349
      %p351 = scmp.ne.s32.totalorder %s337, %s338
      %p352 = scmp.eq.s32.totalorder %s38, 1
      %p353 = por %p351, %p352
      %p355 = scmp.ne.s32.totalorder %s338, %s354
      %p356 = scmp.eq.s32.totalorder %s38, 0
      %p357 = por %p355, %p356
      %s358 = ssub.s32 %s32, %s39
      %p359 = scmp.eq.s32.totalorder %s358, 0
      %s361 = sadd.s32 %s360, 1
      %s362 = scalar_select %p359, %s360, %s361
      %p365 = pneg %p359
      %p366 = scmp.eq.s32.totalorder %s32, 1
      %p367 = por %p365, %p366
      %p368 = scmp.ne.s32.totalorder %s360, %s363
      %p369 = scmp.eq.s32.totalorder %s32, 0
      %p370 = por %p368, %p369
      %p371 = scmp.ne.s32.totalorder %s360, %s363
      %p372 = scmp.eq.s32.totalorder %s37, 1
      %p373 = por %p371, %p372
      %p374 = scmp.ne.s32.totalorder %s363, %s364
      %p375 = scmp.eq.s32.totalorder %s37, 0
      %p376 = por %p374, %p375
      %p377 = scmp.ne.s32.totalorder %s363, %s364
      %p378 = scmp.eq.s32.totalorder %s38, 1
      %p379 = por %p377, %p378
      %p381 = scmp.ne.s32.totalorder %s364, %s380
      %p382 = scmp.eq.s32.totalorder %s38, 0
      %p383 = por %p381, %p382
      %s384 = ssub.s32 %s32, %s39
      %p385 = scmp.eq.s32.totalorder %s384, 0
      %s387 = sadd.s32 %s386, 1
      %s388 = scalar_select %p385, %s386, %s387
      %p391 = pneg %p385
      %p392 = scmp.eq.s32.totalorder %s32, 1
      %p393 = por %p391, %p392
      %p394 = scmp.ne.s32.totalorder %s386, %s389
      %p395 = scmp.eq.s32.totalorder %s32, 0
      %p396 = por %p394, %p395
      %p397 = scmp.ne.s32.totalorder %s386, %s389
      %p398 = scmp.eq.s32.totalorder %s37, 1
      %p399 = por %p397, %p398
      %p400 = scmp.ne.s32.totalorder %s389, %s390
      %p401 = scmp.eq.s32.totalorder %s37, 0
      %p402 = por %p400, %p401
      %p403 = scmp.ne.s32.totalorder %s389, %s390
      %p404 = scmp.eq.s32.totalorder %s38, 1
      %p405 = por %p403, %p404
      %p407 = scmp.ne.s32.totalorder %s390, %s406
      %p408 = scmp.eq.s32.totalorder %s38, 0
      %p409 = por %p407, %p408
      %s410 = ssub.s32 %s32, %s39
      %p411 = scmp.eq.s32.totalorder %s410, 0
      %s413 = sadd.s32 %s412, 1
      %s414 = scalar_select %p411, %s412, %s413
      %p417 = pneg %p411
      %p418 = scmp.eq.s32.totalorder %s32, 1
      %p419 = por %p417, %p418
      %p420 = scmp.ne.s32.totalorder %s412, %s415
      %p421 = scmp.eq.s32.totalorder %s32, 0
      %p422 = por %p420, %p421
      %p423 = scmp.ne.s32.totalorder %s412, %s415
      %p424 = scmp.eq.s32.totalorder %s37, 1
      %p425 = por %p423, %p424
      %p426 = scmp.ne.s32.totalorder %s415, %s416
      %p427 = scmp.eq.s32.totalorder %s37, 0
      %p428 = por %p426, %p427
      %p429 = scmp.ne.s32.totalorder %s415, %s416
      %p430 = scmp.eq.s32.totalorder %s38, 1
      %p431 = por %p429, %p430
      %p433 = scmp.ne.s32.totalorder %s416, %s432
      %p434 = scmp.eq.s32.totalorder %s38, 0
      %p435 = por %p433, %p434
      %s436 = ssub.s32 %s32, %s39
      %p437 = scmp.eq.s32.totalorder %s436, 0
      %s439 = sadd.s32 %s438, 1
      %s440 = scalar_select %p437, %s438, %s439
      %p443 = pneg %p437
      %p444 = scmp.eq.s32.totalorder %s32, 1
      %p445 = por %p443, %p444
      %p446 = scmp.ne.s32.totalorder %s438, %s441
      %p447 = scmp.eq.s32.totalorder %s32, 0
      %p448 = por %p446, %p447
      %p449 = scmp.ne.s32.totalorder %s438, %s441
      %p450 = scmp.eq.s32.totalorder %s37, 1
      %p451 = por %p449, %p450
      %p452 = scmp.ne.s32.totalorder %s441, %s442
      %p453 = scmp.eq.s32.totalorder %s37, 0
      %p454 = por %p452, %p453
      %p455 = scmp.ne.s32.totalorder %s441, %s442
      %p456 = scmp.eq.s32.totalorder %s38, 1
      %p457 = por %p455, %p456
      %p459 = scmp.ne.s32.totalorder %s442, %s458
      %p460 = scmp.eq.s32.totalorder %s38, 0
      %p461 = por %p459, %p460
      %s462 = ssub.s32 %s32, %s39
      %p463 = scmp.eq.s32.totalorder %s462, 0
      %s465 = sadd.s32 %s464, 1
      %s466 = scalar_select %p463, %s464, %s465
      %p469 = pneg %p463
      %p470 = scmp.eq.s32.totalorder %s32, 1
      %p471 = por %p469, %p470
      %p472 = scmp.ne.s32.totalorder %s464, %s467
      %p473 = scmp.eq.s32.totalorder %s32, 0
      %p474 = por %p472, %p473
      %p475 = scmp.ne.s32.totalorder %s464, %s467
      %p476 = scmp.eq.s32.totalorder %s37, 1
      %p477 = por %p475, %p476
      %p478 = scmp.ne.s32.totalorder %s467, %s468
      %p479 = scmp.eq.s32.totalorder %s37, 0
      %p480 = por %p478, %p479
      %p481 = scmp.ne.s32.totalorder %s467, %s468
      %p482 = scmp.eq.s32.totalorder %s38, 1
      %p483 = por %p481, %p482
      %p485 = scmp.ne.s32.totalorder %s468, %s484
      %p486 = scmp.eq.s32.totalorder %s38, 0
      %p487 = por %p485, %p486
      %s488 = ssub.s32 %s32, %s39
      %p489 = scmp.eq.s32.totalorder %s488, 0
      %s491 = sadd.s32 %s490, 1
      %s492 = scalar_select %p489, %s490, %s491
      %p495 = pneg %p489
      %p496 = scmp.eq.s32.totalorder %s32, 1
      %p497 = por %p495, %p496
      %p498 = scmp.ne.s32.totalorder %s490, %s493
      %p499 = scmp.eq.s32.totalorder %s32, 0
      %p500 = por %p498, %p499
      %p501 = scmp.ne.s32.totalorder %s490, %s493
      %p502 = scmp.eq.s32.totalorder %s37, 1
      %p503 = por %p501, %p502
      %p504 = scmp.ne.s32.totalorder %s493, %s494
      %p505 = scmp.eq.s32.totalorder %s37, 0
      %p506 = por %p504, %p505
      %p507 = scmp.ne.s32.totalorder %s493, %s494
      %p508 = scmp.eq.s32.totalorder %s38, 1
      %p509 = por %p507, %p508
      %p511 = scmp.ne.s32.totalorder %s494, %s510
      %p512 = scmp.eq.s32.totalorder %s38, 0
      %p513 = por %p511, %p512
      %s514 = ssub.s32 %s32, %s39
      %p515 = scmp.eq.s32.totalorder %s514, 0
      %s517 = sadd.s32 %s516, 1
      %s518 = scalar_select %p515, %s516, %s517
      %p521 = pneg %p515
      %p522 = scmp.eq.s32.totalorder %s32, 1
      %p523 = por %p521, %p522
      %p524 = scmp.ne.s32.totalorder %s516, %s519
      %p525 = scmp.eq.s32.totalorder %s32, 0
      %p526 = por %p524, %p525
      %p527 = scmp.ne.s32.totalorder %s516, %s519
      %p528 = scmp.eq.s32.totalorder %s37, 1
      %p529 = por %p527, %p528
      %p530 = scmp.ne.s32.totalorder %s519, %s520
      %p531 = scmp.eq.s32.totalorder %s37, 0
      %p532 = por %p530, %p531
      %p533 = scmp.ne.s32.totalorder %s519, %s520
      %p534 = scmp.eq.s32.totalorder %s38, 1
      %p535 = por %p533, %p534
      %p537 = scmp.ne.s32.totalorder %s520, %s536
      %p538 = scmp.eq.s32.totalorder %s38, 0
      %p539 = por %p537, %p538
      %s541 = sadd.s32 %s540, 1
      %p544 = scmp.eq.s32.totalorder %s32, 1
      %p545 = scmp.ne.s32.totalorder %s540, %s542
      %p546 = scmp.eq.s32.totalorder %s32, 0
      %p547 = por %p545, %p546
      %p548 = scmp.ne.s32.totalorder %s540, %s542
      %p549 = scmp.eq.s32.totalorder %s37, 1
      %p550 = por %p548, %p549
      %p551 = scmp.ne.s32.totalorder %s542, %s543
      %p552 = scmp.eq.s32.totalorder %s37, 0
      %p553 = por %p551, %p552
      %p554 = scmp.ne.s32.totalorder %s542, %s543
      %p555 = scmp.eq.s32.totalorder %s38, 1
      %p556 = por %p554, %p555
      %p558 = scmp.ne.s32.totalorder %s543, %s557
      %p559 = scmp.eq.s32.totalorder %s38, 0
      %p560 = por %p558, %p559
      %s562 = sadd.s32 %s561, 1
      %p565 = scmp.eq.s32.totalorder %s32, 1
      %p566 = scmp.ne.s32.totalorder %s561, %s563
      %p567 = scmp.eq.s32.totalorder %s32, 0
      %p568 = por %p566, %p567
      %p569 = scmp.ne.s32.totalorder %s561, %s563
      %p570 = scmp.eq.s32.totalorder %s37, 1
      %p571 = por %p569, %p570
      %p572 = scmp.ne.s32.totalorder %s563, %s564
      %p573 = scmp.eq.s32.totalorder %s37, 0
      %p574 = por %p572, %p573
      %p575 = scmp.ne.s32.totalorder %s563, %s564
      %p576 = scmp.eq.s32.totalorder %s38, 1
      %p577 = por %p575, %p576
      %p579 = scmp.ne.s32.totalorder %s564, %s578
      %p580 = scmp.eq.s32.totalorder %s38, 0
      %p581 = por %p579, %p580
      %s583 = sadd.s32 %s582, 1
      %p586 = scmp.eq.s32.totalorder %s32, 1
      %p587 = scmp.ne.s32.totalorder %s582, %s584
      %p588 = scmp.eq.s32.totalorder %s32, 0
      %p589 = por %p587, %p588
      %p590 = scmp.ne.s32.totalorder %s582, %s584
      %p591 = scmp.eq.s32.totalorder %s37, 1
      %p592 = por %p590, %p591
      %p593 = scmp.ne.s32.totalorder %s584, %s585
      %p594 = scmp.eq.s32.totalorder %s37, 0
      %p595 = por %p593, %p594
      %p596 = scmp.ne.s32.totalorder %s584, %s585
      %p597 = scmp.eq.s32.totalorder %s38, 1
      %p598 = por %p596, %p597
      %p600 = scmp.ne.s32.totalorder %s585, %s599
      %p601 = scmp.eq.s32.totalorder %s38, 0
      %p602 = por %p600, %p601
      %s604 = sadd.s32 %s603, 1
      %p607 = scmp.eq.s32.totalorder %s32, 1
      %p608 = scmp.ne.s32.totalorder %s603, %s605
      %p609 = scmp.eq.s32.totalorder %s32, 0
      %p610 = por %p608, %p609
      %p611 = scmp.ne.s32.totalorder %s603, %s605
      %p612 = scmp.eq.s32.totalorder %s37, 1
      %p613 = por %p611, %p612
      %p614 = scmp.ne.s32.totalorder %s605, %s606
      %p615 = scmp.eq.s32.totalorder %s37, 0
      %p616 = por %p614, %p615
      %p617 = scmp.ne.s32.totalorder %s605, %s606
      %p618 = scmp.eq.s32.totalorder %s38, 1
      %p619 = por %p617, %p618
      %p621 = scmp.ne.s32.totalorder %s606, %s620
      %p622 = scmp.eq.s32.totalorder %s38, 0
      %p623 = por %p621, %p622
      %s625 = sadd.s32 %s624, 1
      %p628 = scmp.eq.s32.totalorder %s32, 1
      %p629 = scmp.ne.s32.totalorder %s624, %s626
      %p630 = scmp.eq.s32.totalorder %s32, 0
      %p631 = por %p629, %p630
      %p632 = scmp.ne.s32.totalorder %s624, %s626
      %p633 = scmp.eq.s32.totalorder %s37, 1
      %p634 = por %p632, %p633
      %p635 = scmp.ne.s32.totalorder %s626, %s627
      %p636 = scmp.eq.s32.totalorder %s37, 0
      %p637 = por %p635, %p636
      %p638 = scmp.ne.s32.totalorder %s626, %s627
      %p639 = scmp.eq.s32.totalorder %s38, 1
      %p640 = por %p638, %p639
      %p642 = scmp.ne.s32.totalorder %s627, %s641
      %p643 = scmp.eq.s32.totalorder %s38, 0
      %p644 = por %p642, %p643
      %p645 = scmp.le.s32.totalorder 1, %s32
      %p646 = scmp.lt.s32.totalorder %s32, 3
      %p647 = pnand %p645, %p646
      %p648 = pneg %p647
      // Predicated region
      $region9: #{speech_transformer_decoder_forward.1} parent=5 // pred_check
        _
      $region10: #{speech_transformer_decoder_forward.1} parent=5 // pred_check_branch
        %650 = sbr.rel (%p647) target = $region12
      $region11: #{speech_transformer_decoder_forward.1} parent=5 // pred_region
        %s651 = ssub.s32 %s32, 1
        // Predicated region
        $region13: #{speech_transformer_decoder_forward.1} parent=11 // pred_check
          %p652 = pneg %p53
        $region14: #{speech_transformer_decoder_forward.1} parent=11 // pred_check_branch
          %654 = sbr.rel (%p652) target = $region16
        $region15: #{speech_transformer_decoder_forward.1} parent=11 // pred_region
          _
        $region16: #{speech_transformer_decoder_forward.1} parent=11 // pred_fallthru
          _
        // Predicated region
        $region17: #{speech_transformer_decoder_forward.1} parent=11 // pred_check
          %p655 = pneg %p74
        $region18: #{speech_transformer_decoder_forward.1} parent=11 // pred_check_branch
          %657 = sbr.rel (%p655) target = $region20
        $region19: #{speech_transformer_decoder_forward.1} parent=11 // pred_region
          _
        $region20: #{speech_transformer_decoder_forward.1} parent=11 // pred_fallthru
          _
        // Predicated region
        $region21: #{speech_transformer_decoder_forward.1} parent=11 // pred_check
          %p658 = pneg %p95
        $region22: #{speech_transformer_decoder_forward.1} parent=11 // pred_check_branch
          %660 = sbr.rel (%p658) target = $region24
        $region23: #{speech_transformer_decoder_forward.1} parent=11 // pred_region
          _
        $region24: #{speech_transformer_decoder_forward.1} parent=11 // pred_fallthru
          _
        // Predicated region
        $region25: #{speech_transformer_decoder_forward.1} parent=11 // pred_check
          %p661 = pneg %p116
        $region26: #{speech_transformer_decoder_forward.1} parent=11 // pred_check_branch
          %663 = sbr.rel (%p661) target = $region28
        $region27: #{speech_transformer_decoder_forward.1} parent=11 // pred_region
          _
        $region28: #{speech_transformer_decoder_forward.1} parent=11 // pred_fallthru
          _
        // Predicated region
        $region29: #{speech_transformer_decoder_forward.1} parent=11 // pred_check
          %p664 = pneg %p553
        $region30: #{speech_transformer_decoder_forward.1} parent=11 // pred_check_branch
          %666 = sbr.rel (%p664) target = $region32
        $region31: #{speech_transformer_decoder_forward.1} parent=11 // pred_region
          _
        $region32: #{speech_transformer_decoder_forward.1} parent=11 // pred_fallthru
          _
        // Predicated region
        $region33: #{speech_transformer_decoder_forward.1} parent=11 // pred_check
          %p667 = pneg %p574
        $region34: #{speech_transformer_decoder_forward.1} parent=11 // pred_check_branch
          %669 = sbr.rel (%p667) target = $region36
        $region35: #{speech_transformer_decoder_forward.1} parent=11 // pred_region
          _
        $region36: #{speech_transformer_decoder_forward.1} parent=11 // pred_fallthru
          _
        // Predicated region
        $region37: #{speech_transformer_decoder_forward.1} parent=11 // pred_check
          %p670 = pneg %p595
        $region38: #{speech_transformer_decoder_forward.1} parent=11 // pred_check_branch
          %672 = sbr.rel (%p670) target = $region40
        $region39: #{speech_transformer_decoder_forward.1} parent=11 // pred_region
          _
        $region40: #{speech_transformer_decoder_forward.1} parent=11 // pred_fallthru
          _
      $region12: #{speech_transformer_decoder_forward.1} parent=5 // pred_fallthru
        _
      %p673 = scmp.lt.s32.totalorder %s32, 2
      // Predicated region
      $region41: #{speech_transformer_decoder_forward.1} parent=5 // pred_check
        %p674 = pneg %p673
      $region42: #{speech_transformer_decoder_forward.1} parent=5 // pred_check_branch
        %676 = sbr.rel (%p674) target = $region44
      $region43: #{speech_transformer_decoder_forward.1} parent=5 // pred_region
        // Predicated region
        $region45: #{speech_transformer_decoder_forward.1} parent=43 // pred_check
          %p677 = pneg %p136
        $region46: #{speech_transformer_decoder_forward.1} parent=43 // pred_check_branch
          %679 = sbr.rel (%p677) target = $region48
        $region47: #{speech_transformer_decoder_forward.1} parent=43 // pred_region
          %p680 = scmp.lt.s32.totalorder %s32, 1
          %s681 = scalar_select %p680, %s32, 1
          %s682 = smul.addr %s681, 4
          %s683 = smul.addr %s682, 8
          %s684 = scalar_lea.vmem %s4, %s683
        $region48: #{speech_transformer_decoder_forward.1} parent=43 // pred_fallthru
          _
        // Predicated region
        $region49: #{speech_transformer_decoder_forward.1} parent=43 // pred_check
          %p685 = pneg %p162
        $region50: #{speech_transformer_decoder_forward.1} parent=43 // pred_check_branch
          %687 = sbr.rel (%p685) target = $region52
        $region51: #{speech_transformer_decoder_forward.1} parent=43 // pred_region
          %p688 = scmp.lt.s32.totalorder %s32, 1
          %s689 = scalar_select %p688, %s32, 1
          %s690 = scalar_lea.vmem %s5, %s689
        $region52: #{speech_transformer_decoder_forward.1} parent=43 // pred_fallthru
          _
        // Predicated region
        $region53: #{speech_transformer_decoder_forward.1} parent=43 // pred_check
          %p691 = pneg %p188
        $region54: #{speech_transformer_decoder_forward.1} parent=43 // pred_check_branch
          %693 = sbr.rel (%p691) target = $region56
        $region55: #{speech_transformer_decoder_forward.1} parent=43 // pred_region
          %p694 = scmp.lt.s32.totalorder %s32, 1
          %s695 = scalar_select %p694, %s32, 1
          %s696 = scalar_lea.vmem %s6, %s695
        $region56: #{speech_transformer_decoder_forward.1} parent=43 // pred_fallthru
          _
        // Predicated region
        $region57: #{speech_transformer_decoder_forward.1} parent=43 // pred_check
          %p697 = pneg %p214
        $region58: #{speech_transformer_decoder_forward.1} parent=43 // pred_check_branch
          %699 = sbr.rel (%p697) target = $region60
        $region59: #{speech_transformer_decoder_forward.1} parent=43 // pred_region
          %p700 = scmp.lt.s32.totalorder %s32, 1
          %s701 = scalar_select %p700, %s32, 1
          %s702 = scalar_lea.vmem %s7, %s701
        $region60: #{speech_transformer_decoder_forward.1} parent=43 // pred_fallthru
          _
        // Predicated region
        $region61: #{speech_transformer_decoder_forward.1} parent=43 // pred_check
          %p703 = pneg %p240
        $region62: #{speech_transformer_decoder_forward.1} parent=43 // pred_check_branch
          %705 = sbr.rel (%p703) target = $region64
        $region63: #{speech_transformer_decoder_forward.1} parent=43 // pred_region
          %p706 = scmp.lt.s32.totalorder %s32, 1
          %s707 = scalar_select %p706, %s32, 1
          %s708 = smul.addr %s707, 4
          %s709 = smul.addr %s708, 8
          %s710 = scalar_lea.vmem %s8, %s709
        $region64: #{speech_transformer_decoder_forward.1} parent=43 // pred_fallthru
          _
        // Predicated region
        $region65: #{speech_transformer_decoder_forward.1} parent=43 // pred_check
          %p711 = pneg %p266
        $region66: #{speech_transformer_decoder_forward.1} parent=43 // pred_check_branch
          %713 = sbr.rel (%p711) target = $region68
        $region67: #{speech_transformer_decoder_forward.1} parent=43 // pred_region
          %p714 = scmp.lt.s32.totalorder %s32, 1
          %s715 = scalar_select %p714, %s32, 1
          %s716 = scalar_lea.vmem %s9, %s715
        $region68: #{speech_transformer_decoder_forward.1} parent=43 // pred_fallthru
          _
        // Predicated region
        $region69: #{speech_transformer_decoder_forward.1} parent=43 // pred_check
          %p717 = pneg %p292
        $region70: #{speech_transformer_decoder_forward.1} parent=43 // pred_check_branch
          %719 = sbr.rel (%p717) target = $region72
        $region71: #{speech_transformer_decoder_forward.1} parent=43 // pred_region
          %p720 = scmp.lt.s32.totalorder %s32, 1
          %s721 = scalar_select %p720, %s32, 1
          %s722 = smul.addr %s721, 4
          %s723 = smul.addr %s722, 8
          %s724 = scalar_lea.vmem %s10, %s723
        $region72: #{speech_transformer_decoder_forward.1} parent=43 // pred_fallthru
          _
        // Predicated region
        $region73: #{speech_transformer_decoder_forward.1} parent=43 // pred_check
          %p725 = pneg %p318
        $region74: #{speech_transformer_decoder_forward.1} parent=43 // pred_check_branch
          %727 = sbr.rel (%p725) target = $region76
        $region75: #{speech_transformer_decoder_forward.1} parent=43 // pred_region
          %p728 = scmp.lt.s32.totalorder %s32, 1
          %s729 = scalar_select %p728, %s32, 1
          %s730 = scalar_lea.vmem %s11, %s729
        $region76: #{speech_transformer_decoder_forward.1} parent=43 // pred_fallthru
          _
        // Predicated region
        $region77: #{speech_transformer_decoder_forward.1} parent=43 // pred_check
          %p731 = pneg %p344
        $region78: #{speech_transformer_decoder_forward.1} parent=43 // pred_check_branch
          %733 = sbr.rel (%p731) target = $region80
        $region79: #{speech_transformer_decoder_forward.1} parent=43 // pred_region
          %p734 = scmp.lt.s32.totalorder %s32, 1
          %s735 = scalar_select %p734, %s32, 1
          %s736 = scalar_lea.vmem %s12, %s735
        $region80: #{speech_transformer_decoder_forward.1} parent=43 // pred_fallthru
          _
        // Predicated region
        $region81: #{speech_transformer_decoder_forward.1} parent=43 // pred_check
          %p737 = pneg %p370
        $region82: #{speech_transformer_decoder_forward.1} parent=43 // pred_check_branch
          %739 = sbr.rel (%p737) target = $region84
        $region83: #{speech_transformer_decoder_forward.1} parent=43 // pred_region
          %p740 = scmp.lt.s32.totalorder %s32, 1
          %s741 = scalar_select %p740, %s32, 1
          %s742 = scalar_lea.vmem %s13, %s741
        $region84: #{speech_transformer_decoder_forward.1} parent=43 // pred_fallthru
          _
        // Predicated region
        $region85: #{speech_transformer_decoder_forward.1} parent=43 // pred_check
          %p743 = pneg %p396
        $region86: #{speech_transformer_decoder_forward.1} parent=43 // pred_check_branch
          %745 = sbr.rel (%p743) target = $region88
        $region87: #{speech_transformer_decoder_forward.1} parent=43 // pred_region
          %p746 = scmp.lt.s32.totalorder %s32, 1
          %s747 = scalar_select %p746, %s32, 1
          %s748 = smul.addr %s747, 4
          %s749 = smul.addr %s748, 8
          %s750 = scalar_lea.vmem %s14, %s749
        $region88: #{speech_transformer_decoder_forward.1} parent=43 // pred_fallthru
          _
        // Predicated region
        $region89: #{speech_transformer_decoder_forward.1} parent=43 // pred_check
          %p751 = pneg %p422
        $region90: #{speech_transformer_decoder_forward.1} parent=43 // pred_check_branch
          %753 = sbr.rel (%p751) target = $region92
        $region91: #{speech_transformer_decoder_forward.1} parent=43 // pred_region
          %p754 = scmp.lt.s32.totalorder %s32, 1
          %s755 = scalar_select %p754, %s32, 1
          %s756 = scalar_lea.vmem %s15, %s755
        $region92: #{speech_transformer_decoder_forward.1} parent=43 // pred_fallthru
          _
        // Predicated region
        $region93: #{speech_transformer_decoder_forward.1} parent=43 // pred_check
          %p757 = pneg %p448
        $region94: #{speech_transformer_decoder_forward.1} parent=43 // pred_check_branch
          %759 = sbr.rel (%p757) target = $region96
        $region95: #{speech_transformer_decoder_forward.1} parent=43 // pred_region
          %p760 = scmp.lt.s32.totalorder %s32, 1
          %s761 = scalar_select %p760, %s32, 1
          %s762 = smul.addr %s761, 8
          %s763 = smul.addr %s762, 8
          %s764 = scalar_lea.vmem %s16, %s763
        $region96: #{speech_transformer_decoder_forward.1} parent=43 // pred_fallthru
          _
        // Predicated region
        $region97: #{speech_transformer_decoder_forward.1} parent=43 // pred_check
          %p765 = pneg %p474
        $region98: #{speech_transformer_decoder_forward.1} parent=43 // pred_check_branch
          %767 = sbr.rel (%p765) target = $region100
        $region99: #{speech_transformer_decoder_forward.1} parent=43 // pred_region
          %p768 = scmp.lt.s32.totalorder %s32, 1
          %s769 = scalar_select %p768, %s32, 1
          %s770 = scalar_lea.vmem %s17, %s769
        $region100: #{speech_transformer_decoder_forward.1} parent=43 // pred_fallthru
          _
        // Predicated region
        $region101: #{speech_transformer_decoder_forward.1} parent=43 // pred_check
          %p771 = pneg %p500
        $region102: #{speech_transformer_decoder_forward.1} parent=43 // pred_check_branch
          %773 = sbr.rel (%p771) target = $region104
        $region103: #{speech_transformer_decoder_forward.1} parent=43 // pred_region
          %p774 = scmp.lt.s32.totalorder %s32, 1
          %s775 = scalar_select %p774, %s32, 1
          %s776 = scalar_lea.vmem %s18, %s775
        $region104: #{speech_transformer_decoder_forward.1} parent=43 // pred_fallthru
          _
        // Predicated region
        $region105: #{speech_transformer_decoder_forward.1} parent=43 // pred_check
          %p777 = pneg %p526
        $region106: #{speech_transformer_decoder_forward.1} parent=43 // pred_check_branch
          %779 = sbr.rel (%p777) target = $region108
        $region107: #{speech_transformer_decoder_forward.1} parent=43 // pred_region
          %p780 = scmp.lt.s32.totalorder %s32, 1
          %s781 = scalar_select %p780, %s32, 1
          %s782 = scalar_lea.vmem %s19, %s781
        $region108: #{speech_transformer_decoder_forward.1} parent=43 // pred_fallthru
          _
      $region44: #{speech_transformer_decoder_forward.1} parent=5 // pred_fallthru
        _
      %p783 = scmp.le.s32.totalorder 1, %s32
      %p784 = scmp.lt.s32.totalorder %s32, 3
      %p785 = pnand %p783, %p784
      %p786 = pneg %p785
      // Predicated region
      $region109: #{speech_transformer_decoder_forward.1} parent=5 // pred_check
        _
      $region110: #{speech_transformer_decoder_forward.1} parent=5 // pred_check_branch
        %788 = sbr.rel (%p785) target = $region112
      $region111: #{speech_transformer_decoder_forward.1} parent=5 // pred_region
        %s789 = ssub.s32 %s32, 1
        %p790 = pneg %p53
        %p791 = pneg %p50
        %p792 = pneg %p74
        %p793 = pneg %p71
        %p794 = pneg %p95
        %p795 = pneg %p92
        %p796 = pneg %p116
        %p797 = pneg %p113
        %p798 = scmp.lt.s32.totalorder %s37, 1
        %s799 = scalar_select %p798, %s37, 1
        %s800 = smul.addr %s799, 4
        %s801 = smul.addr %s800, 8
        %s802 = scalar_lea.vmem %s4, %s801
        %p803 = pneg %p142
        %p804 = pneg %p139
        %p805 = scmp.lt.s32.totalorder %s37, 1
        %s806 = scalar_select %p805, %s37, 1
        %s807 = scalar_lea.vmem %s5, %s806
        %p808 = pneg %p168
        %p809 = pneg %p165
        %p810 = scmp.lt.s32.totalorder %s37, 1
        %s811 = scalar_select %p810, %s37, 1
        %s812 = scalar_lea.vmem %s6, %s811
        %p813 = pneg %p194
        %p814 = pneg %p191
        %p815 = scmp.lt.s32.totalorder %s37, 1
        %s816 = scalar_select %p815, %s37, 1
        %s817 = scalar_lea.vmem %s7, %s816
        %p818 = pneg %p220
        %p819 = pneg %p217
        %p820 = scmp.lt.s32.totalorder %s37, 1
        %s821 = scalar_select %p820, %s37, 1
        %s822 = smul.addr %s821, 4
        %s823 = smul.addr %s822, 8
        %s824 = scalar_lea.vmem %s8, %s823
        %p825 = pneg %p246
        %p826 = pneg %p243
        %p827 = scmp.lt.s32.totalorder %s37, 1
        %s828 = scalar_select %p827, %s37, 1
        %s829 = scalar_lea.vmem %s9, %s828
        %p830 = pneg %p272
        %p831 = pneg %p269
        %p832 = scmp.lt.s32.totalorder %s37, 1
        %s833 = scalar_select %p832, %s37, 1
        %s834 = smul.addr %s833, 4
        %s835 = smul.addr %s834, 8
        %s836 = scalar_lea.vmem %s10, %s835
        %p837 = pneg %p298
        %p838 = pneg %p295
        %p839 = scmp.lt.s32.totalorder %s37, 1
        %s840 = scalar_select %p839, %s37, 1
        %s841 = scalar_lea.vmem %s11, %s840
        %p842 = pneg %p324
        %p843 = pneg %p321
        %p844 = scmp.lt.s32.totalorder %s37, 1
        %s845 = scalar_select %p844, %s37, 1
        %s846 = scalar_lea.vmem %s12, %s845
        %p847 = pneg %p350
        %p848 = pneg %p347
        %p849 = scmp.lt.s32.totalorder %s37, 1
        %s850 = scalar_select %p849, %s37, 1
        %s851 = scalar_lea.vmem %s13, %s850
        %p852 = pneg %p376
        %p853 = pneg %p373
        %p854 = scmp.lt.s32.totalorder %s37, 1
        %s855 = scalar_select %p854, %s37, 1
        %s856 = smul.addr %s855, 4
        %s857 = smul.addr %s856, 8
        %s858 = scalar_lea.vmem %s14, %s857
        %p859 = pneg %p402
        %p860 = pneg %p399
        %p861 = scmp.lt.s32.totalorder %s37, 1
        %s862 = scalar_select %p861, %s37, 1
        %s863 = scalar_lea.vmem %s15, %s862
        %p864 = pneg %p428
        %p865 = pneg %p425
        %p866 = scmp.lt.s32.totalorder %s37, 1
        %s867 = scalar_select %p866, %s37, 1
        %s868 = smul.addr %s867, 8
        %s869 = smul.addr %s868, 8
        %s870 = scalar_lea.vmem %s16, %s869
        %p871 = pneg %p454
        %p872 = pneg %p451
        %p873 = scmp.lt.s32.totalorder %s37, 1
        %s874 = scalar_select %p873, %s37, 1
        %s875 = scalar_lea.vmem %s17, %s874
        %p876 = pneg %p480
        %p877 = pneg %p477
        %p878 = scmp.lt.s32.totalorder %s37, 1
        %s879 = scalar_select %p878, %s37, 1
        %s880 = scalar_lea.vmem %s18, %s879
        %p881 = pneg %p506
        %p882 = pneg %p503
        %p883 = scmp.lt.s32.totalorder %s37, 1
        %s884 = scalar_select %p883, %s37, 1
        %s885 = scalar_lea.vmem %s19, %s884
        %p886 = pneg %p532
        %p887 = pneg %p529
        %p888 = pneg %p553
        %p889 = pneg %p550
        %p890 = pneg %p574
        %p891 = pneg %p571
        %p892 = pneg %p595
        %p893 = pneg %p592
        %p894 = pneg %p616
        %p895 = pneg %p613
        %p896 = pneg %p637
        %p897 = pneg %p634
        %p898 = scmp.lt.s32.totalorder %s37, 1
        %s899 = scalar_select %p898, %s37, 1
        %s900 = smul.addr %s899, 4
        %s901 = smul.addr %s900, 8
        %s902 = scalar_lea.vmem %s4, %s901
        %p903 = scmp.lt.s32.totalorder %s37, 1
        %s904 = scalar_select %p903, %s37, 1
        %s905 = scalar_lea.vmem %s5, %s904
        %p906 = scmp.lt.s32.totalorder %s37, 1
        %s907 = scalar_select %p906, %s37, 1
        %s908 = scalar_lea.vmem %s6, %s907
        %p909 = scmp.lt.s32.totalorder %s37, 1
        %s910 = scalar_select %p909, %s37, 1
        %s911 = scalar_lea.vmem %s7, %s910
        %p912 = scmp.lt.s32.totalorder %s37, 1
        %s913 = scalar_select %p912, %s37, 1
        %s914 = smul.addr %s913, 4
        %s915 = smul.addr %s914, 8
        %s916 = scalar_lea.vmem %s8, %s915
        %p917 = scmp.lt.s32.totalorder %s37, 1
        %s918 = scalar_select %p917, %s37, 1
        %s919 = scalar_lea.vmem %s9, %s918
        %p920 = scmp.lt.s32.totalorder %s37, 1
        %s921 = scalar_select %p920, %s37, 1
        %s922 = smul.addr %s921, 4
        %s923 = smul.addr %s922, 8
        %s924 = scalar_lea.vmem %s10, %s923
        %p925 = scmp.lt.s32.totalorder %s37, 1
        %s926 = scalar_select %p925, %s37, 1
        %s927 = scalar_lea.vmem %s11, %s926
        %p928 = scmp.lt.s32.totalorder %s37, 1
        %s929 = scalar_select %p928, %s37, 1
        %s930 = scalar_lea.vmem %s12, %s929
        %p931 = scmp.lt.s32.totalorder %s37, 1
        %s932 = scalar_select %p931, %s37, 1
        %s933 = scalar_lea.vmem %s13, %s932
        %p934 = scmp.lt.s32.totalorder %s37, 1
        %s935 = scalar_select %p934, %s37, 1
        %s936 = smul.addr %s935, 4
        %s937 = smul.addr %s936, 8
        %s938 = scalar_lea.vmem %s14, %s937
        %p939 = scmp.lt.s32.totalorder %s37, 1
        %s940 = scalar_select %p939, %s37, 1
        %s941 = scalar_lea.vmem %s15, %s940
        %p942 = scmp.lt.s32.totalorder %s37, 1
        %s943 = scalar_select %p942, %s37, 1
        %s944 = smul.addr %s943, 8
        %s945 = smul.addr %s944, 8
        %s946 = scalar_lea.vmem %s16, %s945
        %p947 = scmp.lt.s32.totalorder %s37, 1
        %s948 = scalar_select %p947, %s37, 1
        %s949 = scalar_lea.vmem %s17, %s948
        %p950 = scmp.lt.s32.totalorder %s37, 1
        %s951 = scalar_select %p950, %s37, 1
        %s952 = scalar_lea.vmem %s18, %s951
        %p953 = scmp.lt.s32.totalorder %s37, 1
        %s954 = scalar_select %p953, %s37, 1
        %s955 = scalar_lea.vmem %s19, %s954
        %p956 = scmp.eq.s32.totalorder %s37, 0
        // Predicated region
        $region113: #{speech_transformer_decoder_forward.1} parent=111 // pred_check
          %p957 = pneg %p956
        $region114: #{speech_transformer_decoder_forward.1} parent=111 // pred_check_branch
          %959 = sbr.rel (%p957) target = $region116
        $region115: #{speech_transformer_decoder_forward.1} parent=111 // pred_region
          %v960 = vld [vmem:[%s0] sm:$0xff]
          %v961 = vld [vmem:[%s0 + $0x8] sm:$0xff]
          %vm962 = vcmask 261120
          %963 = vst.msk [vmem:[#allocation2] sm:$0xff] %vm962, %v960
          %964 = vst.msk [vmem:[#allocation2 + $0x8] sm:$0xff] %vm962, %v961
        $region116: #{speech_transformer_decoder_forward.1} parent=111 // pred_fallthru
          _
        %v965 = vld [vmem:[#allocation2] sm:$0xff]
        %v966 = vld [vmem:[#allocation2 + $0x8] sm:$0xff]
        %v967 = vld [vmem:[%s902] sm:$0xff]
        %v968 = vld [vmem:[%s902 + $0x8] sm:$0xff]
        %v969 = vld [vmem:[%s902 + $0x10] sm:$0xff]
        %v970 = vld [vmem:[%s902 + $0x18] sm:$0xff]
        %v971 = vld [vmem:[%s905] sm:$0x1]
        %v973 = vlaneseq
        %v974 = vshrl.u32 %v973, 7
        %v975 = vsub.s32 0, %v974
        %v976 = vrot.slane %v971, %v975
        %vm978 = vcmask 261120
        %v980 = vsel %vm978, %v965, 0
        %v983 = vsel %vm978, %v966, 0
        %985 = vmatprep.subr.mxu0 0.0
        %986 = vmatpush1.msra.mxu0 0.0
        %987 = vmatprep.subr.mxu0 0.0
        %988 = vmatpush1.msra.mxu0 0.0
        %989 = vmatprep.subr.mxu0 0.0
        %990 = vmatpush1.msra.mxu0 0.0
        %991 = vmatprep.subr.mxu0 0.0
        %992 = vmatpush1.msra.mxu0 0.0
        %993 = vmatprep.subr.mxu0 0.0
        %994 = vmatpush1.msra.mxu0 0.0
        %995 = vmatprep.subr.mxu0 0.0
        %996 = vmatpush1.msra.mxu0 0.0
        %997 = vmatprep.subr.mxu0 0.0
        %998 = vmatpush1.msra.mxu0 0.0
        %999 = vmatprep.subr.mxu0 0.0
        %1000 = vmatpush1.msra.mxu0 0.0
        %1001 = vmatprep.subr.mxu0 0.0
        %1002 = vmatpush1.msra.mxu0 0.0
        %1003 = vmatprep.subr.mxu0 0.0
        %1004 = vmatpush1.msra.mxu0 0.0
        %1005 = vmatprep.subr.mxu0 0.0
        %1006 = vmatpush1.msra.mxu0 0.0
        %1007 = vmatprep.subr.mxu0 0.0
        %1008 = vmatpush1.msra.mxu0 0.0
        %1009 = vmatprep.subr.mxu0 0.0
        %1010 = vmatpush1.msra.mxu0 %v970
        %1011 = vmatprep.subr.mxu0 0.0
        %1012 = vmatpush1.msra.mxu0 %v969
        %1013 = vmatprep.subr.mxu0 0.0
        %1014 = vmatpush1.msra.mxu0 %v968
        %1015 = vmatprep.subr.mxu0 0.0
        %1016 = vmatpush1.msra.mxu0 %v967
        %1017 = vmatprep.subr.mxu0 0.0
        %1018 = vmatpush2.msra.mxu0 0.0
        %1019 = vmatprep.subr.mxu0 0.0
        %1020 = vmatpush2.msra.mxu0 0.0
        %1021 = vmatprep.subr.mxu0 0.0
        %1022 = vmatpush2.msra.mxu0 0.0
        %1023 = vmatprep.subr.mxu0 0.0
        %1024 = vmatpush2.msra.mxu0 0.0
        %1025 = vmatprep.subr.mxu0 0.0
        %1026 = vmatpush2.msra.mxu0 0.0
        %1027 = vmatprep.subr.mxu0 0.0
        %1028 = vmatpush2.msra.mxu0 0.0
        %1029 = vmatprep.subr.mxu0 0.0
        %1030 = vmatpush2.msra.mxu0 0.0
        %1031 = vmatprep.subr.mxu0 0.0
        %1032 = vmatpush2.msra.mxu0 0.0
        %1033 = vmatprep.subr.mxu0 0.0
        %1034 = vmatpush2.msra.mxu0 0.0
        %1035 = vmatprep.subr.mxu0 0.0
        %1036 = vmatpush2.msra.mxu0 0.0
        %1037 = vmatprep.subr.mxu0 0.0
        %1038 = vmatpush2.msra.mxu0 0.0
        %1039 = vmatprep.subr.mxu0 0.0
        %1040 = vmatpush2.msra.mxu0 0.0
        %1041 = vmatprep.subr.mxu0 0.0
        %1042 = vmatpush2.msra.mxu0 0.0
        %1043 = vmatprep.subr.mxu0 0.0
        %1044 = vmatpush2.msra.mxu0 0.0
        %1045 = vmatprep.subr.mxu0 0.0
        %1046 = vmatpush2.msra.mxu0 0.0
        %1047 = vmatprep.subr.mxu0 0.0
        %1048 = vmatpush2.msra.mxu0 0.0
        %1049 = vmatprep.mubr.f32.mxu0 0.0
        %1050 = vmatmul.mubr.f32.gmra.mxu0 %v980
        %v1051 = vpop.f32.mrf.mxu0
        %v1052 = vadd.f32 %v976, %v1051
        %v1053 = vpop.f32.mrf.mxu0
        %1054 = vmatprep.mubr.f32.mxu0 0.0
        %1055 = vmatmul.mubr.f32.gmra.mxu0 %v983
        %v1056 = vpop.f32.mrf.mxu0
        %v1057 = vadd.f32 %v976, %v1056
        %v1058 = vpop.f32.mrf.mxu0
        %1059 = vdwg.mxu0
        %v1060 = vlaneseq
        %v1061 = vshrl.u32 %v1060, 7
        %v1062 = vlaneseq
        %v1063 = vand.u32 %v1062, 127
        %vm1064 = vcmp.gt.s32.totalorder %v1063, %v1061
        %v1065 = vld [vmem:[%s2] sm:$0x1]
        %v1066 = vld [vmem:[%s2 + $0x1] sm:$0x1]
        %v1067 = vlaneseq
        %v1068 = vshrl.u32 %v1067, 7
        %v1069 = vsub.s32 0, %v1068
        %v1070 = vrot.slane %v1065, %v1069
        %v1071 = vlaneseq
        %v1072 = vshrl.u32 %v1071, 7
        %v1073 = vsub.s32 0, %v1072
        %v1074 = vrot.slane %v1066, %v1073
        %1075 = vset.pattern.permute.xlu0 0
        %1076 = vperm.xlu0 %1075, %v1070
        %v1077 = vpop.permute.xlu0 %1076
        %1078 = vset.pattern.permute.xlu0 0
        %1079 = vperm.xlu0 %1078, %v1074
        %v1080 = vpop.permute.xlu0 %1079
        %vm1081 = vcmp.ge.s32.totalorder %v1063, %v1077
        %vm1082 = vcmp.ge.s32.totalorder %v1063, %v1080
        %vm1083 = vmor %vm1064, %vm1081
        %vm1084 = vmor %vm1064, %vm1082
        %1086 = vrot.lane.b32.xlu0 %v1052, 96
        %v1087 = vpop.permute.xlu0 %1086
        %vm1088 = vcmask 64512
        %v1089 = vsel %vm1088, %v1052, 0
        %v1091 = vsel %vm1088, %v1087, 0
        %1093 = vmatprep.subr.mxu0 0.0
        %1094 = vmatpush1.xpose.msra.mxu0 0.0
        %1095 = vmatprep.subr.mxu0 0.0
        %1096 = vmatpush1.xpose.msra.mxu0 0.0
        %1097 = vmatprep.subr.mxu0 0.0
        %1098 = vmatpush1.xpose.msra.mxu0 0.0
        %1099 = vmatprep.subr.mxu0 0.0
        %1100 = vmatpush1.xpose.msra.mxu0 0.0
        %1101 = vmatprep.subr.mxu0 0.0
        %1102 = vmatpush1.xpose.msra.mxu0 0.0
        %1103 = vmatprep.subr.mxu0 0.0
        %1104 = vmatpush1.xpose.msra.mxu0 0.0
        %1105 = vmatprep.subr.mxu0 0.0
        %1106 = vmatpush1.xpose.msra.mxu0 0.0
        %1107 = vmatprep.subr.mxu0 0.0
        %1108 = vmatpush1.xpose.msra.mxu0 0.0
        %1109 = vmatprep.subr.mxu0 0.0
        %1110 = vmatpush1.xpose.msra.mxu0 0.0
        %1111 = vmatprep.subr.mxu0 0.0
        %1112 = vmatpush1.xpose.msra.mxu0 0.0
        %1113 = vmatprep.subr.mxu0 0.0
        %1114 = vmatpush1.xpose.msra.mxu0 0.0
        %1115 = vmatprep.subr.mxu0 0.0
        %1116 = vmatpush1.xpose.msra.mxu0 0.0
        %1117 = vmatprep.subr.mxu0 0.0
        %1118 = vmatpush1.xpose.msra.mxu0 0.0
        %1119 = vmatprep.subr.mxu0 0.0
        %1120 = vmatpush1.xpose.msra.mxu0 0.0
        %1121 = vmatprep.subr.mxu0 0.0
        %1122 = vmatpush1.xpose.msra.mxu0 0.0
        %1123 = vmatprep.subr.mxu0 0.0
        %1124 = vmatpush1.xpose.msra.mxu0 %v1091
        %1125 = vmatprep.subr.mxu0 0.0
        %1126 = vmatpush2.xpose.msra.mxu0 0.0
        %1127 = vmatprep.subr.mxu0 0.0
        %1128 = vmatpush2.xpose.msra.mxu0 0.0
        %1129 = vmatprep.subr.mxu0 0.0
        %1130 = vmatpush2.xpose.msra.mxu0 0.0
        %1131 = vmatprep.subr.mxu0 0.0
        %1132 = vmatpush2.xpose.msra.mxu0 0.0
        %1133 = vmatprep.subr.mxu0 0.0
        %1134 = vmatpush2.xpose.msra.mxu0 0.0
        %1135 = vmatprep.subr.mxu0 0.0
        %1136 = vmatpush2.xpose.msra.mxu0 0.0
        %1137 = vmatprep.subr.mxu0 0.0
        %1138 = vmatpush2.xpose.msra.mxu0 0.0
        %1139 = vmatprep.subr.mxu0 0.0
        %1140 = vmatpush2.xpose.msra.mxu0 0.0
        %1141 = vmatprep.subr.mxu0 0.0
        %1142 = vmatpush2.xpose.msra.mxu0 0.0
        %1143 = vmatprep.subr.mxu0 0.0
        %1144 = vmatpush2.xpose.msra.mxu0 0.0
        %1145 = vmatprep.subr.mxu0 0.0
        %1146 = vmatpush2.xpose.msra.mxu0 0.0
        %1147 = vmatprep.subr.mxu0 0.0
        %1148 = vmatpush2.xpose.msra.mxu0 0.0
        %1149 = vmatprep.subr.mxu0 0.0
        %1150 = vmatpush2.xpose.msra.mxu0 0.0
        %1151 = vmatprep.subr.mxu0 0.0
        %1152 = vmatpush2.xpose.msra.mxu0 0.0
        %1153 = vmatprep.subr.mxu0 0.0
        %1154 = vmatpush2.xpose.msra.mxu0 0.0
        %1155 = vmatprep.subr.mxu0 0.0
        %1156 = vmatpush2.xpose.msra.mxu0 0.0
        %1157 = vmatprep.mubr.f32.mxu0 0.0
        %1158 = vmatmul.mubr.f32.gmra.mxu0 %v1089
        %v1159 = vpop.f32.mrf.mxu0
        %v1160 = vadd.f32 0.0, %v1159
        %v1161 = vpop.f32.mrf.mxu0
        %1162 = vdwg.mxu0
        %1164 = vrot.lane.b32.xlu0 %v1057, 96
        %v1165 = vpop.permute.xlu0 %1164
        %v1166 = vsel %vm1088, %v1057, 0
        %v1168 = vsel %vm1088, %v1165, 0
        %1170 = vmatprep.subr.mxu0 0.0
        %1171 = vmatpush1.xpose.msra.mxu0 0.0
        %1172 = vmatprep.subr.mxu0 0.0
        %1173 = vmatpush1.xpose.msra.mxu0 0.0
        %1174 = vmatprep.subr.mxu0 0.0
        %1175 = vmatpush1.xpose.msra.mxu0 0.0
        %1176 = vmatprep.subr.mxu0 0.0
        %1177 = vmatpush1.xpose.msra.mxu0 0.0
        %1178 = vmatprep.subr.mxu0 0.0
        %1179 = vmatpush1.xpose.msra.mxu0 0.0
        %1180 = vmatprep.subr.mxu0 0.0
        %1181 = vmatpush1.xpose.msra.mxu0 0.0
        %1182 = vmatprep.subr.mxu0 0.0
        %1183 = vmatpush1.xpose.msra.mxu0 0.0
        %1184 = vmatprep.subr.mxu0 0.0
        %1185 = vmatpush1.xpose.msra.mxu0 0.0
        %1186 = vmatprep.subr.mxu0 0.0
        %1187 = vmatpush1.xpose.msra.mxu0 0.0
        %1188 = vmatprep.subr.mxu0 0.0
        %1189 = vmatpush1.xpose.msra.mxu0 0.0
        %1190 = vmatprep.subr.mxu0 0.0
        %1191 = vmatpush1.xpose.msra.mxu0 0.0
        %1192 = vmatprep.subr.mxu0 0.0
        %1193 = vmatpush1.xpose.msra.mxu0 0.0
        %1194 = vmatprep.subr.mxu0 0.0
        %1195 = vmatpush1.xpose.msra.mxu0 0.0
        %1196 = vmatprep.subr.mxu0 0.0
        %1197 = vmatpush1.xpose.msra.mxu0 0.0
        %1198 = vmatprep.subr.mxu0 0.0
        %1199 = vmatpush1.xpose.msra.mxu0 0.0
        %1200 = vmatprep.subr.mxu0 0.0
        %1201 = vmatpush1.xpose.msra.mxu0 %v1168
        %1202 = vmatprep.subr.mxu0 0.0
        %1203 = vmatpush2.xpose.msra.mxu0 0.0
        %1204 = vmatprep.subr.mxu0 0.0
        %1205 = vmatpush2.xpose.msra.mxu0 0.0
        %1206 = vmatprep.subr.mxu0 0.0
        %1207 = vmatpush2.xpose.msra.mxu0 0.0
        %1208 = vmatprep.subr.mxu0 0.0
        %1209 = vmatpush2.xpose.msra.mxu0 0.0
        %1210 = vmatprep.subr.mxu0 0.0
        %1211 = vmatpush2.xpose.msra.mxu0 0.0
        %1212 = vmatprep.subr.mxu0 0.0
        %1213 = vmatpush2.xpose.msra.mxu0 0.0
        %1214 = vmatprep.subr.mxu0 0.0
        %1215 = vmatpush2.xpose.msra.mxu0 0.0
        %1216 = vmatprep.subr.mxu0 0.0
        %1217 = vmatpush2.xpose.msra.mxu0 0.0
        %1218 = vmatprep.subr.mxu0 0.0
        %1219 = vmatpush2.xpose.msra.mxu0 0.0
        %1220 = vmatprep.subr.mxu0 0.0
        %1221 = vmatpush2.xpose.msra.mxu0 0.0
        %1222 = vmatprep.subr.mxu0 0.0
        %1223 = vmatpush2.xpose.msra.mxu0 0.0
        %1224 = vmatprep.subr.mxu0 0.0
        %1225 = vmatpush2.xpose.msra.mxu0 0.0
        %1226 = vmatprep.subr.mxu0 0.0
        %1227 = vmatpush2.xpose.msra.mxu0 0.0
        %1228 = vmatprep.subr.mxu0 0.0
        %1229 = vmatpush2.xpose.msra.mxu0 0.0
        %1230 = vmatprep.subr.mxu0 0.0
        %1231 = vmatpush2.xpose.msra.mxu0 0.0
        %1232 = vmatprep.subr.mxu0 0.0
        %1233 = vmatpush2.xpose.msra.mxu0 0.0
        %1234 = vmatprep.mubr.f32.mxu0 0.0
        %1235 = vmatmul.mubr.f32.gmra.mxu0 %v1166
        %v1236 = vpop.f32.mrf.mxu0
        %v1237 = vadd.f32 0.0, %v1236
        %v1238 = vpop.f32.mrf.mxu0
        %1239 = vdwg.mxu0
        %v1240 = vmul.f32 %v1160, 0.35355338
        %v1241 = vmul.f32 %v1237, 0.35355338
        %v1242 = vsel %vm1083, -1e+09, %v1240
        %v1243 = vsel %vm1084, -1e+09, %v1241
        %v1244 = vsel %vm1088, %v1242, -inf
        %1245 = vmax.xlane.f32.xlu0 %v1244
        %v1246 = vpop.xlane.xlu0 %1245
        %v1247 = vsel %vm1088, %v1243, -inf
        %1248 = vmax.xlane.f32.xlu0 %v1247
        %v1249 = vpop.xlane.xlu0 %1248
        %v1250 = vsub.f32 %v1242, %v1246
        %v1251 = vsub.f32 %v1243, %v1249
        %v1252 = vmul.f32 %v1250, 1.442695
        %v1253 = vpow.pop %v1252
        %v1254 = vmul.f32 %v1251, 1.442695
        %v1255 = vpow.pop %v1254
        %v1256 = vsel %vm1088, %v1253, 0.0
        %1257 = vadd.xlane.f32.xlu0 %v1256
        %v1258 = vpop.xlane.xlu0 %1257
        %v1259 = vsel %vm1088, %v1255, 0.0
        %1260 = vadd.xlane.f32.xlu0 %v1259
        %v1261 = vpop.xlane.xlu0 %1260
        %v1262 = vrcp.pop %v1258
        %v1263 = vmul.f32 %v1253, %v1262
        %v1264 = vrcp.pop %v1261
        %v1265 = vmul.f32 %v1255, %v1264
        %1266 = vrot.lane.b32.xlu0 %v1052, 64
        %v1267 = vpop.permute.xlu0 %1266
        %v1270 = vsel %vm1088, %v1263, 0
        %1272 = vmatprep.subr.mxu0 0.0
        %1273 = vmatpush1.msra.mxu0 0.0
        %1274 = vmatprep.subr.mxu0 0.0
        %1275 = vmatpush1.msra.mxu0 0.0
        %1276 = vmatprep.subr.mxu0 0.0
        %1277 = vmatpush1.msra.mxu0 0.0
        %1278 = vmatprep.subr.mxu0 0.0
        %1279 = vmatpush1.msra.mxu0 0.0
        %1280 = vmatprep.subr.mxu0 0.0
        %1281 = vmatpush1.msra.mxu0 0.0
        %1282 = vmatprep.subr.mxu0 0.0
        %1283 = vmatpush1.msra.mxu0 0.0
        %1284 = vmatprep.subr.mxu0 0.0
        %1285 = vmatpush1.msra.mxu0 0.0
        %1286 = vmatprep.subr.mxu0 0.0
        %1287 = vmatpush1.msra.mxu0 0.0
        %1288 = vmatprep.subr.mxu0 0.0
        %1289 = vmatpush1.msra.mxu0 0.0
        %1290 = vmatprep.subr.mxu0 0.0
        %1291 = vmatpush1.msra.mxu0 0.0
        %1292 = vmatprep.subr.mxu0 0.0
        %1293 = vmatpush1.msra.mxu0 0.0
        %1294 = vmatprep.subr.mxu0 0.0
        %1295 = vmatpush1.msra.mxu0 0.0
        %1296 = vmatprep.subr.mxu0 0.0
        %1297 = vmatpush1.msra.mxu0 0.0
        %1298 = vmatprep.subr.mxu0 0.0
        %1299 = vmatpush1.msra.mxu0 0.0
        %1300 = vmatprep.subr.mxu0 0.0
        %1301 = vmatpush1.msra.mxu0 0.0
        %1302 = vmatprep.subr.mxu0 0.0
        %1303 = vmatpush1.msra.mxu0 %v1267
        %1304 = vmatprep.subr.mxu0 0.0
        %1305 = vmatpush2.msra.mxu0 0.0
        %1306 = vmatprep.subr.mxu0 0.0
        %1307 = vmatpush2.msra.mxu0 0.0
        %1308 = vmatprep.subr.mxu0 0.0
        %1309 = vmatpush2.msra.mxu0 0.0
        %1310 = vmatprep.subr.mxu0 0.0
        %1311 = vmatpush2.msra.mxu0 0.0
        %1312 = vmatprep.subr.mxu0 0.0
        %1313 = vmatpush2.msra.mxu0 0.0
        %1314 = vmatprep.subr.mxu0 0.0
        %1315 = vmatpush2.msra.mxu0 0.0
        %1316 = vmatprep.subr.mxu0 0.0
        %1317 = vmatpush2.msra.mxu0 0.0
        %1318 = vmatprep.subr.mxu0 0.0
        %1319 = vmatpush2.msra.mxu0 0.0
        %1320 = vmatprep.subr.mxu0 0.0
        %1321 = vmatpush2.msra.mxu0 0.0
        %1322 = vmatprep.subr.mxu0 0.0
        %1323 = vmatpush2.msra.mxu0 0.0
        %1324 = vmatprep.subr.mxu0 0.0
        %1325 = vmatpush2.msra.mxu0 0.0
        %1326 = vmatprep.subr.mxu0 0.0
        %1327 = vmatpush2.msra.mxu0 0.0
        %1328 = vmatprep.subr.mxu0 0.0
        %1329 = vmatpush2.msra.mxu0 0.0
        %1330 = vmatprep.subr.mxu0 0.0
        %1331 = vmatpush2.msra.mxu0 0.0
        %1332 = vmatprep.subr.mxu0 0.0
        %1333 = vmatpush2.msra.mxu0 0.0
        %1334 = vmatprep.subr.mxu0 0.0
        %1335 = vmatpush2.msra.mxu0 0.0
        %1336 = vmatprep.mubr.f32.mxu0 0.0
        %1337 = vmatmul.mubr.f32.gmra.mxu0 %v1270
        %v1338 = vpop.f32.mrf.mxu0
        %v1339 = vadd.f32 0.0, %v1338
        %v1340 = vpop.f32.mrf.mxu0
        %1341 = vdwg.mxu0
        %1342 = vrot.lane.b32.xlu0 %v1057, 64
        %v1343 = vpop.permute.xlu0 %1342
        %v1346 = vsel %vm1088, %v1265, 0
        %1348 = vmatprep.subr.mxu0 0.0
        %1349 = vmatpush1.msra.mxu0 0.0
        %1350 = vmatprep.subr.mxu0 0.0
        %1351 = vmatpush1.msra.mxu0 0.0
        %1352 = vmatprep.subr.mxu0 0.0
        %1353 = vmatpush1.msra.mxu0 0.0
        %1354 = vmatprep.subr.mxu0 0.0
        %1355 = vmatpush1.msra.mxu0 0.0
        %1356 = vmatprep.subr.mxu0 0.0
        %1357 = vmatpush1.msra.mxu0 0.0
        %1358 = vmatprep.subr.mxu0 0.0
        %1359 = vmatpush1.msra.mxu0 0.0
        %1360 = vmatprep.subr.mxu0 0.0
        %1361 = vmatpush1.msra.mxu0 0.0
        %1362 = vmatprep.subr.mxu0 0.0
        %1363 = vmatpush1.msra.mxu0 0.0
        %1364 = vmatprep.subr.mxu0 0.0
        %1365 = vmatpush1.msra.mxu0 0.0
        %1366 = vmatprep.subr.mxu0 0.0
        %1367 = vmatpush1.msra.mxu0 0.0
        %1368 = vmatprep.subr.mxu0 0.0
        %1369 = vmatpush1.msra.mxu0 0.0
        %1370 = vmatprep.subr.mxu0 0.0
        %1371 = vmatpush1.msra.mxu0 0.0
        %1372 = vmatprep.subr.mxu0 0.0
        %1373 = vmatpush1.msra.mxu0 0.0
        %1374 = vmatprep.subr.mxu0 0.0
        %1375 = vmatpush1.msra.mxu0 0.0
        %1376 = vmatprep.subr.mxu0 0.0
        %1377 = vmatpush1.msra.mxu0 0.0
        %1378 = vmatprep.subr.mxu0 0.0
        %1379 = vmatpush1.msra.mxu0 %v1343
        %1380 = vmatprep.subr.mxu0 0.0
        %1381 = vmatpush2.msra.mxu0 0.0
        %1382 = vmatprep.subr.mxu0 0.0
        %1383 = vmatpush2.msra.mxu0 0.0
        %1384 = vmatprep.subr.mxu0 0.0
        %1385 = vmatpush2.msra.mxu0 0.0
        %1386 = vmatprep.subr.mxu0 0.0
        %1387 = vmatpush2.msra.mxu0 0.0
        %1388 = vmatprep.subr.mxu0 0.0
        %1389 = vmatpush2.msra.mxu0 0.0
        %1390 = vmatprep.subr.mxu0 0.0
        %1391 = vmatpush2.msra.mxu0 0.0
        %1392 = vmatprep.subr.mxu0 0.0
        %1393 = vmatpush2.msra.mxu0 0.0
        %1394 = vmatprep.subr.mxu0 0.0
        %1395 = vmatpush2.msra.mxu0 0.0
        %1396 = vmatprep.subr.mxu0 0.0
        %1397 = vmatpush2.msra.mxu0 0.0
        %1398 = vmatprep.subr.mxu0 0.0
        %1399 = vmatpush2.msra.mxu0 0.0
        %1400 = vmatprep.subr.mxu0 0.0
        %1401 = vmatpush2.msra.mxu0 0.0
        %1402 = vmatprep.subr.mxu0 0.0
        %1403 = vmatpush2.msra.mxu0 0.0
        %1404 = vmatprep.subr.mxu0 0.0
        %1405 = vmatpush2.msra.mxu0 0.0
        %1406 = vmatprep.subr.mxu0 0.0
        %1407 = vmatpush2.msra.mxu0 0.0
        %1408 = vmatprep.subr.mxu0 0.0
        %1409 = vmatpush2.msra.mxu0 0.0
        %1410 = vmatprep.subr.mxu0 0.0
        %1411 = vmatpush2.msra.mxu0 0.0
        %1412 = vmatprep.mubr.f32.mxu0 0.0
        %1413 = vmatmul.mubr.f32.gmra.mxu0 %v1346
        %v1414 = vpop.f32.mrf.mxu0
        %v1415 = vadd.f32 0.0, %v1414
        %v1416 = vpop.f32.mrf.mxu0
        %1417 = vdwg.mxu0
        %1418 = vrot.lane.b32.xlu0 %v1052, 120
        %v1419 = vpop.permute.xlu0 %1418
        %1420 = vrot.lane.b32.xlu0 %v1052, 88
        %v1421 = vpop.permute.xlu0 %1420
        %v1422 = vsel %vm1088, %v1419, 0
        %v1424 = vsel %vm1088, %v1421, 0
        %1426 = vmatprep.subr.mxu0 0.0
        %1427 = vmatpush1.xpose.msra.mxu0 0.0
        %1428 = vmatprep.subr.mxu0 0.0
        %1429 = vmatpush1.xpose.msra.mxu0 0.0
        %1430 = vmatprep.subr.mxu0 0.0
        %1431 = vmatpush1.xpose.msra.mxu0 0.0
        %1432 = vmatprep.subr.mxu0 0.0
        %1433 = vmatpush1.xpose.msra.mxu0 0.0
        %1434 = vmatprep.subr.mxu0 0.0
        %1435 = vmatpush1.xpose.msra.mxu0 0.0
        %1436 = vmatprep.subr.mxu0 0.0
        %1437 = vmatpush1.xpose.msra.mxu0 0.0
        %1438 = vmatprep.subr.mxu0 0.0
        %1439 = vmatpush1.xpose.msra.mxu0 0.0
        %1440 = vmatprep.subr.mxu0 0.0
        %1441 = vmatpush1.xpose.msra.mxu0 0.0
        %1442 = vmatprep.subr.mxu0 0.0
        %1443 = vmatpush1.xpose.msra.mxu0 0.0
        %1444 = vmatprep.subr.mxu0 0.0
        %1445 = vmatpush1.xpose.msra.mxu0 0.0
        %1446 = vmatprep.subr.mxu0 0.0
        %1447 = vmatpush1.xpose.msra.mxu0 0.0
        %1448 = vmatprep.subr.mxu0 0.0
        %1449 = vmatpush1.xpose.msra.mxu0 0.0
        %1450 = vmatprep.subr.mxu0 0.0
        %1451 = vmatpush1.xpose.msra.mxu0 0.0
        %1452 = vmatprep.subr.mxu0 0.0
        %1453 = vmatpush1.xpose.msra.mxu0 0.0
        %1454 = vmatprep.subr.mxu0 0.0
        %1455 = vmatpush1.xpose.msra.mxu0 0.0
        %1456 = vmatprep.subr.mxu0 0.0
        %1457 = vmatpush1.xpose.msra.mxu0 %v1424
        %1458 = vmatprep.subr.mxu0 0.0
        %1459 = vmatpush2.xpose.msra.mxu0 0.0
        %1460 = vmatprep.subr.mxu0 0.0
        %1461 = vmatpush2.xpose.msra.mxu0 0.0
        %1462 = vmatprep.subr.mxu0 0.0
        %1463 = vmatpush2.xpose.msra.mxu0 0.0
        %1464 = vmatprep.subr.mxu0 0.0
        %1465 = vmatpush2.xpose.msra.mxu0 0.0
        %1466 = vmatprep.subr.mxu0 0.0
        %1467 = vmatpush2.xpose.msra.mxu0 0.0
        %1468 = vmatprep.subr.mxu0 0.0
        %1469 = vmatpush2.xpose.msra.mxu0 0.0
        %1470 = vmatprep.subr.mxu0 0.0
        %1471 = vmatpush2.xpose.msra.mxu0 0.0
        %1472 = vmatprep.subr.mxu0 0.0
        %1473 = vmatpush2.xpose.msra.mxu0 0.0
        %1474 = vmatprep.subr.mxu0 0.0
        %1475 = vmatpush2.xpose.msra.mxu0 0.0
        %1476 = vmatprep.subr.mxu0 0.0
        %1477 = vmatpush2.xpose.msra.mxu0 0.0
        %1478 = vmatprep.subr.mxu0 0.0
        %1479 = vmatpush2.xpose.msra.mxu0 0.0
        %1480 = vmatprep.subr.mxu0 0.0
        %1481 = vmatpush2.xpose.msra.mxu0 0.0
        %1482 = vmatprep.subr.mxu0 0.0
        %1483 = vmatpush2.xpose.msra.mxu0 0.0
        %1484 = vmatprep.subr.mxu0 0.0
        %1485 = vmatpush2.xpose.msra.mxu0 0.0
        %1486 = vmatprep.subr.mxu0 0.0
        %1487 = vmatpush2.xpose.msra.mxu0 0.0
        %1488 = vmatprep.subr.mxu0 0.0
        %1489 = vmatpush2.xpose.msra.mxu0 0.0
        %1490 = vmatprep.mubr.f32.mxu0 0.0
        %1491 = vmatmul.mubr.f32.gmra.mxu0 %v1422
        %v1492 = vpop.f32.mrf.mxu0
        %v1493 = vadd.f32 0.0, %v1492
        %v1494 = vpop.f32.mrf.mxu0
        %1495 = vdwg.mxu0
        %1496 = vrot.lane.b32.xlu0 %v1057, 120
        %v1497 = vpop.permute.xlu0 %1496
        %1498 = vrot.lane.b32.xlu0 %v1057, 88
        %v1499 = vpop.permute.xlu0 %1498
        %v1500 = vsel %vm1088, %v1497, 0
        %v1502 = vsel %vm1088, %v1499, 0
        %1504 = vmatprep.subr.mxu0 0.0
        %1505 = vmatpush1.xpose.msra.mxu0 0.0
        %1506 = vmatprep.subr.mxu0 0.0
        %1507 = vmatpush1.xpose.msra.mxu0 0.0
        %1508 = vmatprep.subr.mxu0 0.0
        %1509 = vmatpush1.xpose.msra.mxu0 0.0
        %1510 = vmatprep.subr.mxu0 0.0
        %1511 = vmatpush1.xpose.msra.mxu0 0.0
        %1512 = vmatprep.subr.mxu0 0.0
        %1513 = vmatpush1.xpose.msra.mxu0 0.0
        %1514 = vmatprep.subr.mxu0 0.0
        %1515 = vmatpush1.xpose.msra.mxu0 0.0
        %1516 = vmatprep.subr.mxu0 0.0
        %1517 = vmatpush1.xpose.msra.mxu0 0.0
        %1518 = vmatprep.subr.mxu0 0.0
        %1519 = vmatpush1.xpose.msra.mxu0 0.0
        %1520 = vmatprep.subr.mxu0 0.0
        %1521 = vmatpush1.xpose.msra.mxu0 0.0
        %1522 = vmatprep.subr.mxu0 0.0
        %1523 = vmatpush1.xpose.msra.mxu0 0.0
        %1524 = vmatprep.subr.mxu0 0.0
        %1525 = vmatpush1.xpose.msra.mxu0 0.0
        %1526 = vmatprep.subr.mxu0 0.0
        %1527 = vmatpush1.xpose.msra.mxu0 0.0
        %1528 = vmatprep.subr.mxu0 0.0
        %1529 = vmatpush1.xpose.msra.mxu0 0.0
        %1530 = vmatprep.subr.mxu0 0.0
        %1531 = vmatpush1.xpose.msra.mxu0 0.0
        %1532 = vmatprep.subr.mxu0 0.0
        %1533 = vmatpush1.xpose.msra.mxu0 0.0
        %1534 = vmatprep.subr.mxu0 0.0
        %1535 = vmatpush1.xpose.msra.mxu0 %v1502
        %1536 = vmatprep.subr.mxu0 0.0
        %1537 = vmatpush2.xpose.msra.mxu0 0.0
        %1538 = vmatprep.subr.mxu0 0.0
        %1539 = vmatpush2.xpose.msra.mxu0 0.0
        %1540 = vmatprep.subr.mxu0 0.0
        %1541 = vmatpush2.xpose.msra.mxu0 0.0
        %1542 = vmatprep.subr.mxu0 0.0
        %1543 = vmatpush2.xpose.msra.mxu0 0.0
        %1544 = vmatprep.subr.mxu0 0.0
        %1545 = vmatpush2.xpose.msra.mxu0 0.0
        %1546 = vmatprep.subr.mxu0 0.0
        %1547 = vmatpush2.xpose.msra.mxu0 0.0
        %1548 = vmatprep.subr.mxu0 0.0
        %1549 = vmatpush2.xpose.msra.mxu0 0.0
        %1550 = vmatprep.subr.mxu0 0.0
        %1551 = vmatpush2.xpose.msra.mxu0 0.0
        %1552 = vmatprep.subr.mxu0 0.0
        %1553 = vmatpush2.xpose.msra.mxu0 0.0
        %1554 = vmatprep.subr.mxu0 0.0
        %1555 = vmatpush2.xpose.msra.mxu0 0.0
        %1556 = vmatprep.subr.mxu0 0.0
        %1557 = vmatpush2.xpose.msra.mxu0 0.0
        %1558 = vmatprep.subr.mxu0 0.0
        %1559 = vmatpush2.xpose.msra.mxu0 0.0
        %1560 = vmatprep.subr.mxu0 0.0
        %1561 = vmatpush2.xpose.msra.mxu0 0.0
        %1562 = vmatprep.subr.mxu0 0.0
        %1563 = vmatpush2.xpose.msra.mxu0 0.0
        %1564 = vmatprep.subr.mxu0 0.0
        %1565 = vmatpush2.xpose.msra.mxu0 0.0
        %1566 = vmatprep.subr.mxu0 0.0
        %1567 = vmatpush2.xpose.msra.mxu0 0.0
        %1568 = vmatprep.mubr.f32.mxu0 0.0
        %1569 = vmatmul.mubr.f32.gmra.mxu0 %v1500
        %v1570 = vpop.f32.mrf.mxu0
        %v1571 = vadd.f32 0.0, %v1570
        %v1572 = vpop.f32.mrf.mxu0
        %1573 = vdwg.mxu0
        %v1574 = vmul.f32 %v1493, 0.35355338
        %v1575 = vmul.f32 %v1571, 0.35355338
        %v1576 = vsel %vm1083, -1e+09, %v1574
        %v1577 = vsel %vm1084, -1e+09, %v1575
        %v1578 = vsel %vm1088, %v1576, -inf
        %1579 = vmax.xlane.f32.xlu0 %v1578
        %v1580 = vpop.xlane.xlu0 %1579
        %v1581 = vsel %vm1088, %v1577, -inf
        %1582 = vmax.xlane.f32.xlu0 %v1581
        %v1583 = vpop.xlane.xlu0 %1582
        %v1584 = vsub.f32 %v1576, %v1580
        %v1585 = vsub.f32 %v1577, %v1583
        %v1586 = vmul.f32 %v1584, 1.442695
        %v1587 = vpow.pop %v1586
        %v1588 = vmul.f32 %v1585, 1.442695
        %v1589 = vpow.pop %v1588
        %v1590 = vsel %vm1088, %v1587, 0.0
        %1591 = vadd.xlane.f32.xlu0 %v1590
        %v1592 = vpop.xlane.xlu0 %1591
        %v1593 = vsel %vm1088, %v1589, 0.0
        %1594 = vadd.xlane.f32.xlu0 %v1593
        %v1595 = vpop.xlane.xlu0 %1594
        %v1596 = vrcp.pop %v1592
        %v1597 = vmul.f32 %v1587, %v1596
        %v1598 = vrcp.pop %v1595
        %v1599 = vmul.f32 %v1589, %v1598
        %1600 = vrot.lane.b32.xlu0 %v1052, 56
        %v1601 = vpop.permute.xlu0 %1600
        %v1604 = vsel %vm1088, %v1597, 0
        %1606 = vmatprep.subr.mxu0 0.0
        %1607 = vmatpush1.msra.mxu0 0.0
        %1608 = vmatprep.subr.mxu0 0.0
        %1609 = vmatpush1.msra.mxu0 0.0
        %1610 = vmatprep.subr.mxu0 0.0
        %1611 = vmatpush1.msra.mxu0 0.0
        %1612 = vmatprep.subr.mxu0 0.0
        %1613 = vmatpush1.msra.mxu0 0.0
        %1614 = vmatprep.subr.mxu0 0.0
        %1615 = vmatpush1.msra.mxu0 0.0
        %1616 = vmatprep.subr.mxu0 0.0
        %1617 = vmatpush1.msra.mxu0 0.0
        %1618 = vmatprep.subr.mxu0 0.0
        %1619 = vmatpush1.msra.mxu0 0.0
        %1620 = vmatprep.subr.mxu0 0.0
        %1621 = vmatpush1.msra.mxu0 0.0
        %1622 = vmatprep.subr.mxu0 0.0
        %1623 = vmatpush1.msra.mxu0 0.0
        %1624 = vmatprep.subr.mxu0 0.0
        %1625 = vmatpush1.msra.mxu0 0.0
        %1626 = vmatprep.subr.mxu0 0.0
        %1627 = vmatpush1.msra.mxu0 0.0
        %1628 = vmatprep.subr.mxu0 0.0
        %1629 = vmatpush1.msra.mxu0 0.0
        %1630 = vmatprep.subr.mxu0 0.0
        %1631 = vmatpush1.msra.mxu0 0.0
        %1632 = vmatprep.subr.mxu0 0.0
        %1633 = vmatpush1.msra.mxu0 0.0
        %1634 = vmatprep.subr.mxu0 0.0
        %1635 = vmatpush1.msra.mxu0 0.0
        %1636 = vmatprep.subr.mxu0 0.0
        %1637 = vmatpush1.msra.mxu0 %v1601
        %1638 = vmatprep.subr.mxu0 0.0
        %1639 = vmatpush2.msra.mxu0 0.0
        %1640 = vmatprep.subr.mxu0 0.0
        %1641 = vmatpush2.msra.mxu0 0.0
        %1642 = vmatprep.subr.mxu0 0.0
        %1643 = vmatpush2.msra.mxu0 0.0
        %1644 = vmatprep.subr.mxu0 0.0
        %1645 = vmatpush2.msra.mxu0 0.0
        %1646 = vmatprep.subr.mxu0 0.0
        %1647 = vmatpush2.msra.mxu0 0.0
        %1648 = vmatprep.subr.mxu0 0.0
        %1649 = vmatpush2.msra.mxu0 0.0
        %1650 = vmatprep.subr.mxu0 0.0
        %1651 = vmatpush2.msra.mxu0 0.0
        %1652 = vmatprep.subr.mxu0 0.0
        %1653 = vmatpush2.msra.mxu0 0.0
        %1654 = vmatprep.subr.mxu0 0.0
        %1655 = vmatpush2.msra.mxu0 0.0
        %1656 = vmatprep.subr.mxu0 0.0
        %1657 = vmatpush2.msra.mxu0 0.0
        %1658 = vmatprep.subr.mxu0 0.0
        %1659 = vmatpush2.msra.mxu0 0.0
        %1660 = vmatprep.subr.mxu0 0.0
        %1661 = vmatpush2.msra.mxu0 0.0
        %1662 = vmatprep.subr.mxu0 0.0
        %1663 = vmatpush2.msra.mxu0 0.0
        %1664 = vmatprep.subr.mxu0 0.0
        %1665 = vmatpush2.msra.mxu0 0.0
        %1666 = vmatprep.subr.mxu0 0.0
        %1667 = vmatpush2.msra.mxu0 0.0
        %1668 = vmatprep.subr.mxu0 0.0
        %1669 = vmatpush2.msra.mxu0 0.0
        %1670 = vmatprep.mubr.f32.mxu0 0.0
        %1671 = vmatmul.mubr.f32.gmra.mxu0 %v1604
        %v1672 = vpop.f32.mrf.mxu0
        %v1673 = vadd.f32 0.0, %v1672
        %v1674 = vpop.f32.mrf.mxu0
        %1675 = vdwg.mxu0
        %1676 = vrot.lane.b32.xlu0 %v1057, 56
        %v1677 = vpop.permute.xlu0 %1676
        %v1680 = vsel %vm1088, %v1599, 0
        %1682 = vmatprep.subr.mxu0 0.0
        %1683 = vmatpush1.msra.mxu0 0.0
        %1684 = vmatprep.subr.mxu0 0.0
        %1685 = vmatpush1.msra.mxu0 0.0
        %1686 = vmatprep.subr.mxu0 0.0
        %1687 = vmatpush1.msra.mxu0 0.0
        %1688 = vmatprep.subr.mxu0 0.0
        %1689 = vmatpush1.msra.mxu0 0.0
        %1690 = vmatprep.subr.mxu0 0.0
        %1691 = vmatpush1.msra.mxu0 0.0
        %1692 = vmatprep.subr.mxu0 0.0
        %1693 = vmatpush1.msra.mxu0 0.0
        %1694 = vmatprep.subr.mxu0 0.0
        %1695 = vmatpush1.msra.mxu0 0.0
        %1696 = vmatprep.subr.mxu0 0.0
        %1697 = vmatpush1.msra.mxu0 0.0
        %1698 = vmatprep.subr.mxu0 0.0
        %1699 = vmatpush1.msra.mxu0 0.0
        %1700 = vmatprep.subr.mxu0 0.0
        %1701 = vmatpush1.msra.mxu0 0.0
        %1702 = vmatprep.subr.mxu0 0.0
        %1703 = vmatpush1.msra.mxu0 0.0
        %1704 = vmatprep.subr.mxu0 0.0
        %1705 = vmatpush1.msra.mxu0 0.0
        %1706 = vmatprep.subr.mxu0 0.0
        %1707 = vmatpush1.msra.mxu0 0.0
        %1708 = vmatprep.subr.mxu0 0.0
        %1709 = vmatpush1.msra.mxu0 0.0
        %1710 = vmatprep.subr.mxu0 0.0
        %1711 = vmatpush1.msra.mxu0 0.0
        %1712 = vmatprep.subr.mxu0 0.0
        %1713 = vmatpush1.msra.mxu0 %v1677
        %1714 = vmatprep.subr.mxu0 0.0
        %1715 = vmatpush2.msra.mxu0 0.0
        %1716 = vmatprep.subr.mxu0 0.0
        %1717 = vmatpush2.msra.mxu0 0.0
        %1718 = vmatprep.subr.mxu0 0.0
        %1719 = vmatpush2.msra.mxu0 0.0
        %1720 = vmatprep.subr.mxu0 0.0
        %1721 = vmatpush2.msra.mxu0 0.0
        %1722 = vmatprep.subr.mxu0 0.0
        %1723 = vmatpush2.msra.mxu0 0.0
        %1724 = vmatprep.subr.mxu0 0.0
        %1725 = vmatpush2.msra.mxu0 0.0
        %1726 = vmatprep.subr.mxu0 0.0
        %1727 = vmatpush2.msra.mxu0 0.0
        %1728 = vmatprep.subr.mxu0 0.0
        %1729 = vmatpush2.msra.mxu0 0.0
        %1730 = vmatprep.subr.mxu0 0.0
        %1731 = vmatpush2.msra.mxu0 0.0
        %1732 = vmatprep.subr.mxu0 0.0
        %1733 = vmatpush2.msra.mxu0 0.0
        %1734 = vmatprep.subr.mxu0 0.0
        %1735 = vmatpush2.msra.mxu0 0.0
        %1736 = vmatprep.subr.mxu0 0.0
        %1737 = vmatpush2.msra.mxu0 0.0
        %1738 = vmatprep.subr.mxu0 0.0
        %1739 = vmatpush2.msra.mxu0 0.0
        %1740 = vmatprep.subr.mxu0 0.0
        %1741 = vmatpush2.msra.mxu0 0.0
        %1742 = vmatprep.subr.mxu0 0.0
        %1743 = vmatpush2.msra.mxu0 0.0
        %1744 = vmatprep.subr.mxu0 0.0
        %1745 = vmatpush2.msra.mxu0 0.0
        %1746 = vmatprep.mubr.f32.mxu0 0.0
        %1747 = vmatmul.mubr.f32.gmra.mxu0 %v1680
        %v1748 = vpop.f32.mrf.mxu0
        %v1749 = vadd.f32 0.0, %v1748
        %v1750 = vpop.f32.mrf.mxu0
        %1751 = vdwg.mxu0
        %1752 = vrot.lane.b32.xlu0 %v1052, 112
        %v1753 = vpop.permute.xlu0 %1752
        %1754 = vrot.lane.b32.xlu0 %v1052, 80
        %v1755 = vpop.permute.xlu0 %1754
        %v1756 = vsel %vm1088, %v1753, 0
        %v1758 = vsel %vm1088, %v1755, 0
        %1760 = vmatprep.subr.mxu0 0.0
        %1761 = vmatpush1.xpose.msra.mxu0 0.0
        %1762 = vmatprep.subr.mxu0 0.0
        %1763 = vmatpush1.xpose.msra.mxu0 0.0
        %1764 = vmatprep.subr.mxu0 0.0
        %1765 = vmatpush1.xpose.msra.mxu0 0.0
        %1766 = vmatprep.subr.mxu0 0.0
        %1767 = vmatpush1.xpose.msra.mxu0 0.0
        %1768 = vmatprep.subr.mxu0 0.0
        %1769 = vmatpush1.xpose.msra.mxu0 0.0
        %1770 = vmatprep.subr.mxu0 0.0
        %1771 = vmatpush1.xpose.msra.mxu0 0.0
        %1772 = vmatprep.subr.mxu0 0.0
        %1773 = vmatpush1.xpose.msra.mxu0 0.0
        %1774 = vmatprep.subr.mxu0 0.0
        %1775 = vmatpush1.xpose.msra.mxu0 0.0
        %1776 = vmatprep.subr.mxu0 0.0
        %1777 = vmatpush1.xpose.msra.mxu0 0.0
        %1778 = vmatprep.subr.mxu0 0.0
        %1779 = vmatpush1.xpose.msra.mxu0 0.0
        %1780 = vmatprep.subr.mxu0 0.0
        %1781 = vmatpush1.xpose.msra.mxu0 0.0
        %1782 = vmatprep.subr.mxu0 0.0
        %1783 = vmatpush1.xpose.msra.mxu0 0.0
        %1784 = vmatprep.subr.mxu0 0.0
        %1785 = vmatpush1.xpose.msra.mxu0 0.0
        %1786 = vmatprep.subr.mxu0 0.0
        %1787 = vmatpush1.xpose.msra.mxu0 0.0
        %1788 = vmatprep.subr.mxu0 0.0
        %1789 = vmatpush1.xpose.msra.mxu0 0.0
        %1790 = vmatprep.subr.mxu0 0.0
        %1791 = vmatpush1.xpose.msra.mxu0 %v1758
        %1792 = vmatprep.subr.mxu0 0.0
        %1793 = vmatpush2.xpose.msra.mxu0 0.0
        %1794 = vmatprep.subr.mxu0 0.0
        %1795 = vmatpush2.xpose.msra.mxu0 0.0
        %1796 = vmatprep.subr.mxu0 0.0
        %1797 = vmatpush2.xpose.msra.mxu0 0.0
        %1798 = vmatprep.subr.mxu0 0.0
        %1799 = vmatpush2.xpose.msra.mxu0 0.0
        %1800 = vmatprep.subr.mxu0 0.0
        %1801 = vmatpush2.xpose.msra.mxu0 0.0
        %1802 = vmatprep.subr.mxu0 0.0
        %1803 = vmatpush2.xpose.msra.mxu0 0.0
        %1804 = vmatprep.subr.mxu0 0.0
        %1805 = vmatpush2.xpose.msra.mxu0 0.0
        %1806 = vmatprep.subr.mxu0 0.0
        %1807 = vmatpush2.xpose.msra.mxu0 0.0
        %1808 = vmatprep.subr.mxu0 0.0
        %1809 = vmatpush2.xpose.msra.mxu0 0.0
        %1810 = vmatprep.subr.mxu0 0.0
        %1811 = vmatpush2.xpose.msra.mxu0 0.0
        %1812 = vmatprep.subr.mxu0 0.0
        %1813 = vmatpush2.xpose.msra.mxu0 0.0
        %1814 = vmatprep.subr.mxu0 0.0
        %1815 = vmatpush2.xpose.msra.mxu0 0.0
        %1816 = vmatprep.subr.mxu0 0.0
        %1817 = vmatpush2.xpose.msra.mxu0 0.0
        %1818 = vmatprep.subr.mxu0 0.0
        %1819 = vmatpush2.xpose.msra.mxu0 0.0
        %1820 = vmatprep.subr.mxu0 0.0
        %1821 = vmatpush2.xpose.msra.mxu0 0.0
        %1822 = vmatprep.subr.mxu0 0.0
        %1823 = vmatpush2.xpose.msra.mxu0 0.0
        %1824 = vmatprep.mubr.f32.mxu0 0.0
        %1825 = vmatmul.mubr.f32.gmra.mxu0 %v1756
        %v1826 = vpop.f32.mrf.mxu0
        %v1827 = vadd.f32 0.0, %v1826
        %v1828 = vpop.f32.mrf.mxu0
        %1829 = vdwg.mxu0
        %1830 = vrot.lane.b32.xlu0 %v1057, 112
        %v1831 = vpop.permute.xlu0 %1830
        %1832 = vrot.lane.b32.xlu0 %v1057, 80
        %v1833 = vpop.permute.xlu0 %1832
        %v1834 = vsel %vm1088, %v1831, 0
        %v1836 = vsel %vm1088, %v1833, 0
        %1838 = vmatprep.subr.mxu0 0.0
        %1839 = vmatpush1.xpose.msra.mxu0 0.0
        %1840 = vmatprep.subr.mxu0 0.0
        %1841 = vmatpush1.xpose.msra.mxu0 0.0
        %1842 = vmatprep.subr.mxu0 0.0
        %1843 = vmatpush1.xpose.msra.mxu0 0.0
        %1844 = vmatprep.subr.mxu0 0.0
        %1845 = vmatpush1.xpose.msra.mxu0 0.0
        %1846 = vmatprep.subr.mxu0 0.0
        %1847 = vmatpush1.xpose.msra.mxu0 0.0
        %1848 = vmatprep.subr.mxu0 0.0
        %1849 = vmatpush1.xpose.msra.mxu0 0.0
        %1850 = vmatprep.subr.mxu0 0.0
        %1851 = vmatpush1.xpose.msra.mxu0 0.0
        %1852 = vmatprep.subr.mxu0 0.0
        %1853 = vmatpush1.xpose.msra.mxu0 0.0
        %1854 = vmatprep.subr.mxu0 0.0
        %1855 = vmatpush1.xpose.msra.mxu0 0.0
        %1856 = vmatprep.subr.mxu0 0.0
        %1857 = vmatpush1.xpose.msra.mxu0 0.0
        %1858 = vmatprep.subr.mxu0 0.0
        %1859 = vmatpush1.xpose.msra.mxu0 0.0
        %1860 = vmatprep.subr.mxu0 0.0
        %1861 = vmatpush1.xpose.msra.mxu0 0.0
        %1862 = vmatprep.subr.mxu0 0.0
        %1863 = vmatpush1.xpose.msra.mxu0 0.0
        %1864 = vmatprep.subr.mxu0 0.0
        %1865 = vmatpush1.xpose.msra.mxu0 0.0
        %1866 = vmatprep.subr.mxu0 0.0
        %1867 = vmatpush1.xpose.msra.mxu0 0.0
        %1868 = vmatprep.subr.mxu0 0.0
        %1869 = vmatpush1.xpose.msra.mxu0 %v1836
        %1870 = vmatprep.subr.mxu0 0.0
        %1871 = vmatpush2.xpose.msra.mxu0 0.0
        %1872 = vmatprep.subr.mxu0 0.0
        %1873 = vmatpush2.xpose.msra.mxu0 0.0
        %1874 = vmatprep.subr.mxu0 0.0
        %1875 = vmatpush2.xpose.msra.mxu0 0.0
        %1876 = vmatprep.subr.mxu0 0.0
        %1877 = vmatpush2.xpose.msra.mxu0 0.0
        %1878 = vmatprep.subr.mxu0 0.0
        %1879 = vmatpush2.xpose.msra.mxu0 0.0
        %1880 = vmatprep.subr.mxu0 0.0
        %1881 = vmatpush2.xpose.msra.mxu0 0.0
        %1882 = vmatprep.subr.mxu0 0.0
        %1883 = vmatpush2.xpose.msra.mxu0 0.0
        %1884 = vmatprep.subr.mxu0 0.0
        %1885 = vmatpush2.xpose.msra.mxu0 0.0
        %1886 = vmatprep.subr.mxu0 0.0
        %1887 = vmatpush2.xpose.msra.mxu0 0.0
        %1888 = vmatprep.subr.mxu0 0.0
        %1889 = vmatpush2.xpose.msra.mxu0 0.0
        %1890 = vmatprep.subr.mxu0 0.0
        %1891 = vmatpush2.xpose.msra.mxu0 0.0
        %1892 = vmatprep.subr.mxu0 0.0
        %1893 = vmatpush2.xpose.msra.mxu0 0.0
        %1894 = vmatprep.subr.mxu0 0.0
        %1895 = vmatpush2.xpose.msra.mxu0 0.0
        %1896 = vmatprep.subr.mxu0 0.0
        %1897 = vmatpush2.xpose.msra.mxu0 0.0
        %1898 = vmatprep.subr.mxu0 0.0
        %1899 = vmatpush2.xpose.msra.mxu0 0.0
        %1900 = vmatprep.subr.mxu0 0.0
        %1901 = vmatpush2.xpose.msra.mxu0 0.0
        %1902 = vmatprep.mubr.f32.mxu0 0.0
        %1903 = vmatmul.mubr.f32.gmra.mxu0 %v1834
        %v1904 = vpop.f32.mrf.mxu0
        %v1905 = vadd.f32 0.0, %v1904
        %v1906 = vpop.f32.mrf.mxu0
        %1907 = vdwg.mxu0
        %v1908 = vmul.f32 %v1827, 0.35355338
        %v1909 = vmul.f32 %v1905, 0.35355338
        %v1910 = vsel %vm1083, -1e+09, %v1908
        %v1911 = vsel %vm1084, -1e+09, %v1909
        %v1912 = vsel %vm1088, %v1910, -inf
        %1913 = vmax.xlane.f32.xlu0 %v1912
        %v1914 = vpop.xlane.xlu0 %1913
        %v1915 = vsel %vm1088, %v1911, -inf
        %1916 = vmax.xlane.f32.xlu0 %v1915
        %v1917 = vpop.xlane.xlu0 %1916
        %v1918 = vsub.f32 %v1910, %v1914
        %v1919 = vsub.f32 %v1911, %v1917
        %v1920 = vmul.f32 %v1918, 1.442695
        %v1921 = vpow.pop %v1920
        %v1922 = vmul.f32 %v1919, 1.442695
        %v1923 = vpow.pop %v1922
        %v1924 = vsel %vm1088, %v1921, 0.0
        %1925 = vadd.xlane.f32.xlu0 %v1924
        %v1926 = vpop.xlane.xlu0 %1925
        %v1927 = vsel %vm1088, %v1923, 0.0
        %1928 = vadd.xlane.f32.xlu0 %v1927
        %v1929 = vpop.xlane.xlu0 %1928
        %v1930 = vrcp.pop %v1926
        %v1931 = vmul.f32 %v1921, %v1930
        %v1932 = vrcp.pop %v1929
        %v1933 = vmul.f32 %v1923, %v1932
        %1934 = vrot.lane.b32.xlu0 %v1052, 48
        %v1935 = vpop.permute.xlu0 %1934
        %v1938 = vsel %vm1088, %v1931, 0
        %1940 = vmatprep.subr.mxu0 0.0
        %1941 = vmatpush1.msra.mxu0 0.0
        %1942 = vmatprep.subr.mxu0 0.0
        %1943 = vmatpush1.msra.mxu0 0.0
        %1944 = vmatprep.subr.mxu0 0.0
        %1945 = vmatpush1.msra.mxu0 0.0
        %1946 = vmatprep.subr.mxu0 0.0
        %1947 = vmatpush1.msra.mxu0 0.0
        %1948 = vmatprep.subr.mxu0 0.0
        %1949 = vmatpush1.msra.mxu0 0.0
        %1950 = vmatprep.subr.mxu0 0.0
        %1951 = vmatpush1.msra.mxu0 0.0
        %1952 = vmatprep.subr.mxu0 0.0
        %1953 = vmatpush1.msra.mxu0 0.0
        %1954 = vmatprep.subr.mxu0 0.0
        %1955 = vmatpush1.msra.mxu0 0.0
        %1956 = vmatprep.subr.mxu0 0.0
        %1957 = vmatpush1.msra.mxu0 0.0
        %1958 = vmatprep.subr.mxu0 0.0
        %1959 = vmatpush1.msra.mxu0 0.0
        %1960 = vmatprep.subr.mxu0 0.0
        %1961 = vmatpush1.msra.mxu0 0.0
        %1962 = vmatprep.subr.mxu0 0.0
        %1963 = vmatpush1.msra.mxu0 0.0
        %1964 = vmatprep.subr.mxu0 0.0
        %1965 = vmatpush1.msra.mxu0 0.0
        %1966 = vmatprep.subr.mxu0 0.0
        %1967 = vmatpush1.msra.mxu0 0.0
        %1968 = vmatprep.subr.mxu0 0.0
        %1969 = vmatpush1.msra.mxu0 0.0
        %1970 = vmatprep.subr.mxu0 0.0
        %1971 = vmatpush1.msra.mxu0 %v1935
        %1972 = vmatprep.subr.mxu0 0.0
        %1973 = vmatpush2.msra.mxu0 0.0
        %1974 = vmatprep.subr.mxu0 0.0
        %1975 = vmatpush2.msra.mxu0 0.0
        %1976 = vmatprep.subr.mxu0 0.0
        %1977 = vmatpush2.msra.mxu0 0.0
        %1978 = vmatprep.subr.mxu0 0.0
        %1979 = vmatpush2.msra.mxu0 0.0
        %1980 = vmatprep.subr.mxu0 0.0
        %1981 = vmatpush2.msra.mxu0 0.0
        %1982 = vmatprep.subr.mxu0 0.0
        %1983 = vmatpush2.msra.mxu0 0.0
        %1984 = vmatprep.subr.mxu0 0.0
        %1985 = vmatpush2.msra.mxu0 0.0
        %1986 = vmatprep.subr.mxu0 0.0
        %1987 = vmatpush2.msra.mxu0 0.0
        %1988 = vmatprep.subr.mxu0 0.0
        %1989 = vmatpush2.msra.mxu0 0.0
        %1990 = vmatprep.subr.mxu0 0.0
        %1991 = vmatpush2.msra.mxu0 0.0
        %1992 = vmatprep.subr.mxu0 0.0
        %1993 = vmatpush2.msra.mxu0 0.0
        %1994 = vmatprep.subr.mxu0 0.0
        %1995 = vmatpush2.msra.mxu0 0.0
        %1996 = vmatprep.subr.mxu0 0.0
        %1997 = vmatpush2.msra.mxu0 0.0
        %1998 = vmatprep.subr.mxu0 0.0
        %1999 = vmatpush2.msra.mxu0 0.0
        %2000 = vmatprep.subr.mxu0 0.0
        %2001 = vmatpush2.msra.mxu0 0.0
        %2002 = vmatprep.subr.mxu0 0.0
        %2003 = vmatpush2.msra.mxu0 0.0
        %2004 = vmatprep.mubr.f32.mxu0 0.0
        %2005 = vmatmul.mubr.f32.gmra.mxu0 %v1938
        %v2006 = vpop.f32.mrf.mxu0
        %v2007 = vadd.f32 0.0, %v2006
        %v2008 = vpop.f32.mrf.mxu0
        %2009 = vdwg.mxu0
        %2010 = vrot.lane.b32.xlu0 %v1057, 48
        %v2011 = vpop.permute.xlu0 %2010
        %v2014 = vsel %vm1088, %v1933, 0
        %2016 = vmatprep.subr.mxu0 0.0
        %2017 = vmatpush1.msra.mxu0 0.0
        %2018 = vmatprep.subr.mxu0 0.0
        %2019 = vmatpush1.msra.mxu0 0.0
        %2020 = vmatprep.subr.mxu0 0.0
        %2021 = vmatpush1.msra.mxu0 0.0
        %2022 = vmatprep.subr.mxu0 0.0
        %2023 = vmatpush1.msra.mxu0 0.0
        %2024 = vmatprep.subr.mxu0 0.0
        %2025 = vmatpush1.msra.mxu0 0.0
        %2026 = vmatprep.subr.mxu0 0.0
        %2027 = vmatpush1.msra.mxu0 0.0
        %2028 = vmatprep.subr.mxu0 0.0
        %2029 = vmatpush1.msra.mxu0 0.0
        %2030 = vmatprep.subr.mxu0 0.0
        %2031 = vmatpush1.msra.mxu0 0.0
        %2032 = vmatprep.subr.mxu0 0.0
        %2033 = vmatpush1.msra.mxu0 0.0
        %2034 = vmatprep.subr.mxu0 0.0
        %2035 = vmatpush1.msra.mxu0 0.0
        %2036 = vmatprep.subr.mxu0 0.0
        %2037 = vmatpush1.msra.mxu0 0.0
        %2038 = vmatprep.subr.mxu0 0.0
        %2039 = vmatpush1.msra.mxu0 0.0
        %2040 = vmatprep.subr.mxu0 0.0
        %2041 = vmatpush1.msra.mxu0 0.0
        %2042 = vmatprep.subr.mxu0 0.0
        %2043 = vmatpush1.msra.mxu0 0.0
        %2044 = vmatprep.subr.mxu0 0.0
        %2045 = vmatpush1.msra.mxu0 0.0
        %2046 = vmatprep.subr.mxu0 0.0
        %2047 = vmatpush1.msra.mxu0 %v2011
        %2048 = vmatprep.subr.mxu0 0.0
        %2049 = vmatpush2.msra.mxu0 0.0
        %2050 = vmatprep.subr.mxu0 0.0
        %2051 = vmatpush2.msra.mxu0 0.0
        %2052 = vmatprep.subr.mxu0 0.0
        %2053 = vmatpush2.msra.mxu0 0.0
        %2054 = vmatprep.subr.mxu0 0.0
        %2055 = vmatpush2.msra.mxu0 0.0
        %2056 = vmatprep.subr.mxu0 0.0
        %2057 = vmatpush2.msra.mxu0 0.0
        %2058 = vmatprep.subr.mxu0 0.0
        %2059 = vmatpush2.msra.mxu0 0.0
        %2060 = vmatprep.subr.mxu0 0.0
        %2061 = vmatpush2.msra.mxu0 0.0
        %2062 = vmatprep.subr.mxu0 0.0
        %2063 = vmatpush2.msra.mxu0 0.0
        %2064 = vmatprep.subr.mxu0 0.0
        %2065 = vmatpush2.msra.mxu0 0.0
        %2066 = vmatprep.subr.mxu0 0.0
        %2067 = vmatpush2.msra.mxu0 0.0
        %2068 = vmatprep.subr.mxu0 0.0
        %2069 = vmatpush2.msra.mxu0 0.0
        %2070 = vmatprep.subr.mxu0 0.0
        %2071 = vmatpush2.msra.mxu0 0.0
        %2072 = vmatprep.subr.mxu0 0.0
        %2073 = vmatpush2.msra.mxu0 0.0
        %2074 = vmatprep.subr.mxu0 0.0
        %2075 = vmatpush2.msra.mxu0 0.0
        %2076 = vmatprep.subr.mxu0 0.0
        %2077 = vmatpush2.msra.mxu0 0.0
        %2078 = vmatprep.subr.mxu0 0.0
        %2079 = vmatpush2.msra.mxu0 0.0
        %2080 = vmatprep.mubr.f32.mxu0 0.0
        %2081 = vmatmul.mubr.f32.gmra.mxu0 %v2014
        %v2082 = vpop.f32.mrf.mxu0
        %v2083 = vadd.f32 0.0, %v2082
        %v2084 = vpop.f32.mrf.mxu0
        %2085 = vdwg.mxu0
        %2086 = vrot.lane.b32.xlu0 %v1052, 104
        %v2087 = vpop.permute.xlu0 %2086
        %2088 = vrot.lane.b32.xlu0 %v1052, 72
        %v2089 = vpop.permute.xlu0 %2088
        %v2090 = vsel %vm1088, %v2087, 0
        %v2092 = vsel %vm1088, %v2089, 0
        %2094 = vmatprep.subr.mxu0 0.0
        %2095 = vmatpush1.xpose.msra.mxu0 0.0
        %2096 = vmatprep.subr.mxu0 0.0
        %2097 = vmatpush1.xpose.msra.mxu0 0.0
        %2098 = vmatprep.subr.mxu0 0.0
        %2099 = vmatpush1.xpose.msra.mxu0 0.0
        %2100 = vmatprep.subr.mxu0 0.0
        %2101 = vmatpush1.xpose.msra.mxu0 0.0
        %2102 = vmatprep.subr.mxu0 0.0
        %2103 = vmatpush1.xpose.msra.mxu0 0.0
        %2104 = vmatprep.subr.mxu0 0.0
        %2105 = vmatpush1.xpose.msra.mxu0 0.0
        %2106 = vmatprep.subr.mxu0 0.0
        %2107 = vmatpush1.xpose.msra.mxu0 0.0
        %2108 = vmatprep.subr.mxu0 0.0
        %2109 = vmatpush1.xpose.msra.mxu0 0.0
        %2110 = vmatprep.subr.mxu0 0.0
        %2111 = vmatpush1.xpose.msra.mxu0 0.0
        %2112 = vmatprep.subr.mxu0 0.0
        %2113 = vmatpush1.xpose.msra.mxu0 0.0
        %2114 = vmatprep.subr.mxu0 0.0
        %2115 = vmatpush1.xpose.msra.mxu0 0.0
        %2116 = vmatprep.subr.mxu0 0.0
        %2117 = vmatpush1.xpose.msra.mxu0 0.0
        %2118 = vmatprep.subr.mxu0 0.0
        %2119 = vmatpush1.xpose.msra.mxu0 0.0
        %2120 = vmatprep.subr.mxu0 0.0
        %2121 = vmatpush1.xpose.msra.mxu0 0.0
        %2122 = vmatprep.subr.mxu0 0.0
        %2123 = vmatpush1.xpose.msra.mxu0 0.0
        %2124 = vmatprep.subr.mxu0 0.0
        %2125 = vmatpush1.xpose.msra.mxu0 %v2092
        %2126 = vmatprep.subr.mxu0 0.0
        %2127 = vmatpush2.xpose.msra.mxu0 0.0
        %2128 = vmatprep.subr.mxu0 0.0
        %2129 = vmatpush2.xpose.msra.mxu0 0.0
        %2130 = vmatprep.subr.mxu0 0.0
        %2131 = vmatpush2.xpose.msra.mxu0 0.0
        %2132 = vmatprep.subr.mxu0 0.0
        %2133 = vmatpush2.xpose.msra.mxu0 0.0
        %2134 = vmatprep.subr.mxu0 0.0
        %2135 = vmatpush2.xpose.msra.mxu0 0.0
        %2136 = vmatprep.subr.mxu0 0.0
        %2137 = vmatpush2.xpose.msra.mxu0 0.0
        %2138 = vmatprep.subr.mxu0 0.0
        %2139 = vmatpush2.xpose.msra.mxu0 0.0
        %2140 = vmatprep.subr.mxu0 0.0
        %2141 = vmatpush2.xpose.msra.mxu0 0.0
        %2142 = vmatprep.subr.mxu0 0.0
        %2143 = vmatpush2.xpose.msra.mxu0 0.0
        %2144 = vmatprep.subr.mxu0 0.0
        %2145 = vmatpush2.xpose.msra.mxu0 0.0
        %2146 = vmatprep.subr.mxu0 0.0
        %2147 = vmatpush2.xpose.msra.mxu0 0.0
        %2148 = vmatprep.subr.mxu0 0.0
        %2149 = vmatpush2.xpose.msra.mxu0 0.0
        %2150 = vmatprep.subr.mxu0 0.0
        %2151 = vmatpush2.xpose.msra.mxu0 0.0
        %2152 = vmatprep.subr.mxu0 0.0
        %2153 = vmatpush2.xpose.msra.mxu0 0.0
        %2154 = vmatprep.subr.mxu0 0.0
        %2155 = vmatpush2.xpose.msra.mxu0 0.0
        %2156 = vmatprep.subr.mxu0 0.0
        %2157 = vmatpush2.xpose.msra.mxu0 0.0
        %2158 = vmatprep.mubr.f32.mxu0 0.0
        %2159 = vmatmul.mubr.f32.gmra.mxu0 %v2090
        %v2160 = vpop.f32.mrf.mxu0
        %v2161 = vadd.f32 0.0, %v2160
        %v2162 = vpop.f32.mrf.mxu0
        %2163 = vdwg.mxu0
        %2164 = vrot.lane.b32.xlu0 %v1057, 104
        %v2165 = vpop.permute.xlu0 %2164
        %2166 = vrot.lane.b32.xlu0 %v1057, 72
        %v2167 = vpop.permute.xlu0 %2166
        %v2168 = vsel %vm1088, %v2165, 0
        %v2170 = vsel %vm1088, %v2167, 0
        %2172 = vmatprep.subr.mxu0 0.0
        %2173 = vmatpush1.xpose.msra.mxu0 0.0
        %2174 = vmatprep.subr.mxu0 0.0
        %2175 = vmatpush1.xpose.msra.mxu0 0.0
        %2176 = vmatprep.subr.mxu0 0.0
        %2177 = vmatpush1.xpose.msra.mxu0 0.0
        %2178 = vmatprep.subr.mxu0 0.0
        %2179 = vmatpush1.xpose.msra.mxu0 0.0
        %2180 = vmatprep.subr.mxu0 0.0
        %2181 = vmatpush1.xpose.msra.mxu0 0.0
        %2182 = vmatprep.subr.mxu0 0.0
        %2183 = vmatpush1.xpose.msra.mxu0 0.0
        %2184 = vmatprep.subr.mxu0 0.0
        %2185 = vmatpush1.xpose.msra.mxu0 0.0
        %2186 = vmatprep.subr.mxu0 0.0
        %2187 = vmatpush1.xpose.msra.mxu0 0.0
        %2188 = vmatprep.subr.mxu0 0.0
        %2189 = vmatpush1.xpose.msra.mxu0 0.0
        %2190 = vmatprep.subr.mxu0 0.0
        %2191 = vmatpush1.xpose.msra.mxu0 0.0
        %2192 = vmatprep.subr.mxu0 0.0
        %2193 = vmatpush1.xpose.msra.mxu0 0.0
        %2194 = vmatprep.subr.mxu0 0.0
        %2195 = vmatpush1.xpose.msra.mxu0 0.0
        %2196 = vmatprep.subr.mxu0 0.0
        %2197 = vmatpush1.xpose.msra.mxu0 0.0
        %2198 = vmatprep.subr.mxu0 0.0
        %2199 = vmatpush1.xpose.msra.mxu0 0.0
        %2200 = vmatprep.subr.mxu0 0.0
        %2201 = vmatpush1.xpose.msra.mxu0 0.0
        %2202 = vmatprep.subr.mxu0 0.0
        %2203 = vmatpush1.xpose.msra.mxu0 %v2170
        %2204 = vmatprep.subr.mxu0 0.0
        %2205 = vmatpush2.xpose.msra.mxu0 0.0
        %2206 = vmatprep.subr.mxu0 0.0
        %2207 = vmatpush2.xpose.msra.mxu0 0.0
        %2208 = vmatprep.subr.mxu0 0.0
        %2209 = vmatpush2.xpose.msra.mxu0 0.0
        %2210 = vmatprep.subr.mxu0 0.0
        %2211 = vmatpush2.xpose.msra.mxu0 0.0
        %2212 = vmatprep.subr.mxu0 0.0
        %2213 = vmatpush2.xpose.msra.mxu0 0.0
        %2214 = vmatprep.subr.mxu0 0.0
        %2215 = vmatpush2.xpose.msra.mxu0 0.0
        %2216 = vmatprep.subr.mxu0 0.0
        %2217 = vmatpush2.xpose.msra.mxu0 0.0
        %2218 = vmatprep.subr.mxu0 0.0
        %2219 = vmatpush2.xpose.msra.mxu0 0.0
        %2220 = vmatprep.subr.mxu0 0.0
        %2221 = vmatpush2.xpose.msra.mxu0 0.0
        %2222 = vmatprep.subr.mxu0 0.0
        %2223 = vmatpush2.xpose.msra.mxu0 0.0
        %2224 = vmatprep.subr.mxu0 0.0
        %2225 = vmatpush2.xpose.msra.mxu0 0.0
        %2226 = vmatprep.subr.mxu0 0.0
        %2227 = vmatpush2.xpose.msra.mxu0 0.0
        %2228 = vmatprep.subr.mxu0 0.0
        %2229 = vmatpush2.xpose.msra.mxu0 0.0
        %2230 = vmatprep.subr.mxu0 0.0
        %2231 = vmatpush2.xpose.msra.mxu0 0.0
        %2232 = vmatprep.subr.mxu0 0.0
        %2233 = vmatpush2.xpose.msra.mxu0 0.0
        %2234 = vmatprep.subr.mxu0 0.0
        %2235 = vmatpush2.xpose.msra.mxu0 0.0
        %2236 = vmatprep.mubr.f32.mxu0 0.0
        %2237 = vmatmul.mubr.f32.gmra.mxu0 %v2168
        %v2238 = vpop.f32.mrf.mxu0
        %v2239 = vadd.f32 0.0, %v2238
        %v2240 = vpop.f32.mrf.mxu0
        %2241 = vdwg.mxu0
        %v2242 = vmul.f32 %v2161, 0.35355338
        %v2243 = vmul.f32 %v2239, 0.35355338
        %v2244 = vsel %vm1083, -1e+09, %v2242
        %v2245 = vsel %vm1084, -1e+09, %v2243
        %v2246 = vsel %vm1088, %v2244, -inf
        %2247 = vmax.xlane.f32.xlu0 %v2246
        %v2248 = vpop.xlane.xlu0 %2247
        %v2249 = vsel %vm1088, %v2245, -inf
        %2250 = vmax.xlane.f32.xlu0 %v2249
        %v2251 = vpop.xlane.xlu0 %2250
        %v2252 = vsub.f32 %v2244, %v2248
        %v2253 = vsub.f32 %v2245, %v2251
        %v2254 = vmul.f32 %v2252, 1.442695
        %v2255 = vpow.pop %v2254
        %v2256 = vmul.f32 %v2253, 1.442695
        %v2257 = vpow.pop %v2256
        %v2258 = vsel %vm1088, %v2255, 0.0
        %2259 = vadd.xlane.f32.xlu0 %v2258
        %v2260 = vpop.xlane.xlu0 %2259
        %v2261 = vsel %vm1088, %v2257, 0.0
        %2262 = vadd.xlane.f32.xlu0 %v2261
        %v2263 = vpop.xlane.xlu0 %2262
        %v2264 = vrcp.pop %v2260
        %v2265 = vmul.f32 %v2255, %v2264
        %v2266 = vrcp.pop %v2263
        %v2267 = vmul.f32 %v2257, %v2266
        %2268 = vrot.lane.b32.xlu0 %v1052, 40
        %v2269 = vpop.permute.xlu0 %2268
        %v2272 = vsel %vm1088, %v2265, 0
        %2274 = vmatprep.subr.mxu0 0.0
        %2275 = vmatpush1.msra.mxu0 0.0
        %2276 = vmatprep.subr.mxu0 0.0
        %2277 = vmatpush1.msra.mxu0 0.0
        %2278 = vmatprep.subr.mxu0 0.0
        %2279 = vmatpush1.msra.mxu0 0.0
        %2280 = vmatprep.subr.mxu0 0.0
        %2281 = vmatpush1.msra.mxu0 0.0
        %2282 = vmatprep.subr.mxu0 0.0
        %2283 = vmatpush1.msra.mxu0 0.0
        %2284 = vmatprep.subr.mxu0 0.0
        %2285 = vmatpush1.msra.mxu0 0.0
        %2286 = vmatprep.subr.mxu0 0.0
        %2287 = vmatpush1.msra.mxu0 0.0
        %2288 = vmatprep.subr.mxu0 0.0
        %2289 = vmatpush1.msra.mxu0 0.0
        %2290 = vmatprep.subr.mxu0 0.0
        %2291 = vmatpush1.msra.mxu0 0.0
        %2292 = vmatprep.subr.mxu0 0.0
        %2293 = vmatpush1.msra.mxu0 0.0
        %2294 = vmatprep.subr.mxu0 0.0
        %2295 = vmatpush1.msra.mxu0 0.0
        %2296 = vmatprep.subr.mxu0 0.0
        %2297 = vmatpush1.msra.mxu0 0.0
        %2298 = vmatprep.subr.mxu0 0.0
        %2299 = vmatpush1.msra.mxu0 0.0
        %2300 = vmatprep.subr.mxu0 0.0
        %2301 = vmatpush1.msra.mxu0 0.0
        %2302 = vmatprep.subr.mxu0 0.0
        %2303 = vmatpush1.msra.mxu0 0.0
        %2304 = vmatprep.subr.mxu0 0.0
        %2305 = vmatpush1.msra.mxu0 %v2269
        %2306 = vmatprep.subr.mxu0 0.0
        %2307 = vmatpush2.msra.mxu0 0.0
        %2308 = vmatprep.subr.mxu0 0.0
        %2309 = vmatpush2.msra.mxu0 0.0
        %2310 = vmatprep.subr.mxu0 0.0
        %2311 = vmatpush2.msra.mxu0 0.0
        %2312 = vmatprep.subr.mxu0 0.0
        %2313 = vmatpush2.msra.mxu0 0.0
        %2314 = vmatprep.subr.mxu0 0.0
        %2315 = vmatpush2.msra.mxu0 0.0
        %2316 = vmatprep.subr.mxu0 0.0
        %2317 = vmatpush2.msra.mxu0 0.0
        %2318 = vmatprep.subr.mxu0 0.0
        %2319 = vmatpush2.msra.mxu0 0.0
        %2320 = vmatprep.subr.mxu0 0.0
        %2321 = vmatpush2.msra.mxu0 0.0
        %2322 = vmatprep.subr.mxu0 0.0
        %2323 = vmatpush2.msra.mxu0 0.0
        %2324 = vmatprep.subr.mxu0 0.0
        %2325 = vmatpush2.msra.mxu0 0.0
        %2326 = vmatprep.subr.mxu0 0.0
        %2327 = vmatpush2.msra.mxu0 0.0
        %2328 = vmatprep.subr.mxu0 0.0
        %2329 = vmatpush2.msra.mxu0 0.0
        %2330 = vmatprep.subr.mxu0 0.0
        %2331 = vmatpush2.msra.mxu0 0.0
        %2332 = vmatprep.subr.mxu0 0.0
        %2333 = vmatpush2.msra.mxu0 0.0
        %2334 = vmatprep.subr.mxu0 0.0
        %2335 = vmatpush2.msra.mxu0 0.0
        %2336 = vmatprep.subr.mxu0 0.0
        %2337 = vmatpush2.msra.mxu0 0.0
        %2338 = vmatprep.mubr.f32.mxu0 0.0
        %2339 = vmatmul.mubr.f32.gmra.mxu0 %v2272
        %v2340 = vpop.f32.mrf.mxu0
        %v2341 = vadd.f32 0.0, %v2340
        %v2342 = vpop.f32.mrf.mxu0
        %2343 = vdwg.mxu0
        %2344 = vrot.lane.b32.xlu0 %v1057, 40
        %v2345 = vpop.permute.xlu0 %2344
        %v2348 = vsel %vm1088, %v2267, 0
        %2350 = vmatprep.subr.mxu0 0.0
        %2351 = vmatpush1.msra.mxu0 0.0
        %2352 = vmatprep.subr.mxu0 0.0
        %2353 = vmatpush1.msra.mxu0 0.0
        %2354 = vmatprep.subr.mxu0 0.0
        %2355 = vmatpush1.msra.mxu0 0.0
        %2356 = vmatprep.subr.mxu0 0.0
        %2357 = vmatpush1.msra.mxu0 0.0
        %2358 = vmatprep.subr.mxu0 0.0
        %2359 = vmatpush1.msra.mxu0 0.0
        %2360 = vmatprep.subr.mxu0 0.0
        %2361 = vmatpush1.msra.mxu0 0.0
        %2362 = vmatprep.subr.mxu0 0.0
        %2363 = vmatpush1.msra.mxu0 0.0
        %2364 = vmatprep.subr.mxu0 0.0
        %2365 = vmatpush1.msra.mxu0 0.0
        %2366 = vmatprep.subr.mxu0 0.0
        %2367 = vmatpush1.msra.mxu0 0.0
        %2368 = vmatprep.subr.mxu0 0.0
        %2369 = vmatpush1.msra.mxu0 0.0
        %2370 = vmatprep.subr.mxu0 0.0
        %2371 = vmatpush1.msra.mxu0 0.0
        %2372 = vmatprep.subr.mxu0 0.0
        %2373 = vmatpush1.msra.mxu0 0.0
        %2374 = vmatprep.subr.mxu0 0.0
        %2375 = vmatpush1.msra.mxu0 0.0
        %2376 = vmatprep.subr.mxu0 0.0
        %2377 = vmatpush1.msra.mxu0 0.0
        %2378 = vmatprep.subr.mxu0 0.0
        %2379 = vmatpush1.msra.mxu0 0.0
        %2380 = vmatprep.subr.mxu0 0.0
        %2381 = vmatpush1.msra.mxu0 %v2345
        %2382 = vmatprep.subr.mxu0 0.0
        %2383 = vmatpush2.msra.mxu0 0.0
        %2384 = vmatprep.subr.mxu0 0.0
        %2385 = vmatpush2.msra.mxu0 0.0
        %2386 = vmatprep.subr.mxu0 0.0
        %2387 = vmatpush2.msra.mxu0 0.0
        %2388 = vmatprep.subr.mxu0 0.0
        %2389 = vmatpush2.msra.mxu0 0.0
        %2390 = vmatprep.subr.mxu0 0.0
        %2391 = vmatpush2.msra.mxu0 0.0
        %2392 = vmatprep.subr.mxu0 0.0
        %2393 = vmatpush2.msra.mxu0 0.0
        %2394 = vmatprep.subr.mxu0 0.0
        %2395 = vmatpush2.msra.mxu0 0.0
        %2396 = vmatprep.subr.mxu0 0.0
        %2397 = vmatpush2.msra.mxu0 0.0
        %2398 = vmatprep.subr.mxu0 0.0
        %2399 = vmatpush2.msra.mxu0 0.0
        %2400 = vmatprep.subr.mxu0 0.0
        %2401 = vmatpush2.msra.mxu0 0.0
        %2402 = vmatprep.subr.mxu0 0.0
        %2403 = vmatpush2.msra.mxu0 0.0
        %2404 = vmatprep.subr.mxu0 0.0
        %2405 = vmatpush2.msra.mxu0 0.0
        %2406 = vmatprep.subr.mxu0 0.0
        %2407 = vmatpush2.msra.mxu0 0.0
        %2408 = vmatprep.subr.mxu0 0.0
        %2409 = vmatpush2.msra.mxu0 0.0
        %2410 = vmatprep.subr.mxu0 0.0
        %2411 = vmatpush2.msra.mxu0 0.0
        %2412 = vmatprep.subr.mxu0 0.0
        %2413 = vmatpush2.msra.mxu0 0.0
        %2414 = vmatprep.mubr.f32.mxu0 0.0
        %2415 = vmatmul.mubr.f32.gmra.mxu0 %v2348
        %v2416 = vpop.f32.mrf.mxu0
        %v2417 = vadd.f32 0.0, %v2416
        %v2418 = vpop.f32.mrf.mxu0
        %2419 = vdwg.mxu0
        %2422 = vrot.lane.b32.xlu0 %v1673, 8
        %v2423 = vpop.permute.xlu0 %2422
        %2424 = vrot.lane.b32.xlu0 %v1749, 8
        %v2425 = vpop.permute.xlu0 %2424
        %2430 = vrot.lane.b32.xlu0 %v2007, 16
        %v2431 = vpop.permute.xlu0 %2430
        %2432 = vrot.lane.b32.xlu0 %v2083, 16
        %v2433 = vpop.permute.xlu0 %2432
        %2438 = vrot.lane.b32.xlu0 %v2341, 24
        %v2439 = vpop.permute.xlu0 %2438
        %2440 = vrot.lane.b32.xlu0 %v2417, 24
        %v2441 = vpop.permute.xlu0 %2440
        %v2444 = vsel %vm1088, %v1339, %v2423
        %v2445 = vsel %vm1088, %v1415, %v2425
        %vm2446 = vcmask 130048
        %v2447 = vsel %vm2446, %v2444, %v2431
        %v2448 = vsel %vm2446, %v2445, %v2433
        %vm2449 = vcmask 195584
        %v2450 = vsel %vm2449, %v2447, %v2439
        %v2451 = vsel %vm2449, %v2448, %v2441
        %v2452 = vadd.f32 %v2450, %v965
        %v2453 = vadd.f32 %v2451, %v966
        %v2454 = vld [vmem:[%s908] sm:$0x1]
        %v2455 = vld [vmem:[%s911] sm:$0x1]
        %v2456 = vsel %vm978, %v2452, 0.0
        %2457 = vadd.xlane.f32.xlu0 %v2456
        %v2458 = vpop.xlane.xlu0 %2457
        %v2459 = vsel %vm978, %v2453, 0.0
        %2460 = vadd.xlane.f32.xlu0 %v2459
        %v2461 = vpop.xlane.xlu0 %2460
        %v2462 = vrcp.pop 32.0
        %v2463 = vmul.f32 %v2458, %v2462
        %v2464 = vmul.f32 %v2461, %v2462
        %v2465 = vsub.f32 %v2452, %v2463
        %v2466 = vsub.f32 %v2453, %v2464
        %v2467 = vmul.f32 %v2465, %v2465
        %v2468 = vmul.f32 %v2466, %v2466
        %v2469 = vsel %vm978, %v2467, 0.0
        %2470 = vadd.xlane.f32.xlu0 %v2469
        %v2471 = vpop.xlane.xlu0 %2470
        %v2472 = vsel %vm978, %v2468, 0.0
        %2473 = vadd.xlane.f32.xlu0 %v2472
        %v2474 = vpop.xlane.xlu0 %2473
        %v2475 = vmul.f32 %v2471, %v2462
        %v2476 = vmul.f32 %v2474, %v2462
        %v2477 = vadd.f32 %v2475, 1e-05
        %v2478 = vadd.f32 %v2476, 1e-05
        %v2479 = vrsqrt.pop %v2477
        %v2480 = vrsqrt.pop %v2478
        %v2481 = vmul.f32 %v2465, %v2479
        %v2482 = vmul.f32 %v2466, %v2480
        %v2484 = vlaneseq
        %v2485 = vshrl.u32 %v2484, 7
        %v2486 = vsub.s32 0, %v2485
        %v2487 = vrot.slane %v2454, %v2486
        %v2489 = vmul.f32 %v2481, %v2487
        %v2490 = vmul.f32 %v2482, %v2487
        %v2492 = vlaneseq
        %v2493 = vshrl.u32 %v2492, 7
        %v2494 = vsub.s32 0, %v2493
        %v2495 = vrot.slane %v2455, %v2494
        %v2497 = vadd.f32 %v2489, %v2495
        %v2498 = vadd.f32 %v2490, %v2495
        %v2499 = vld [vmem:[%s916] sm:$0xff]
        %v2500 = vld [vmem:[%s916 + $0x8] sm:$0xff]
        %v2501 = vld [vmem:[%s916 + $0x10] sm:$0xff]
        %v2502 = vld [vmem:[%s916 + $0x18] sm:$0xff]
        %v2503 = vld [vmem:[%s919] sm:$0x1]
        %v2505 = vlaneseq
        %v2506 = vshrl.u32 %v2505, 7
        %v2507 = vsub.s32 0, %v2506
        %v2508 = vrot.slane %v2503, %v2507
        %v2511 = vsel %vm978, %v2497, 0
        %v2514 = vsel %vm978, %v2498, 0
        %2516 = vmatprep.subr.mxu0 0.0
        %2517 = vmatpush1.msra.mxu0 0.0
        %2518 = vmatprep.subr.mxu0 0.0
        %2519 = vmatpush1.msra.mxu0 0.0
        %2520 = vmatprep.subr.mxu0 0.0
        %2521 = vmatpush1.msra.mxu0 0.0
        %2522 = vmatprep.subr.mxu0 0.0
        %2523 = vmatpush1.msra.mxu0 0.0
        %2524 = vmatprep.subr.mxu0 0.0
        %2525 = vmatpush1.msra.mxu0 0.0
        %2526 = vmatprep.subr.mxu0 0.0
        %2527 = vmatpush1.msra.mxu0 0.0
        %2528 = vmatprep.subr.mxu0 0.0
        %2529 = vmatpush1.msra.mxu0 0.0
        %2530 = vmatprep.subr.mxu0 0.0
        %2531 = vmatpush1.msra.mxu0 0.0
        %2532 = vmatprep.subr.mxu0 0.0
        %2533 = vmatpush1.msra.mxu0 0.0
        %2534 = vmatprep.subr.mxu0 0.0
        %2535 = vmatpush1.msra.mxu0 0.0
        %2536 = vmatprep.subr.mxu0 0.0
        %2537 = vmatpush1.msra.mxu0 0.0
        %2538 = vmatprep.subr.mxu0 0.0
        %2539 = vmatpush1.msra.mxu0 0.0
        %2540 = vmatprep.subr.mxu0 0.0
        %2541 = vmatpush1.msra.mxu0 %v2502
        %2542 = vmatprep.subr.mxu0 0.0
        %2543 = vmatpush1.msra.mxu0 %v2501
        %2544 = vmatprep.subr.mxu0 0.0
        %2545 = vmatpush1.msra.mxu0 %v2500
        %2546 = vmatprep.subr.mxu0 0.0
        %2547 = vmatpush1.msra.mxu0 %v2499
        %2548 = vmatprep.subr.mxu0 0.0
        %2549 = vmatpush2.msra.mxu0 0.0
        %2550 = vmatprep.subr.mxu0 0.0
        %2551 = vmatpush2.msra.mxu0 0.0
        %2552 = vmatprep.subr.mxu0 0.0
        %2553 = vmatpush2.msra.mxu0 0.0
        %2554 = vmatprep.subr.mxu0 0.0
        %2555 = vmatpush2.msra.mxu0 0.0
        %2556 = vmatprep.subr.mxu0 0.0
        %2557 = vmatpush2.msra.mxu0 0.0
        %2558 = vmatprep.subr.mxu0 0.0
        %2559 = vmatpush2.msra.mxu0 0.0
        %2560 = vmatprep.subr.mxu0 0.0
        %2561 = vmatpush2.msra.mxu0 0.0
        %2562 = vmatprep.subr.mxu0 0.0
        %2563 = vmatpush2.msra.mxu0 0.0
        %2564 = vmatprep.subr.mxu0 0.0
        %2565 = vmatpush2.msra.mxu0 0.0
        %2566 = vmatprep.subr.mxu0 0.0
        %2567 = vmatpush2.msra.mxu0 0.0
        %2568 = vmatprep.subr.mxu0 0.0
        %2569 = vmatpush2.msra.mxu0 0.0
        %2570 = vmatprep.subr.mxu0 0.0
        %2571 = vmatpush2.msra.mxu0 0.0
        %2572 = vmatprep.subr.mxu0 0.0
        %2573 = vmatpush2.msra.mxu0 0.0
        %2574 = vmatprep.subr.mxu0 0.0
        %2575 = vmatpush2.msra.mxu0 0.0
        %2576 = vmatprep.subr.mxu0 0.0
        %2577 = vmatpush2.msra.mxu0 0.0
        %2578 = vmatprep.subr.mxu0 0.0
        %2579 = vmatpush2.msra.mxu0 0.0
        %2580 = vmatprep.mubr.f32.mxu0 0.0
        %2581 = vmatmul.mubr.f32.gmra.mxu0 %v2511
        %v2582 = vpop.f32.mrf.mxu0
        %v2583 = vadd.f32 %v2508, %v2582
        %v2584 = vpop.f32.mrf.mxu0
        %2585 = vmatprep.mubr.f32.mxu0 0.0
        %2586 = vmatmul.mubr.f32.gmra.mxu0 %v2514
        %v2587 = vpop.f32.mrf.mxu0
        %v2588 = vadd.f32 %v2508, %v2587
        %v2589 = vpop.f32.mrf.mxu0
        %2590 = vdwg.mxu0
        %v2591 = vld [vmem:[%s1] sm:$0xff]
        %v2592 = vld [vmem:[%s1 + $0x8] sm:$0xff]
        %v2593 = vld [vmem:[%s1 + $0x10] sm:$0xff]
        %v2594 = vld [vmem:[%s1 + $0x18] sm:$0xff]
        %v2595 = vld [vmem:[%s924] sm:$0xff]
        %v2596 = vld [vmem:[%s924 + $0x8] sm:$0xff]
        %v2597 = vld [vmem:[%s924 + $0x10] sm:$0xff]
        %v2598 = vld [vmem:[%s924 + $0x18] sm:$0xff]
        %v2599 = vld [vmem:[%s927] sm:$0x1]
        %v2601 = vlaneseq
        %v2602 = vshrl.u32 %v2601, 7
        %v2603 = vsub.s32 0, %v2602
        %v2604 = vrot.slane %v2599, %v2603
        %v2607 = vsel %vm978, %v2591, 0
        %v2610 = vsel %vm978, %v2592, 0
        %v2613 = vsel %vm978, %v2593, 0
        %v2616 = vsel %vm978, %v2594, 0
        %2618 = vmatprep.subr.mxu0 0.0
        %2619 = vmatpush1.msra.mxu0 0.0
        %2620 = vmatprep.subr.mxu0 0.0
        %2621 = vmatpush1.msra.mxu0 0.0
        %2622 = vmatprep.subr.mxu0 0.0
        %2623 = vmatpush1.msra.mxu0 0.0
        %2624 = vmatprep.subr.mxu0 0.0
        %2625 = vmatpush1.msra.mxu0 0.0
        %2626 = vmatprep.subr.mxu0 0.0
        %2627 = vmatpush1.msra.mxu0 0.0
        %2628 = vmatprep.subr.mxu0 0.0
        %2629 = vmatpush1.msra.mxu0 0.0
        %2630 = vmatprep.subr.mxu0 0.0
        %2631 = vmatpush1.msra.mxu0 0.0
        %2632 = vmatprep.subr.mxu0 0.0
        %2633 = vmatpush1.msra.mxu0 0.0
        %2634 = vmatprep.subr.mxu0 0.0
        %2635 = vmatpush1.msra.mxu0 0.0
        %2636 = vmatprep.subr.mxu0 0.0
        %2637 = vmatpush1.msra.mxu0 0.0
        %2638 = vmatprep.subr.mxu0 0.0
        %2639 = vmatpush1.msra.mxu0 0.0
        %2640 = vmatprep.subr.mxu0 0.0
        %2641 = vmatpush1.msra.mxu0 0.0
        %2642 = vmatprep.subr.mxu0 0.0
        %2643 = vmatpush1.msra.mxu0 %v2598
        %2644 = vmatprep.subr.mxu0 0.0
        %2645 = vmatpush1.msra.mxu0 %v2597
        %2646 = vmatprep.subr.mxu0 0.0
        %2647 = vmatpush1.msra.mxu0 %v2596
        %2648 = vmatprep.subr.mxu0 0.0
        %2649 = vmatpush1.msra.mxu0 %v2595
        %2650 = vmatprep.subr.mxu0 0.0
        %2651 = vmatpush2.msra.mxu0 0.0
        %2652 = vmatprep.subr.mxu0 0.0
        %2653 = vmatpush2.msra.mxu0 0.0
        %2654 = vmatprep.subr.mxu0 0.0
        %2655 = vmatpush2.msra.mxu0 0.0
        %2656 = vmatprep.subr.mxu0 0.0
        %2657 = vmatpush2.msra.mxu0 0.0
        %2658 = vmatprep.subr.mxu0 0.0
        %2659 = vmatpush2.msra.mxu0 0.0
        %2660 = vmatprep.subr.mxu0 0.0
        %2661 = vmatpush2.msra.mxu0 0.0
        %2662 = vmatprep.subr.mxu0 0.0
        %2663 = vmatpush2.msra.mxu0 0.0
        %2664 = vmatprep.subr.mxu0 0.0
        %2665 = vmatpush2.msra.mxu0 0.0
        %2666 = vmatprep.subr.mxu0 0.0
        %2667 = vmatpush2.msra.mxu0 0.0
        %2668 = vmatprep.subr.mxu0 0.0
        %2669 = vmatpush2.msra.mxu0 0.0
        %2670 = vmatprep.subr.mxu0 0.0
        %2671 = vmatpush2.msra.mxu0 0.0
        %2672 = vmatprep.subr.mxu0 0.0
        %2673 = vmatpush2.msra.mxu0 0.0
        %2674 = vmatprep.subr.mxu0 0.0
        %2675 = vmatpush2.msra.mxu0 0.0
        %2676 = vmatprep.subr.mxu0 0.0
        %2677 = vmatpush2.msra.mxu0 0.0
        %2678 = vmatprep.subr.mxu0 0.0
        %2679 = vmatpush2.msra.mxu0 0.0
        %2680 = vmatprep.subr.mxu0 0.0
        %2681 = vmatpush2.msra.mxu0 0.0
        %2682 = vmatprep.mubr.f32.mxu0 0.0
        %2683 = vmatmul.mubr.f32.gmra.mxu0 %v2607
        %v2684 = vpop.f32.mrf.mxu0
        %v2685 = vadd.f32 %v2604, %v2684
        %v2686 = vpop.f32.mrf.mxu0
        %2687 = vmatprep.mubr.f32.mxu0 0.0
        %2688 = vmatmul.mubr.f32.gmra.mxu0 %v2610
        %v2689 = vpop.f32.mrf.mxu0
        %v2690 = vadd.f32 %v2604, %v2689
        %v2691 = vpop.f32.mrf.mxu0
        %2692 = vmatprep.mubr.f32.mxu0 0.0
        %2693 = vmatmul.mubr.f32.gmra.mxu0 %v2613
        %v2694 = vpop.f32.mrf.mxu0
        %v2695 = vadd.f32 %v2604, %v2694
        %v2696 = vpop.f32.mrf.mxu0
        %2697 = vmatprep.mubr.f32.mxu0 0.0
        %2698 = vmatmul.mubr.f32.gmra.mxu0 %v2616
        %v2699 = vpop.f32.mrf.mxu0
        %v2700 = vadd.f32 %v2604, %v2699
        %v2701 = vpop.f32.mrf.mxu0
        %2702 = vdwg.mxu0
        %v2703 = vld [vmem:[%s3] sm:$0x1]
        %v2704 = vld [vmem:[%s3 + $0x1] sm:$0x1]
        %v2705 = vlaneseq
        %v2706 = vshrl.u32 %v2705, 7
        %v2707 = vsub.s32 0, %v2706
        %v2708 = vrot.slane %v2703, %v2707
        %v2709 = vlaneseq
        %v2710 = vshrl.u32 %v2709, 7
        %v2711 = vsub.s32 0, %v2710
        %v2712 = vrot.slane %v2704, %v2711
        %2713 = vset.pattern.permute.xlu0 0
        %2714 = vperm.xlu0 %2713, %v2708
        %v2715 = vpop.permute.xlu0 %2714
        %2716 = vset.pattern.permute.xlu0 0
        %2717 = vperm.xlu0 %2716, %v2712
        %v2718 = vpop.permute.xlu0 %2717
        %vm2719 = vcmp.ge.s32.totalorder %v1063, %v2715
        %vm2720 = vcmp.ge.s32.totalorder %v1063, %v2718
        %v2722 = vsel %vm1088, %v2583, 0
        %v2725 = vsel %vm1088, %v2685, 0
        %v2728 = vsel %vm1088, %v2690, 0
        %2730 = vmatprep.subr.mxu0 0.0
        %2731 = vmatpush1.xpose.msra.mxu0 0.0
        %2732 = vmatprep.subr.mxu0 0.0
        %2733 = vmatpush1.xpose.msra.mxu0 0.0
        %2734 = vmatprep.subr.mxu0 0.0
        %2735 = vmatpush1.xpose.msra.mxu0 0.0
        %2736 = vmatprep.subr.mxu0 0.0
        %2737 = vmatpush1.xpose.msra.mxu0 0.0
        %2738 = vmatprep.subr.mxu0 0.0
        %2739 = vmatpush1.xpose.msra.mxu0 0.0
        %2740 = vmatprep.subr.mxu0 0.0
        %2741 = vmatpush1.xpose.msra.mxu0 0.0
        %2742 = vmatprep.subr.mxu0 0.0
        %2743 = vmatpush1.xpose.msra.mxu0 0.0
        %2744 = vmatprep.subr.mxu0 0.0
        %2745 = vmatpush1.xpose.msra.mxu0 0.0
        %2746 = vmatprep.subr.mxu0 0.0
        %2747 = vmatpush1.xpose.msra.mxu0 0.0
        %2748 = vmatprep.subr.mxu0 0.0
        %2749 = vmatpush1.xpose.msra.mxu0 0.0
        %2750 = vmatprep.subr.mxu0 0.0
        %2751 = vmatpush1.xpose.msra.mxu0 0.0
        %2752 = vmatprep.subr.mxu0 0.0
        %2753 = vmatpush1.xpose.msra.mxu0 0.0
        %2754 = vmatprep.subr.mxu0 0.0
        %2755 = vmatpush1.xpose.msra.mxu0 0.0
        %2756 = vmatprep.subr.mxu0 0.0
        %2757 = vmatpush1.xpose.msra.mxu0 0.0
        %2758 = vmatprep.subr.mxu0 0.0
        %2759 = vmatpush1.xpose.msra.mxu0 %v2728
        %2760 = vmatprep.subr.mxu0 0.0
        %2761 = vmatpush1.xpose.msra.mxu0 %v2725
        %2762 = vmatprep.subr.mxu0 0.0
        %2763 = vmatpush2.xpose.msra.mxu0 0.0
        %2764 = vmatprep.subr.mxu0 0.0
        %2765 = vmatpush2.xpose.msra.mxu0 0.0
        %2766 = vmatprep.subr.mxu0 0.0
        %2767 = vmatpush2.xpose.msra.mxu0 0.0
        %2768 = vmatprep.subr.mxu0 0.0
        %2769 = vmatpush2.xpose.msra.mxu0 0.0
        %2770 = vmatprep.subr.mxu0 0.0
        %2771 = vmatpush2.xpose.msra.mxu0 0.0
        %2772 = vmatprep.subr.mxu0 0.0
        %2773 = vmatpush2.xpose.msra.mxu0 0.0
        %2774 = vmatprep.subr.mxu0 0.0
        %2775 = vmatpush2.xpose.msra.mxu0 0.0
        %2776 = vmatprep.subr.mxu0 0.0
        %2777 = vmatpush2.xpose.msra.mxu0 0.0
        %2778 = vmatprep.subr.mxu0 0.0
        %2779 = vmatpush2.xpose.msra.mxu0 0.0
        %2780 = vmatprep.subr.mxu0 0.0
        %2781 = vmatpush2.xpose.msra.mxu0 0.0
        %2782 = vmatprep.subr.mxu0 0.0
        %2783 = vmatpush2.xpose.msra.mxu0 0.0
        %2784 = vmatprep.subr.mxu0 0.0
        %2785 = vmatpush2.xpose.msra.mxu0 0.0
        %2786 = vmatprep.subr.mxu0 0.0
        %2787 = vmatpush2.xpose.msra.mxu0 0.0
        %2788 = vmatprep.subr.mxu0 0.0
        %2789 = vmatpush2.xpose.msra.mxu0 0.0
        %2790 = vmatprep.subr.mxu0 0.0
        %2791 = vmatpush2.xpose.msra.mxu0 0.0
        %2792 = vmatprep.subr.mxu0 0.0
        %2793 = vmatpush2.xpose.msra.mxu0 0.0
        %2794 = vmatprep.mubr.f32.mxu0 0.0
        %2795 = vmatmul.mubr.f32.gmra.mxu0 %v2722
        %v2796 = vpop.f32.mrf.mxu0
        %v2797 = vadd.f32 0.0, %v2796
        %v2798 = vpop.f32.mrf.mxu0
        %2799 = vdwg.mxu0
        %v2801 = vsel %vm1088, %v2588, 0
        %v2804 = vsel %vm1088, %v2695, 0
        %v2807 = vsel %vm1088, %v2700, 0
        %2809 = vmatprep.subr.mxu0 0.0
        %2810 = vmatpush1.xpose.msra.mxu0 0.0
        %2811 = vmatprep.subr.mxu0 0.0
        %2812 = vmatpush1.xpose.msra.mxu0 0.0
        %2813 = vmatprep.subr.mxu0 0.0
        %2814 = vmatpush1.xpose.msra.mxu0 0.0
        %2815 = vmatprep.subr.mxu0 0.0
        %2816 = vmatpush1.xpose.msra.mxu0 0.0
        %2817 = vmatprep.subr.mxu0 0.0
        %2818 = vmatpush1.xpose.msra.mxu0 0.0
        %2819 = vmatprep.subr.mxu0 0.0
        %2820 = vmatpush1.xpose.msra.mxu0 0.0
        %2821 = vmatprep.subr.mxu0 0.0
        %2822 = vmatpush1.xpose.msra.mxu0 0.0
        %2823 = vmatprep.subr.mxu0 0.0
        %2824 = vmatpush1.xpose.msra.mxu0 0.0
        %2825 = vmatprep.subr.mxu0 0.0
        %2826 = vmatpush1.xpose.msra.mxu0 0.0
        %2827 = vmatprep.subr.mxu0 0.0
        %2828 = vmatpush1.xpose.msra.mxu0 0.0
        %2829 = vmatprep.subr.mxu0 0.0
        %2830 = vmatpush1.xpose.msra.mxu0 0.0
        %2831 = vmatprep.subr.mxu0 0.0
        %2832 = vmatpush1.xpose.msra.mxu0 0.0
        %2833 = vmatprep.subr.mxu0 0.0
        %2834 = vmatpush1.xpose.msra.mxu0 0.0
        %2835 = vmatprep.subr.mxu0 0.0
        %2836 = vmatpush1.xpose.msra.mxu0 0.0
        %2837 = vmatprep.subr.mxu0 0.0
        %2838 = vmatpush1.xpose.msra.mxu0 %v2807
        %2839 = vmatprep.subr.mxu0 0.0
        %2840 = vmatpush1.xpose.msra.mxu0 %v2804
        %2841 = vmatprep.subr.mxu0 0.0
        %2842 = vmatpush2.xpose.msra.mxu0 0.0
        %2843 = vmatprep.subr.mxu0 0.0
        %2844 = vmatpush2.xpose.msra.mxu0 0.0
        %2845 = vmatprep.subr.mxu0 0.0
        %2846 = vmatpush2.xpose.msra.mxu0 0.0
        %2847 = vmatprep.subr.mxu0 0.0
        %2848 = vmatpush2.xpose.msra.mxu0 0.0
        %2849 = vmatprep.subr.mxu0 0.0
        %2850 = vmatpush2.xpose.msra.mxu0 0.0
        %2851 = vmatprep.subr.mxu0 0.0
        %2852 = vmatpush2.xpose.msra.mxu0 0.0
        %2853 = vmatprep.subr.mxu0 0.0
        %2854 = vmatpush2.xpose.msra.mxu0 0.0
        %2855 = vmatprep.subr.mxu0 0.0
        %2856 = vmatpush2.xpose.msra.mxu0 0.0
        %2857 = vmatprep.subr.mxu0 0.0
        %2858 = vmatpush2.xpose.msra.mxu0 0.0
        %2859 = vmatprep.subr.mxu0 0.0
        %2860 = vmatpush2.xpose.msra.mxu0 0.0
        %2861 = vmatprep.subr.mxu0 0.0
        %2862 = vmatpush2.xpose.msra.mxu0 0.0
        %2863 = vmatprep.subr.mxu0 0.0
        %2864 = vmatpush2.xpose.msra.mxu0 0.0
        %2865 = vmatprep.subr.mxu0 0.0
        %2866 = vmatpush2.xpose.msra.mxu0 0.0
        %2867 = vmatprep.subr.mxu0 0.0
        %2868 = vmatpush2.xpose.msra.mxu0 0.0
        %2869 = vmatprep.subr.mxu0 0.0
        %2870 = vmatpush2.xpose.msra.mxu0 0.0
        %2871 = vmatprep.subr.mxu0 0.0
        %2872 = vmatpush2.xpose.msra.mxu0 0.0
        %2873 = vmatprep.mubr.f32.mxu0 0.0
        %2874 = vmatmul.mubr.f32.gmra.mxu0 %v2801
        %v2875 = vpop.f32.mrf.mxu0
        %v2876 = vadd.f32 0.0, %v2875
        %v2877 = vpop.f32.mrf.mxu0
        %2878 = vdwg.mxu0
        %v2879 = vmul.f32 %v2797, 0.35355338
        %v2880 = vmul.f32 %v2876, 0.35355338
        %v2881 = vsel %vm2719, -1e+09, %v2879
        %v2882 = vsel %vm2720, -1e+09, %v2880
        %v2883 = vsel %vm2446, %v2881, -inf
        %2884 = vmax.xlane.f32.xlu0 %v2883
        %v2885 = vpop.xlane.xlu0 %2884
        %v2886 = vsel %vm2446, %v2882, -inf
        %2887 = vmax.xlane.f32.xlu0 %v2886
        %v2888 = vpop.xlane.xlu0 %2887
        %v2889 = vsub.f32 %v2881, %v2885
        %v2890 = vsub.f32 %v2882, %v2888
        %v2891 = vmul.f32 %v2889, 1.442695
        %v2892 = vpow.pop %v2891
        %v2893 = vmul.f32 %v2890, 1.442695
        %v2894 = vpow.pop %v2893
        %v2895 = vsel %vm2446, %v2892, 0.0
        %2896 = vadd.xlane.f32.xlu0 %v2895
        %v2897 = vpop.xlane.xlu0 %2896
        %v2898 = vsel %vm2446, %v2894, 0.0
        %2899 = vadd.xlane.f32.xlu0 %v2898
        %v2900 = vpop.xlane.xlu0 %2899
        %v2901 = vrcp.pop %v2897
        %v2902 = vmul.f32 %v2892, %v2901
        %v2903 = vrcp.pop %v2900
        %v2904 = vmul.f32 %v2894, %v2903
        %2905 = vst.msk [vmem:[%s24] sm:$0xff] %vm2446, %v2902
        %2906 = vst.msk [vmem:[%s24 + $0x8] sm:$0xff] %vm2446, %v2904
        %2907 = vrot.lane.b32.xlu0 %v2685, 96
        %v2908 = vpop.permute.xlu0 %2907
        %2909 = vrot.lane.b32.xlu0 %v2690, 96
        %v2910 = vpop.permute.xlu0 %2909
        %v2914 = vsel %vm2446, %v2902, 0
        %2916 = vmatprep.subr.mxu0 0.0
        %2917 = vmatpush1.msra.mxu0 0.0
        %2918 = vmatprep.subr.mxu0 0.0
        %2919 = vmatpush1.msra.mxu0 0.0
        %2920 = vmatprep.subr.mxu0 0.0
        %2921 = vmatpush1.msra.mxu0 0.0
        %2922 = vmatprep.subr.mxu0 0.0
        %2923 = vmatpush1.msra.mxu0 0.0
        %2924 = vmatprep.subr.mxu0 0.0
        %2925 = vmatpush1.msra.mxu0 0.0
        %2926 = vmatprep.subr.mxu0 0.0
        %2927 = vmatpush1.msra.mxu0 0.0
        %2928 = vmatprep.subr.mxu0 0.0
        %2929 = vmatpush1.msra.mxu0 0.0
        %2930 = vmatprep.subr.mxu0 0.0
        %2931 = vmatpush1.msra.mxu0 0.0
        %2932 = vmatprep.subr.mxu0 0.0
        %2933 = vmatpush1.msra.mxu0 0.0
        %2934 = vmatprep.subr.mxu0 0.0
        %2935 = vmatpush1.msra.mxu0 0.0
        %2936 = vmatprep.subr.mxu0 0.0
        %2937 = vmatpush1.msra.mxu0 0.0
        %2938 = vmatprep.subr.mxu0 0.0
        %2939 = vmatpush1.msra.mxu0 0.0
        %2940 = vmatprep.subr.mxu0 0.0
        %2941 = vmatpush1.msra.mxu0 0.0
        %2942 = vmatprep.subr.mxu0 0.0
        %2943 = vmatpush1.msra.mxu0 0.0
        %2944 = vmatprep.subr.mxu0 0.0
        %2945 = vmatpush1.msra.mxu0 %v2910
        %2946 = vmatprep.subr.mxu0 0.0
        %2947 = vmatpush1.msra.mxu0 %v2908
        %2948 = vmatprep.subr.mxu0 0.0
        %2949 = vmatpush2.msra.mxu0 0.0
        %2950 = vmatprep.subr.mxu0 0.0
        %2951 = vmatpush2.msra.mxu0 0.0
        %2952 = vmatprep.subr.mxu0 0.0
        %2953 = vmatpush2.msra.mxu0 0.0
        %2954 = vmatprep.subr.mxu0 0.0
        %2955 = vmatpush2.msra.mxu0 0.0
        %2956 = vmatprep.subr.mxu0 0.0
        %2957 = vmatpush2.msra.mxu0 0.0
        %2958 = vmatprep.subr.mxu0 0.0
        %2959 = vmatpush2.msra.mxu0 0.0
        %2960 = vmatprep.subr.mxu0 0.0
        %2961 = vmatpush2.msra.mxu0 0.0
        %2962 = vmatprep.subr.mxu0 0.0
        %2963 = vmatpush2.msra.mxu0 0.0
        %2964 = vmatprep.subr.mxu0 0.0
        %2965 = vmatpush2.msra.mxu0 0.0
        %2966 = vmatprep.subr.mxu0 0.0
        %2967 = vmatpush2.msra.mxu0 0.0
        %2968 = vmatprep.subr.mxu0 0.0
        %2969 = vmatpush2.msra.mxu0 0.0
        %2970 = vmatprep.subr.mxu0 0.0
        %2971 = vmatpush2.msra.mxu0 0.0
        %2972 = vmatprep.subr.mxu0 0.0
        %2973 = vmatpush2.msra.mxu0 0.0
        %2974 = vmatprep.subr.mxu0 0.0
        %2975 = vmatpush2.msra.mxu0 0.0
        %2976 = vmatprep.subr.mxu0 0.0
        %2977 = vmatpush2.msra.mxu0 0.0
        %2978 = vmatprep.subr.mxu0 0.0
        %2979 = vmatpush2.msra.mxu0 0.0
        %2980 = vmatprep.mubr.f32.mxu0 0.0
        %2981 = vmatmul.mubr.f32.gmra.mxu0 %v2914
        %v2982 = vpop.f32.mrf.mxu0
        %v2983 = vadd.f32 0.0, %v2982
        %v2984 = vpop.f32.mrf.mxu0
        %2985 = vdwg.mxu0
        %2986 = vrot.lane.b32.xlu0 %v2695, 96
        %v2987 = vpop.permute.xlu0 %2986
        %2988 = vrot.lane.b32.xlu0 %v2700, 96
        %v2989 = vpop.permute.xlu0 %2988
        %v2993 = vsel %vm2446, %v2904, 0
        %2995 = vmatprep.subr.mxu0 0.0
        %2996 = vmatpush1.msra.mxu0 0.0
        %2997 = vmatprep.subr.mxu0 0.0
        %2998 = vmatpush1.msra.mxu0 0.0
        %2999 = vmatprep.subr.mxu0 0.0
        %3000 = vmatpush1.msra.mxu0 0.0
        %3001 = vmatprep.subr.mxu0 0.0
        %3002 = vmatpush1.msra.mxu0 0.0
        %3003 = vmatprep.subr.mxu0 0.0
        %3004 = vmatpush1.msra.mxu0 0.0
        %3005 = vmatprep.subr.mxu0 0.0
        %3006 = vmatpush1.msra.mxu0 0.0
        %3007 = vmatprep.subr.mxu0 0.0
        %3008 = vmatpush1.msra.mxu0 0.0
        %3009 = vmatprep.subr.mxu0 0.0
        %3010 = vmatpush1.msra.mxu0 0.0
        %3011 = vmatprep.subr.mxu0 0.0
        %3012 = vmatpush1.msra.mxu0 0.0
        %3013 = vmatprep.subr.mxu0 0.0
        %3014 = vmatpush1.msra.mxu0 0.0
        %3015 = vmatprep.subr.mxu0 0.0
        %3016 = vmatpush1.msra.mxu0 0.0
        %3017 = vmatprep.subr.mxu0 0.0
        %3018 = vmatpush1.msra.mxu0 0.0
        %3019 = vmatprep.subr.mxu0 0.0
        %3020 = vmatpush1.msra.mxu0 0.0
        %3021 = vmatprep.subr.mxu0 0.0
        %3022 = vmatpush1.msra.mxu0 0.0
        %3023 = vmatprep.subr.mxu0 0.0
        %3024 = vmatpush1.msra.mxu0 %v2989
        %3025 = vmatprep.subr.mxu0 0.0
        %3026 = vmatpush1.msra.mxu0 %v2987
        %3027 = vmatprep.subr.mxu0 0.0
        %3028 = vmatpush2.msra.mxu0 0.0
        %3029 = vmatprep.subr.mxu0 0.0
        %3030 = vmatpush2.msra.mxu0 0.0
        %3031 = vmatprep.subr.mxu0 0.0
        %3032 = vmatpush2.msra.mxu0 0.0
        %3033 = vmatprep.subr.mxu0 0.0
        %3034 = vmatpush2.msra.mxu0 0.0
        %3035 = vmatprep.subr.mxu0 0.0
        %3036 = vmatpush2.msra.mxu0 0.0
        %3037 = vmatprep.subr.mxu0 0.0
        %3038 = vmatpush2.msra.mxu0 0.0
        %3039 = vmatprep.subr.mxu0 0.0
        %3040 = vmatpush2.msra.mxu0 0.0
        %3041 = vmatprep.subr.mxu0 0.0
        %3042 = vmatpush2.msra.mxu0 0.0
        %3043 = vmatprep.subr.mxu0 0.0
        %3044 = vmatpush2.msra.mxu0 0.0
        %3045 = vmatprep.subr.mxu0 0.0
        %3046 = vmatpush2.msra.mxu0 0.0
        %3047 = vmatprep.subr.mxu0 0.0
        %3048 = vmatpush2.msra.mxu0 0.0
        %3049 = vmatprep.subr.mxu0 0.0
        %3050 = vmatpush2.msra.mxu0 0.0
        %3051 = vmatprep.subr.mxu0 0.0
        %3052 = vmatpush2.msra.mxu0 0.0
        %3053 = vmatprep.subr.mxu0 0.0
        %3054 = vmatpush2.msra.mxu0 0.0
        %3055 = vmatprep.subr.mxu0 0.0
        %3056 = vmatpush2.msra.mxu0 0.0
        %3057 = vmatprep.subr.mxu0 0.0
        %3058 = vmatpush2.msra.mxu0 0.0
        %3059 = vmatprep.mubr.f32.mxu0 0.0
        %3060 = vmatmul.mubr.f32.gmra.mxu0 %v2993
        %v3061 = vpop.f32.mrf.mxu0
        %v3062 = vadd.f32 0.0, %v3061
        %v3063 = vpop.f32.mrf.mxu0
        %3064 = vdwg.mxu0
        %3065 = vrot.lane.b32.xlu0 %v2583, 120
        %v3066 = vpop.permute.xlu0 %3065
        %3067 = vrot.lane.b32.xlu0 %v2685, 120
        %v3068 = vpop.permute.xlu0 %3067
        %3069 = vrot.lane.b32.xlu0 %v2690, 120
        %v3070 = vpop.permute.xlu0 %3069
        %v3071 = vsel %vm1088, %v3066, 0
        %v3073 = vsel %vm1088, %v3068, 0
        %v3075 = vsel %vm1088, %v3070, 0
        %3077 = vmatprep.subr.mxu0 0.0
        %3078 = vmatpush1.xpose.msra.mxu0 0.0
        %3079 = vmatprep.subr.mxu0 0.0
        %3080 = vmatpush1.xpose.msra.mxu0 0.0
        %3081 = vmatprep.subr.mxu0 0.0
        %3082 = vmatpush1.xpose.msra.mxu0 0.0
        %3083 = vmatprep.subr.mxu0 0.0
        %3084 = vmatpush1.xpose.msra.mxu0 0.0
        %3085 = vmatprep.subr.mxu0 0.0
        %3086 = vmatpush1.xpose.msra.mxu0 0.0
        %3087 = vmatprep.subr.mxu0 0.0
        %3088 = vmatpush1.xpose.msra.mxu0 0.0
        %3089 = vmatprep.subr.mxu0 0.0
        %3090 = vmatpush1.xpose.msra.mxu0 0.0
        %3091 = vmatprep.subr.mxu0 0.0
        %3092 = vmatpush1.xpose.msra.mxu0 0.0
        %3093 = vmatprep.subr.mxu0 0.0
        %3094 = vmatpush1.xpose.msra.mxu0 0.0
        %3095 = vmatprep.subr.mxu0 0.0
        %3096 = vmatpush1.xpose.msra.mxu0 0.0
        %3097 = vmatprep.subr.mxu0 0.0
        %3098 = vmatpush1.xpose.msra.mxu0 0.0
        %3099 = vmatprep.subr.mxu0 0.0
        %3100 = vmatpush1.xpose.msra.mxu0 0.0
        %3101 = vmatprep.subr.mxu0 0.0
        %3102 = vmatpush1.xpose.msra.mxu0 0.0
        %3103 = vmatprep.subr.mxu0 0.0
        %3104 = vmatpush1.xpose.msra.mxu0 0.0
        %3105 = vmatprep.subr.mxu0 0.0
        %3106 = vmatpush1.xpose.msra.mxu0 %v3075
        %3107 = vmatprep.subr.mxu0 0.0
        %3108 = vmatpush1.xpose.msra.mxu0 %v3073
        %3109 = vmatprep.subr.mxu0 0.0
        %3110 = vmatpush2.xpose.msra.mxu0 0.0
        %3111 = vmatprep.subr.mxu0 0.0
        %3112 = vmatpush2.xpose.msra.mxu0 0.0
        %3113 = vmatprep.subr.mxu0 0.0
        %3114 = vmatpush2.xpose.msra.mxu0 0.0
        %3115 = vmatprep.subr.mxu0 0.0
        %3116 = vmatpush2.xpose.msra.mxu0 0.0
        %3117 = vmatprep.subr.mxu0 0.0
        %3118 = vmatpush2.xpose.msra.mxu0 0.0
        %3119 = vmatprep.subr.mxu0 0.0
        %3120 = vmatpush2.xpose.msra.mxu0 0.0
        %3121 = vmatprep.subr.mxu0 0.0
        %3122 = vmatpush2.xpose.msra.mxu0 0.0
        %3123 = vmatprep.subr.mxu0 0.0
        %3124 = vmatpush2.xpose.msra.mxu0 0.0
        %3125 = vmatprep.subr.mxu0 0.0
        %3126 = vmatpush2.xpose.msra.mxu0 0.0
        %3127 = vmatprep.subr.mxu0 0.0
        %3128 = vmatpush2.xpose.msra.mxu0 0.0
        %3129 = vmatprep.subr.mxu0 0.0
        %3130 = vmatpush2.xpose.msra.mxu0 0.0
        %3131 = vmatprep.subr.mxu0 0.0
        %3132 = vmatpush2.xpose.msra.mxu0 0.0
        %3133 = vmatprep.subr.mxu0 0.0
        %3134 = vmatpush2.xpose.msra.mxu0 0.0
        %3135 = vmatprep.subr.mxu0 0.0
        %3136 = vmatpush2.xpose.msra.mxu0 0.0
        %3137 = vmatprep.subr.mxu0 0.0
        %3138 = vmatpush2.xpose.msra.mxu0 0.0
        %3139 = vmatprep.subr.mxu0 0.0
        %3140 = vmatpush2.xpose.msra.mxu0 0.0
        %3141 = vmatprep.mubr.f32.mxu0 0.0
        %3142 = vmatmul.mubr.f32.gmra.mxu0 %v3071
        %v3143 = vpop.f32.mrf.mxu0
        %v3144 = vadd.f32 0.0, %v3143
        %v3145 = vpop.f32.mrf.mxu0
        %3146 = vdwg.mxu0
        %3147 = vrot.lane.b32.xlu0 %v2588, 120
        %v3148 = vpop.permute.xlu0 %3147
        %3149 = vrot.lane.b32.xlu0 %v2695, 120
        %v3150 = vpop.permute.xlu0 %3149
        %3151 = vrot.lane.b32.xlu0 %v2700, 120
        %v3152 = vpop.permute.xlu0 %3151
        %v3153 = vsel %vm1088, %v3148, 0
        %v3155 = vsel %vm1088, %v3150, 0
        %v3157 = vsel %vm1088, %v3152, 0
        %3159 = vmatprep.subr.mxu0 0.0
        %3160 = vmatpush1.xpose.msra.mxu0 0.0
        %3161 = vmatprep.subr.mxu0 0.0
        %3162 = vmatpush1.xpose.msra.mxu0 0.0
        %3163 = vmatprep.subr.mxu0 0.0
        %3164 = vmatpush1.xpose.msra.mxu0 0.0
        %3165 = vmatprep.subr.mxu0 0.0
        %3166 = vmatpush1.xpose.msra.mxu0 0.0
        %3167 = vmatprep.subr.mxu0 0.0
        %3168 = vmatpush1.xpose.msra.mxu0 0.0
        %3169 = vmatprep.subr.mxu0 0.0
        %3170 = vmatpush1.xpose.msra.mxu0 0.0
        %3171 = vmatprep.subr.mxu0 0.0
        %3172 = vmatpush1.xpose.msra.mxu0 0.0
        %3173 = vmatprep.subr.mxu0 0.0
        %3174 = vmatpush1.xpose.msra.mxu0 0.0
        %3175 = vmatprep.subr.mxu0 0.0
        %3176 = vmatpush1.xpose.msra.mxu0 0.0
        %3177 = vmatprep.subr.mxu0 0.0
        %3178 = vmatpush1.xpose.msra.mxu0 0.0
        %3179 = vmatprep.subr.mxu0 0.0
        %3180 = vmatpush1.xpose.msra.mxu0 0.0
        %3181 = vmatprep.subr.mxu0 0.0
        %3182 = vmatpush1.xpose.msra.mxu0 0.0
        %3183 = vmatprep.subr.mxu0 0.0
        %3184 = vmatpush1.xpose.msra.mxu0 0.0
        %3185 = vmatprep.subr.mxu0 0.0
        %3186 = vmatpush1.xpose.msra.mxu0 0.0
        %3187 = vmatprep.subr.mxu0 0.0
        %3188 = vmatpush1.xpose.msra.mxu0 %v3157
        %3189 = vmatprep.subr.mxu0 0.0
        %3190 = vmatpush1.xpose.msra.mxu0 %v3155
        %3191 = vmatprep.subr.mxu0 0.0
        %3192 = vmatpush2.xpose.msra.mxu0 0.0
        %3193 = vmatprep.subr.mxu0 0.0
        %3194 = vmatpush2.xpose.msra.mxu0 0.0
        %3195 = vmatprep.subr.mxu0 0.0
        %3196 = vmatpush2.xpose.msra.mxu0 0.0
        %3197 = vmatprep.subr.mxu0 0.0
        %3198 = vmatpush2.xpose.msra.mxu0 0.0
        %3199 = vmatprep.subr.mxu0 0.0
        %3200 = vmatpush2.xpose.msra.mxu0 0.0
        %3201 = vmatprep.subr.mxu0 0.0
        %3202 = vmatpush2.xpose.msra.mxu0 0.0
        %3203 = vmatprep.subr.mxu0 0.0
        %3204 = vmatpush2.xpose.msra.mxu0 0.0
        %3205 = vmatprep.subr.mxu0 0.0
        %3206 = vmatpush2.xpose.msra.mxu0 0.0
        %3207 = vmatprep.subr.mxu0 0.0
        %3208 = vmatpush2.xpose.msra.mxu0 0.0
        %3209 = vmatprep.subr.mxu0 0.0
        %3210 = vmatpush2.xpose.msra.mxu0 0.0
        %3211 = vmatprep.subr.mxu0 0.0
        %3212 = vmatpush2.xpose.msra.mxu0 0.0
        %3213 = vmatprep.subr.mxu0 0.0
        %3214 = vmatpush2.xpose.msra.mxu0 0.0
        %3215 = vmatprep.subr.mxu0 0.0
        %3216 = vmatpush2.xpose.msra.mxu0 0.0
        %3217 = vmatprep.subr.mxu0 0.0
        %3218 = vmatpush2.xpose.msra.mxu0 0.0
        %3219 = vmatprep.subr.mxu0 0.0
        %3220 = vmatpush2.xpose.msra.mxu0 0.0
        %3221 = vmatprep.subr.mxu0 0.0
        %3222 = vmatpush2.xpose.msra.mxu0 0.0
        %3223 = vmatprep.mubr.f32.mxu0 0.0
        %3224 = vmatmul.mubr.f32.gmra.mxu0 %v3153
        %v3225 = vpop.f32.mrf.mxu0
        %v3226 = vadd.f32 0.0, %v3225
        %v3227 = vpop.f32.mrf.mxu0
        %3228 = vdwg.mxu0
        %v3229 = vmul.f32 %v3144, 0.35355338
        %v3230 = vmul.f32 %v3226, 0.35355338
        %v3231 = vsel %vm2719, -1e+09, %v3229
        %v3232 = vsel %vm2720, -1e+09, %v3230
        %v3233 = vsel %vm2446, %v3231, -inf
        %3234 = vmax.xlane.f32.xlu0 %v3233
        %v3235 = vpop.xlane.xlu0 %3234
        %v3236 = vsel %vm2446, %v3232, -inf
        %3237 = vmax.xlane.f32.xlu0 %v3236
        %v3238 = vpop.xlane.xlu0 %3237
        %v3239 = vsub.f32 %v3231, %v3235
        %v3240 = vsub.f32 %v3232, %v3238
        %v3241 = vmul.f32 %v3239, 1.442695
        %v3242 = vpow.pop %v3241
        %v3243 = vmul.f32 %v3240, 1.442695
        %v3244 = vpow.pop %v3243
        %v3245 = vsel %vm2446, %v3242, 0.0
        %3246 = vadd.xlane.f32.xlu0 %v3245
        %v3247 = vpop.xlane.xlu0 %3246
        %v3248 = vsel %vm2446, %v3244, 0.0
        %3249 = vadd.xlane.f32.xlu0 %v3248
        %v3250 = vpop.xlane.xlu0 %3249
        %v3251 = vrcp.pop %v3247
        %v3252 = vmul.f32 %v3242, %v3251
        %v3253 = vrcp.pop %v3250
        %v3254 = vmul.f32 %v3244, %v3253
        %s3255 = scalar_lea.vmem %s24, 16
        %3256 = vst.msk [vmem:[%s3255] sm:$0xff] %vm2446, %v3252
        %3257 = vst.msk [vmem:[%s3255 + $0x8] sm:$0xff] %vm2446, %v3254
        %3258 = vrot.lane.b32.xlu0 %v2685, 88
        %v3259 = vpop.permute.xlu0 %3258
        %3260 = vrot.lane.b32.xlu0 %v2690, 88
        %v3261 = vpop.permute.xlu0 %3260
        %v3265 = vsel %vm2446, %v3252, 0
        %3267 = vmatprep.subr.mxu0 0.0
        %3268 = vmatpush1.msra.mxu0 0.0
        %3269 = vmatprep.subr.mxu0 0.0
        %3270 = vmatpush1.msra.mxu0 0.0
        %3271 = vmatprep.subr.mxu0 0.0
        %3272 = vmatpush1.msra.mxu0 0.0
        %3273 = vmatprep.subr.mxu0 0.0
        %3274 = vmatpush1.msra.mxu0 0.0
        %3275 = vmatprep.subr.mxu0 0.0
        %3276 = vmatpush1.msra.mxu0 0.0
        %3277 = vmatprep.subr.mxu0 0.0
        %3278 = vmatpush1.msra.mxu0 0.0
        %3279 = vmatprep.subr.mxu0 0.0
        %3280 = vmatpush1.msra.mxu0 0.0
        %3281 = vmatprep.subr.mxu0 0.0
        %3282 = vmatpush1.msra.mxu0 0.0
        %3283 = vmatprep.subr.mxu0 0.0
        %3284 = vmatpush1.msra.mxu0 0.0
        %3285 = vmatprep.subr.mxu0 0.0
        %3286 = vmatpush1.msra.mxu0 0.0
        %3287 = vmatprep.subr.mxu0 0.0
        %3288 = vmatpush1.msra.mxu0 0.0
        %3289 = vmatprep.subr.mxu0 0.0
        %3290 = vmatpush1.msra.mxu0 0.0
        %3291 = vmatprep.subr.mxu0 0.0
        %3292 = vmatpush1.msra.mxu0 0.0
        %3293 = vmatprep.subr.mxu0 0.0
        %3294 = vmatpush1.msra.mxu0 0.0
        %3295 = vmatprep.subr.mxu0 0.0
        %3296 = vmatpush1.msra.mxu0 %v3261
        %3297 = vmatprep.subr.mxu0 0.0
        %3298 = vmatpush1.msra.mxu0 %v3259
        %3299 = vmatprep.subr.mxu0 0.0
        %3300 = vmatpush2.msra.mxu0 0.0
        %3301 = vmatprep.subr.mxu0 0.0
        %3302 = vmatpush2.msra.mxu0 0.0
        %3303 = vmatprep.subr.mxu0 0.0
        %3304 = vmatpush2.msra.mxu0 0.0
        %3305 = vmatprep.subr.mxu0 0.0
        %3306 = vmatpush2.msra.mxu0 0.0
        %3307 = vmatprep.subr.mxu0 0.0
        %3308 = vmatpush2.msra.mxu0 0.0
        %3309 = vmatprep.subr.mxu0 0.0
        %3310 = vmatpush2.msra.mxu0 0.0
        %3311 = vmatprep.subr.mxu0 0.0
        %3312 = vmatpush2.msra.mxu0 0.0
        %3313 = vmatprep.subr.mxu0 0.0
        %3314 = vmatpush2.msra.mxu0 0.0
        %3315 = vmatprep.subr.mxu0 0.0
        %3316 = vmatpush2.msra.mxu0 0.0
        %3317 = vmatprep.subr.mxu0 0.0
        %3318 = vmatpush2.msra.mxu0 0.0
        %3319 = vmatprep.subr.mxu0 0.0
        %3320 = vmatpush2.msra.mxu0 0.0
        %3321 = vmatprep.subr.mxu0 0.0
        %3322 = vmatpush2.msra.mxu0 0.0
        %3323 = vmatprep.subr.mxu0 0.0
        %3324 = vmatpush2.msra.mxu0 0.0
        %3325 = vmatprep.subr.mxu0 0.0
        %3326 = vmatpush2.msra.mxu0 0.0
        %3327 = vmatprep.subr.mxu0 0.0
        %3328 = vmatpush2.msra.mxu0 0.0
        %3329 = vmatprep.subr.mxu0 0.0
        %3330 = vmatpush2.msra.mxu0 0.0
        %3331 = vmatprep.mubr.f32.mxu0 0.0
        %3332 = vmatmul.mubr.f32.gmra.mxu0 %v3265
        %v3333 = vpop.f32.mrf.mxu0
        %v3334 = vadd.f32 0.0, %v3333
        %v3335 = vpop.f32.mrf.mxu0
        %3336 = vdwg.mxu0
        %3337 = vrot.lane.b32.xlu0 %v2695, 88
        %v3338 = vpop.permute.xlu0 %3337
        %3339 = vrot.lane.b32.xlu0 %v2700, 88
        %v3340 = vpop.permute.xlu0 %3339
        %v3344 = vsel %vm2446, %v3254, 0
        %3346 = vmatprep.subr.mxu0 0.0
        %3347 = vmatpush1.msra.mxu0 0.0
        %3348 = vmatprep.subr.mxu0 0.0
        %3349 = vmatpush1.msra.mxu0 0.0
        %3350 = vmatprep.subr.mxu0 0.0
        %3351 = vmatpush1.msra.mxu0 0.0
        %3352 = vmatprep.subr.mxu0 0.0
        %3353 = vmatpush1.msra.mxu0 0.0
        %3354 = vmatprep.subr.mxu0 0.0
        %3355 = vmatpush1.msra.mxu0 0.0
        %3356 = vmatprep.subr.mxu0 0.0
        %3357 = vmatpush1.msra.mxu0 0.0
        %3358 = vmatprep.subr.mxu0 0.0
        %3359 = vmatpush1.msra.mxu0 0.0
        %3360 = vmatprep.subr.mxu0 0.0
        %3361 = vmatpush1.msra.mxu0 0.0
        %3362 = vmatprep.subr.mxu0 0.0
        %3363 = vmatpush1.msra.mxu0 0.0
        %3364 = vmatprep.subr.mxu0 0.0
        %3365 = vmatpush1.msra.mxu0 0.0
        %3366 = vmatprep.subr.mxu0 0.0
        %3367 = vmatpush1.msra.mxu0 0.0
        %3368 = vmatprep.subr.mxu0 0.0
        %3369 = vmatpush1.msra.mxu0 0.0
        %3370 = vmatprep.subr.mxu0 0.0
        %3371 = vmatpush1.msra.mxu0 0.0
        %3372 = vmatprep.subr.mxu0 0.0
        %3373 = vmatpush1.msra.mxu0 0.0
        %3374 = vmatprep.subr.mxu0 0.0
        %3375 = vmatpush1.msra.mxu0 %v3340
        %3376 = vmatprep.subr.mxu0 0.0
        %3377 = vmatpush1.msra.mxu0 %v3338
        %3378 = vmatprep.subr.mxu0 0.0
        %3379 = vmatpush2.msra.mxu0 0.0
        %3380 = vmatprep.subr.mxu0 0.0
        %3381 = vmatpush2.msra.mxu0 0.0
        %3382 = vmatprep.subr.mxu0 0.0
        %3383 = vmatpush2.msra.mxu0 0.0
        %3384 = vmatprep.subr.mxu0 0.0
        %3385 = vmatpush2.msra.mxu0 0.0
        %3386 = vmatprep.subr.mxu0 0.0
        %3387 = vmatpush2.msra.mxu0 0.0
        %3388 = vmatprep.subr.mxu0 0.0
        %3389 = vmatpush2.msra.mxu0 0.0
        %3390 = vmatprep.subr.mxu0 0.0
        %3391 = vmatpush2.msra.mxu0 0.0
        %3392 = vmatprep.subr.mxu0 0.0
        %3393 = vmatpush2.msra.mxu0 0.0
        %3394 = vmatprep.subr.mxu0 0.0
        %3395 = vmatpush2.msra.mxu0 0.0
        %3396 = vmatprep.subr.mxu0 0.0
        %3397 = vmatpush2.msra.mxu0 0.0
        %3398 = vmatprep.subr.mxu0 0.0
        %3399 = vmatpush2.msra.mxu0 0.0
        %3400 = vmatprep.subr.mxu0 0.0
        %3401 = vmatpush2.msra.mxu0 0.0
        %3402 = vmatprep.subr.mxu0 0.0
        %3403 = vmatpush2.msra.mxu0 0.0
        %3404 = vmatprep.subr.mxu0 0.0
        %3405 = vmatpush2.msra.mxu0 0.0
        %3406 = vmatprep.subr.mxu0 0.0
        %3407 = vmatpush2.msra.mxu0 0.0
        %3408 = vmatprep.subr.mxu0 0.0
        %3409 = vmatpush2.msra.mxu0 0.0
        %3410 = vmatprep.mubr.f32.mxu0 0.0
        %3411 = vmatmul.mubr.f32.gmra.mxu0 %v3344
        %v3412 = vpop.f32.mrf.mxu0
        %v3413 = vadd.f32 0.0, %v3412
        %v3414 = vpop.f32.mrf.mxu0
        %3415 = vdwg.mxu0
        %3416 = vrot.lane.b32.xlu0 %v2583, 112
        %v3417 = vpop.permute.xlu0 %3416
        %3418 = vrot.lane.b32.xlu0 %v2685, 112
        %v3419 = vpop.permute.xlu0 %3418
        %3420 = vrot.lane.b32.xlu0 %v2690, 112
        %v3421 = vpop.permute.xlu0 %3420
        %v3422 = vsel %vm1088, %v3417, 0
        %v3424 = vsel %vm1088, %v3419, 0
        %v3426 = vsel %vm1088, %v3421, 0
        %3428 = vmatprep.subr.mxu0 0.0
        %3429 = vmatpush1.xpose.msra.mxu0 0.0
        %3430 = vmatprep.subr.mxu0 0.0
        %3431 = vmatpush1.xpose.msra.mxu0 0.0
        %3432 = vmatprep.subr.mxu0 0.0
        %3433 = vmatpush1.xpose.msra.mxu0 0.0
        %3434 = vmatprep.subr.mxu0 0.0
        %3435 = vmatpush1.xpose.msra.mxu0 0.0
        %3436 = vmatprep.subr.mxu0 0.0
        %3437 = vmatpush1.xpose.msra.mxu0 0.0
        %3438 = vmatprep.subr.mxu0 0.0
        %3439 = vmatpush1.xpose.msra.mxu0 0.0
        %3440 = vmatprep.subr.mxu0 0.0
        %3441 = vmatpush1.xpose.msra.mxu0 0.0
        %3442 = vmatprep.subr.mxu0 0.0
        %3443 = vmatpush1.xpose.msra.mxu0 0.0
        %3444 = vmatprep.subr.mxu0 0.0
        %3445 = vmatpush1.xpose.msra.mxu0 0.0
        %3446 = vmatprep.subr.mxu0 0.0
        %3447 = vmatpush1.xpose.msra.mxu0 0.0
        %3448 = vmatprep.subr.mxu0 0.0
        %3449 = vmatpush1.xpose.msra.mxu0 0.0
        %3450 = vmatprep.subr.mxu0 0.0
        %3451 = vmatpush1.xpose.msra.mxu0 0.0
        %3452 = vmatprep.subr.mxu0 0.0
        %3453 = vmatpush1.xpose.msra.mxu0 0.0
        %3454 = vmatprep.subr.mxu0 0.0
        %3455 = vmatpush1.xpose.msra.mxu0 0.0
        %3456 = vmatprep.subr.mxu0 0.0
        %3457 = vmatpush1.xpose.msra.mxu0 %v3426
        %3458 = vmatprep.subr.mxu0 0.0
        %3459 = vmatpush1.xpose.msra.mxu0 %v3424
        %3460 = vmatprep.subr.mxu0 0.0
        %3461 = vmatpush2.xpose.msra.mxu0 0.0
        %3462 = vmatprep.subr.mxu0 0.0
        %3463 = vmatpush2.xpose.msra.mxu0 0.0
        %3464 = vmatprep.subr.mxu0 0.0
        %3465 = vmatpush2.xpose.msra.mxu0 0.0
        %3466 = vmatprep.subr.mxu0 0.0
        %3467 = vmatpush2.xpose.msra.mxu0 0.0
        %3468 = vmatprep.subr.mxu0 0.0
        %3469 = vmatpush2.xpose.msra.mxu0 0.0
        %3470 = vmatprep.subr.mxu0 0.0
        %3471 = vmatpush2.xpose.msra.mxu0 0.0
        %3472 = vmatprep.subr.mxu0 0.0
        %3473 = vmatpush2.xpose.msra.mxu0 0.0
        %3474 = vmatprep.subr.mxu0 0.0
        %3475 = vmatpush2.xpose.msra.mxu0 0.0
        %3476 = vmatprep.subr.mxu0 0.0
        %3477 = vmatpush2.xpose.msra.mxu0 0.0
        %3478 = vmatprep.subr.mxu0 0.0
        %3479 = vmatpush2.xpose.msra.mxu0 0.0
        %3480 = vmatprep.subr.mxu0 0.0
        %3481 = vmatpush2.xpose.msra.mxu0 0.0
        %3482 = vmatprep.subr.mxu0 0.0
        %3483 = vmatpush2.xpose.msra.mxu0 0.0
        %3484 = vmatprep.subr.mxu0 0.0
        %3485 = vmatpush2.xpose.msra.mxu0 0.0
        %3486 = vmatprep.subr.mxu0 0.0
        %3487 = vmatpush2.xpose.msra.mxu0 0.0
        %3488 = vmatprep.subr.mxu0 0.0
        %3489 = vmatpush2.xpose.msra.mxu0 0.0
        %3490 = vmatprep.subr.mxu0 0.0
        %3491 = vmatpush2.xpose.msra.mxu0 0.0
        %3492 = vmatprep.mubr.f32.mxu0 0.0
        %3493 = vmatmul.mubr.f32.gmra.mxu0 %v3422
        %v3494 = vpop.f32.mrf.mxu0
        %v3495 = vadd.f32 0.0, %v3494
        %v3496 = vpop.f32.mrf.mxu0
        %3497 = vdwg.mxu0
        %3498 = vrot.lane.b32.xlu0 %v2588, 112
        %v3499 = vpop.permute.xlu0 %3498
        %3500 = vrot.lane.b32.xlu0 %v2695, 112
        %v3501 = vpop.permute.xlu0 %3500
        %3502 = vrot.lane.b32.xlu0 %v2700, 112
        %v3503 = vpop.permute.xlu0 %3502
        %v3504 = vsel %vm1088, %v3499, 0
        %v3506 = vsel %vm1088, %v3501, 0
        %v3508 = vsel %vm1088, %v3503, 0
        %3510 = vmatprep.subr.mxu0 0.0
        %3511 = vmatpush1.xpose.msra.mxu0 0.0
        %3512 = vmatprep.subr.mxu0 0.0
        %3513 = vmatpush1.xpose.msra.mxu0 0.0
        %3514 = vmatprep.subr.mxu0 0.0
        %3515 = vmatpush1.xpose.msra.mxu0 0.0
        %3516 = vmatprep.subr.mxu0 0.0
        %3517 = vmatpush1.xpose.msra.mxu0 0.0
        %3518 = vmatprep.subr.mxu0 0.0
        %3519 = vmatpush1.xpose.msra.mxu0 0.0
        %3520 = vmatprep.subr.mxu0 0.0
        %3521 = vmatpush1.xpose.msra.mxu0 0.0
        %3522 = vmatprep.subr.mxu0 0.0
        %3523 = vmatpush1.xpose.msra.mxu0 0.0
        %3524 = vmatprep.subr.mxu0 0.0
        %3525 = vmatpush1.xpose.msra.mxu0 0.0
        %3526 = vmatprep.subr.mxu0 0.0
        %3527 = vmatpush1.xpose.msra.mxu0 0.0
        %3528 = vmatprep.subr.mxu0 0.0
        %3529 = vmatpush1.xpose.msra.mxu0 0.0
        %3530 = vmatprep.subr.mxu0 0.0
        %3531 = vmatpush1.xpose.msra.mxu0 0.0
        %3532 = vmatprep.subr.mxu0 0.0
        %3533 = vmatpush1.xpose.msra.mxu0 0.0
        %3534 = vmatprep.subr.mxu0 0.0
        %3535 = vmatpush1.xpose.msra.mxu0 0.0
        %3536 = vmatprep.subr.mxu0 0.0
        %3537 = vmatpush1.xpose.msra.mxu0 0.0
        %3538 = vmatprep.subr.mxu0 0.0
        %3539 = vmatpush1.xpose.msra.mxu0 %v3508
        %3540 = vmatprep.subr.mxu0 0.0
        %3541 = vmatpush1.xpose.msra.mxu0 %v3506
        %3542 = vmatprep.subr.mxu0 0.0
        %3543 = vmatpush2.xpose.msra.mxu0 0.0
        %3544 = vmatprep.subr.mxu0 0.0
        %3545 = vmatpush2.xpose.msra.mxu0 0.0
        %3546 = vmatprep.subr.mxu0 0.0
        %3547 = vmatpush2.xpose.msra.mxu0 0.0
        %3548 = vmatprep.subr.mxu0 0.0
        %3549 = vmatpush2.xpose.msra.mxu0 0.0
        %3550 = vmatprep.subr.mxu0 0.0
        %3551 = vmatpush2.xpose.msra.mxu0 0.0
        %3552 = vmatprep.subr.mxu0 0.0
        %3553 = vmatpush2.xpose.msra.mxu0 0.0
        %3554 = vmatprep.subr.mxu0 0.0
        %3555 = vmatpush2.xpose.msra.mxu0 0.0
        %3556 = vmatprep.subr.mxu0 0.0
        %3557 = vmatpush2.xpose.msra.mxu0 0.0
        %3558 = vmatprep.subr.mxu0 0.0
        %3559 = vmatpush2.xpose.msra.mxu0 0.0
        %3560 = vmatprep.subr.mxu0 0.0
        %3561 = vmatpush2.xpose.msra.mxu0 0.0
        %3562 = vmatprep.subr.mxu0 0.0
        %3563 = vmatpush2.xpose.msra.mxu0 0.0
        %3564 = vmatprep.subr.mxu0 0.0
        %3565 = vmatpush2.xpose.msra.mxu0 0.0
        %3566 = vmatprep.subr.mxu0 0.0
        %3567 = vmatpush2.xpose.msra.mxu0 0.0
        %3568 = vmatprep.subr.mxu0 0.0
        %3569 = vmatpush2.xpose.msra.mxu0 0.0
        %3570 = vmatprep.subr.mxu0 0.0
        %3571 = vmatpush2.xpose.msra.mxu0 0.0
        %3572 = vmatprep.subr.mxu0 0.0
        %3573 = vmatpush2.xpose.msra.mxu0 0.0
        %3574 = vmatprep.mubr.f32.mxu0 0.0
        %3575 = vmatmul.mubr.f32.gmra.mxu0 %v3504
        %v3576 = vpop.f32.mrf.mxu0
        %v3577 = vadd.f32 0.0, %v3576
        %v3578 = vpop.f32.mrf.mxu0
        %3579 = vdwg.mxu0
        %v3580 = vmul.f32 %v3495, 0.35355338
        %v3581 = vmul.f32 %v3577, 0.35355338
        %v3582 = vsel %vm2719, -1e+09, %v3580
        %v3583 = vsel %vm2720, -1e+09, %v3581
        %v3584 = vsel %vm2446, %v3582, -inf
        %3585 = vmax.xlane.f32.xlu0 %v3584
        %v3586 = vpop.xlane.xlu0 %3585
        %v3587 = vsel %vm2446, %v3583, -inf
        %3588 = vmax.xlane.f32.xlu0 %v3587
        %v3589 = vpop.xlane.xlu0 %3588
        %v3590 = vsub.f32 %v3582, %v3586
        %v3591 = vsub.f32 %v3583, %v3589
        %v3592 = vmul.f32 %v3590, 1.442695
        %v3593 = vpow.pop %v3592
        %v3594 = vmul.f32 %v3591, 1.442695
        %v3595 = vpow.pop %v3594
        %v3596 = vsel %vm2446, %v3593, 0.0
        %3597 = vadd.xlane.f32.xlu0 %v3596
        %v3598 = vpop.xlane.xlu0 %3597
        %v3599 = vsel %vm2446, %v3595, 0.0
        %3600 = vadd.xlane.f32.xlu0 %v3599
        %v3601 = vpop.xlane.xlu0 %3600
        %v3602 = vrcp.pop %v3598
        %v3603 = vmul.f32 %v3593, %v3602
        %v3604 = vrcp.pop %v3601
        %v3605 = vmul.f32 %v3595, %v3604
        %s3606 = scalar_lea.vmem %s24, 32
        %3607 = vst.msk [vmem:[%s3606] sm:$0xff] %vm2446, %v3603
        %3608 = vst.msk [vmem:[%s3606 + $0x8] sm:$0xff] %vm2446, %v3605
        %3609 = vrot.lane.b32.xlu0 %v2685, 80
        %v3610 = vpop.permute.xlu0 %3609
        %3611 = vrot.lane.b32.xlu0 %v2690, 80
        %v3612 = vpop.permute.xlu0 %3611
        %v3616 = vsel %vm2446, %v3603, 0
        %3618 = vmatprep.subr.mxu0 0.0
        %3619 = vmatpush1.msra.mxu0 0.0
        %3620 = vmatprep.subr.mxu0 0.0
        %3621 = vmatpush1.msra.mxu0 0.0
        %3622 = vmatprep.subr.mxu0 0.0
        %3623 = vmatpush1.msra.mxu0 0.0
        %3624 = vmatprep.subr.mxu0 0.0
        %3625 = vmatpush1.msra.mxu0 0.0
        %3626 = vmatprep.subr.mxu0 0.0
        %3627 = vmatpush1.msra.mxu0 0.0
        %3628 = vmatprep.subr.mxu0 0.0
        %3629 = vmatpush1.msra.mxu0 0.0
        %3630 = vmatprep.subr.mxu0 0.0
        %3631 = vmatpush1.msra.mxu0 0.0
        %3632 = vmatprep.subr.mxu0 0.0
        %3633 = vmatpush1.msra.mxu0 0.0
        %3634 = vmatprep.subr.mxu0 0.0
        %3635 = vmatpush1.msra.mxu0 0.0
        %3636 = vmatprep.subr.mxu0 0.0
        %3637 = vmatpush1.msra.mxu0 0.0
        %3638 = vmatprep.subr.mxu0 0.0
        %3639 = vmatpush1.msra.mxu0 0.0
        %3640 = vmatprep.subr.mxu0 0.0
        %3641 = vmatpush1.msra.mxu0 0.0
        %3642 = vmatprep.subr.mxu0 0.0
        %3643 = vmatpush1.msra.mxu0 0.0
        %3644 = vmatprep.subr.mxu0 0.0
        %3645 = vmatpush1.msra.mxu0 0.0
        %3646 = vmatprep.subr.mxu0 0.0
        %3647 = vmatpush1.msra.mxu0 %v3612
        %3648 = vmatprep.subr.mxu0 0.0
        %3649 = vmatpush1.msra.mxu0 %v3610
        %3650 = vmatprep.subr.mxu0 0.0
        %3651 = vmatpush2.msra.mxu0 0.0
        %3652 = vmatprep.subr.mxu0 0.0
        %3653 = vmatpush2.msra.mxu0 0.0
        %3654 = vmatprep.subr.mxu0 0.0
        %3655 = vmatpush2.msra.mxu0 0.0
        %3656 = vmatprep.subr.mxu0 0.0
        %3657 = vmatpush2.msra.mxu0 0.0
        %3658 = vmatprep.subr.mxu0 0.0
        %3659 = vmatpush2.msra.mxu0 0.0
        %3660 = vmatprep.subr.mxu0 0.0
        %3661 = vmatpush2.msra.mxu0 0.0
        %3662 = vmatprep.subr.mxu0 0.0
        %3663 = vmatpush2.msra.mxu0 0.0
        %3664 = vmatprep.subr.mxu0 0.0
        %3665 = vmatpush2.msra.mxu0 0.0
        %3666 = vmatprep.subr.mxu0 0.0
        %3667 = vmatpush2.msra.mxu0 0.0
        %3668 = vmatprep.subr.mxu0 0.0
        %3669 = vmatpush2.msra.mxu0 0.0
        %3670 = vmatprep.subr.mxu0 0.0
        %3671 = vmatpush2.msra.mxu0 0.0
        %3672 = vmatprep.subr.mxu0 0.0
        %3673 = vmatpush2.msra.mxu0 0.0
        %3674 = vmatprep.subr.mxu0 0.0
        %3675 = vmatpush2.msra.mxu0 0.0
        %3676 = vmatprep.subr.mxu0 0.0
        %3677 = vmatpush2.msra.mxu0 0.0
        %3678 = vmatprep.subr.mxu0 0.0
        %3679 = vmatpush2.msra.mxu0 0.0
        %3680 = vmatprep.subr.mxu0 0.0
        %3681 = vmatpush2.msra.mxu0 0.0
        %3682 = vmatprep.mubr.f32.mxu0 0.0
        %3683 = vmatmul.mubr.f32.gmra.mxu0 %v3616
        %v3684 = vpop.f32.mrf.mxu0
        %v3685 = vadd.f32 0.0, %v3684
        %v3686 = vpop.f32.mrf.mxu0
        %3687 = vdwg.mxu0
        %3688 = vrot.lane.b32.xlu0 %v2695, 80
        %v3689 = vpop.permute.xlu0 %3688
        %3690 = vrot.lane.b32.xlu0 %v2700, 80
        %v3691 = vpop.permute.xlu0 %3690
        %v3695 = vsel %vm2446, %v3605, 0
        %3697 = vmatprep.subr.mxu0 0.0
        %3698 = vmatpush1.msra.mxu0 0.0
        %3699 = vmatprep.subr.mxu0 0.0
        %3700 = vmatpush1.msra.mxu0 0.0
        %3701 = vmatprep.subr.mxu0 0.0
        %3702 = vmatpush1.msra.mxu0 0.0
        %3703 = vmatprep.subr.mxu0 0.0
        %3704 = vmatpush1.msra.mxu0 0.0
        %3705 = vmatprep.subr.mxu0 0.0
        %3706 = vmatpush1.msra.mxu0 0.0
        %3707 = vmatprep.subr.mxu0 0.0
        %3708 = vmatpush1.msra.mxu0 0.0
        %3709 = vmatprep.subr.mxu0 0.0
        %3710 = vmatpush1.msra.mxu0 0.0
        %3711 = vmatprep.subr.mxu0 0.0
        %3712 = vmatpush1.msra.mxu0 0.0
        %3713 = vmatprep.subr.mxu0 0.0
        %3714 = vmatpush1.msra.mxu0 0.0
        %3715 = vmatprep.subr.mxu0 0.0
        %3716 = vmatpush1.msra.mxu0 0.0
        %3717 = vmatprep.subr.mxu0 0.0
        %3718 = vmatpush1.msra.mxu0 0.0
        %3719 = vmatprep.subr.mxu0 0.0
        %3720 = vmatpush1.msra.mxu0 0.0
        %3721 = vmatprep.subr.mxu0 0.0
        %3722 = vmatpush1.msra.mxu0 0.0
        %3723 = vmatprep.subr.mxu0 0.0
        %3724 = vmatpush1.msra.mxu0 0.0
        %3725 = vmatprep.subr.mxu0 0.0
        %3726 = vmatpush1.msra.mxu0 %v3691
        %3727 = vmatprep.subr.mxu0 0.0
        %3728 = vmatpush1.msra.mxu0 %v3689
        %3729 = vmatprep.subr.mxu0 0.0
        %3730 = vmatpush2.msra.mxu0 0.0
        %3731 = vmatprep.subr.mxu0 0.0
        %3732 = vmatpush2.msra.mxu0 0.0
        %3733 = vmatprep.subr.mxu0 0.0
        %3734 = vmatpush2.msra.mxu0 0.0
        %3735 = vmatprep.subr.mxu0 0.0
        %3736 = vmatpush2.msra.mxu0 0.0
        %3737 = vmatprep.subr.mxu0 0.0
        %3738 = vmatpush2.msra.mxu0 0.0
        %3739 = vmatprep.subr.mxu0 0.0
        %3740 = vmatpush2.msra.mxu0 0.0
        %3741 = vmatprep.subr.mxu0 0.0
        %3742 = vmatpush2.msra.mxu0 0.0
        %3743 = vmatprep.subr.mxu0 0.0
        %3744 = vmatpush2.msra.mxu0 0.0
        %3745 = vmatprep.subr.mxu0 0.0
        %3746 = vmatpush2.msra.mxu0 0.0
        %3747 = vmatprep.subr.mxu0 0.0
        %3748 = vmatpush2.msra.mxu0 0.0
        %3749 = vmatprep.subr.mxu0 0.0
        %3750 = vmatpush2.msra.mxu0 0.0
        %3751 = vmatprep.subr.mxu0 0.0
        %3752 = vmatpush2.msra.mxu0 0.0
        %3753 = vmatprep.subr.mxu0 0.0
        %3754 = vmatpush2.msra.mxu0 0.0
        %3755 = vmatprep.subr.mxu0 0.0
        %3756 = vmatpush2.msra.mxu0 0.0
        %3757 = vmatprep.subr.mxu0 0.0
        %3758 = vmatpush2.msra.mxu0 0.0
        %3759 = vmatprep.subr.mxu0 0.0
        %3760 = vmatpush2.msra.mxu0 0.0
        %3761 = vmatprep.mubr.f32.mxu0 0.0
        %3762 = vmatmul.mubr.f32.gmra.mxu0 %v3695
        %v3763 = vpop.f32.mrf.mxu0
        %v3764 = vadd.f32 0.0, %v3763
        %v3765 = vpop.f32.mrf.mxu0
        %3766 = vdwg.mxu0
        %3767 = vrot.lane.b32.xlu0 %v2583, 104
        %v3768 = vpop.permute.xlu0 %3767
        %3769 = vrot.lane.b32.xlu0 %v2685, 104
        %v3770 = vpop.permute.xlu0 %3769
        %3771 = vrot.lane.b32.xlu0 %v2690, 104
        %v3772 = vpop.permute.xlu0 %3771
        %v3773 = vsel %vm1088, %v3768, 0
        %v3775 = vsel %vm1088, %v3770, 0
        %v3777 = vsel %vm1088, %v3772, 0
        %3779 = vmatprep.subr.mxu0 0.0
        %3780 = vmatpush1.xpose.msra.mxu0 0.0
        %3781 = vmatprep.subr.mxu0 0.0
        %3782 = vmatpush1.xpose.msra.mxu0 0.0
        %3783 = vmatprep.subr.mxu0 0.0
        %3784 = vmatpush1.xpose.msra.mxu0 0.0
        %3785 = vmatprep.subr.mxu0 0.0
        %3786 = vmatpush1.xpose.msra.mxu0 0.0
        %3787 = vmatprep.subr.mxu0 0.0
        %3788 = vmatpush1.xpose.msra.mxu0 0.0
        %3789 = vmatprep.subr.mxu0 0.0
        %3790 = vmatpush1.xpose.msra.mxu0 0.0
        %3791 = vmatprep.subr.mxu0 0.0
        %3792 = vmatpush1.xpose.msra.mxu0 0.0
        %3793 = vmatprep.subr.mxu0 0.0
        %3794 = vmatpush1.xpose.msra.mxu0 0.0
        %3795 = vmatprep.subr.mxu0 0.0
        %3796 = vmatpush1.xpose.msra.mxu0 0.0
        %3797 = vmatprep.subr.mxu0 0.0
        %3798 = vmatpush1.xpose.msra.mxu0 0.0
        %3799 = vmatprep.subr.mxu0 0.0
        %3800 = vmatpush1.xpose.msra.mxu0 0.0
        %3801 = vmatprep.subr.mxu0 0.0
        %3802 = vmatpush1.xpose.msra.mxu0 0.0
        %3803 = vmatprep.subr.mxu0 0.0
        %3804 = vmatpush1.xpose.msra.mxu0 0.0
        %3805 = vmatprep.subr.mxu0 0.0
        %3806 = vmatpush1.xpose.msra.mxu0 0.0
        %3807 = vmatprep.subr.mxu0 0.0
        %3808 = vmatpush1.xpose.msra.mxu0 %v3777
        %3809 = vmatprep.subr.mxu0 0.0
        %3810 = vmatpush1.xpose.msra.mxu0 %v3775
        %3811 = vmatprep.subr.mxu0 0.0
        %3812 = vmatpush2.xpose.msra.mxu0 0.0
        %3813 = vmatprep.subr.mxu0 0.0
        %3814 = vmatpush2.xpose.msra.mxu0 0.0
        %3815 = vmatprep.subr.mxu0 0.0
        %3816 = vmatpush2.xpose.msra.mxu0 0.0
        %3817 = vmatprep.subr.mxu0 0.0
        %3818 = vmatpush2.xpose.msra.mxu0 0.0
        %3819 = vmatprep.subr.mxu0 0.0
        %3820 = vmatpush2.xpose.msra.mxu0 0.0
        %3821 = vmatprep.subr.mxu0 0.0
        %3822 = vmatpush2.xpose.msra.mxu0 0.0
        %3823 = vmatprep.subr.mxu0 0.0
        %3824 = vmatpush2.xpose.msra.mxu0 0.0
        %3825 = vmatprep.subr.mxu0 0.0
        %3826 = vmatpush2.xpose.msra.mxu0 0.0
        %3827 = vmatprep.subr.mxu0 0.0
        %3828 = vmatpush2.xpose.msra.mxu0 0.0
        %3829 = vmatprep.subr.mxu0 0.0
        %3830 = vmatpush2.xpose.msra.mxu0 0.0
        %3831 = vmatprep.subr.mxu0 0.0
        %3832 = vmatpush2.xpose.msra.mxu0 0.0
        %3833 = vmatprep.subr.mxu0 0.0
        %3834 = vmatpush2.xpose.msra.mxu0 0.0
        %3835 = vmatprep.subr.mxu0 0.0
        %3836 = vmatpush2.xpose.msra.mxu0 0.0
        %3837 = vmatprep.subr.mxu0 0.0
        %3838 = vmatpush2.xpose.msra.mxu0 0.0
        %3839 = vmatprep.subr.mxu0 0.0
        %3840 = vmatpush2.xpose.msra.mxu0 0.0
        %3841 = vmatprep.subr.mxu0 0.0
        %3842 = vmatpush2.xpose.msra.mxu0 0.0
        %3843 = vmatprep.mubr.f32.mxu0 0.0
        %3844 = vmatmul.mubr.f32.gmra.mxu0 %v3773
        %v3845 = vpop.f32.mrf.mxu0
        %v3846 = vadd.f32 0.0, %v3845
        %v3847 = vpop.f32.mrf.mxu0
        %3848 = vdwg.mxu0
        %3849 = vrot.lane.b32.xlu0 %v2588, 104
        %v3850 = vpop.permute.xlu0 %3849
        %3851 = vrot.lane.b32.xlu0 %v2695, 104
        %v3852 = vpop.permute.xlu0 %3851
        %3853 = vrot.lane.b32.xlu0 %v2700, 104
        %v3854 = vpop.permute.xlu0 %3853
        %v3855 = vsel %vm1088, %v3850, 0
        %v3857 = vsel %vm1088, %v3852, 0
        %v3859 = vsel %vm1088, %v3854, 0
        %3861 = vmatprep.subr.mxu0 0.0
        %3862 = vmatpush1.xpose.msra.mxu0 0.0
        %3863 = vmatprep.subr.mxu0 0.0
        %3864 = vmatpush1.xpose.msra.mxu0 0.0
        %3865 = vmatprep.subr.mxu0 0.0
        %3866 = vmatpush1.xpose.msra.mxu0 0.0
        %3867 = vmatprep.subr.mxu0 0.0
        %3868 = vmatpush1.xpose.msra.mxu0 0.0
        %3869 = vmatprep.subr.mxu0 0.0
        %3870 = vmatpush1.xpose.msra.mxu0 0.0
        %3871 = vmatprep.subr.mxu0 0.0
        %3872 = vmatpush1.xpose.msra.mxu0 0.0
        %3873 = vmatprep.subr.mxu0 0.0
        %3874 = vmatpush1.xpose.msra.mxu0 0.0
        %3875 = vmatprep.subr.mxu0 0.0
        %3876 = vmatpush1.xpose.msra.mxu0 0.0
        %3877 = vmatprep.subr.mxu0 0.0
        %3878 = vmatpush1.xpose.msra.mxu0 0.0
        %3879 = vmatprep.subr.mxu0 0.0
        %3880 = vmatpush1.xpose.msra.mxu0 0.0
        %3881 = vmatprep.subr.mxu0 0.0
        %3882 = vmatpush1.xpose.msra.mxu0 0.0
        %3883 = vmatprep.subr.mxu0 0.0
        %3884 = vmatpush1.xpose.msra.mxu0 0.0
        %3885 = vmatprep.subr.mxu0 0.0
        %3886 = vmatpush1.xpose.msra.mxu0 0.0
        %3887 = vmatprep.subr.mxu0 0.0
        %3888 = vmatpush1.xpose.msra.mxu0 0.0
        %3889 = vmatprep.subr.mxu0 0.0
        %3890 = vmatpush1.xpose.msra.mxu0 %v3859
        %3891 = vmatprep.subr.mxu0 0.0
        %3892 = vmatpush1.xpose.msra.mxu0 %v3857
        %3893 = vmatprep.subr.mxu0 0.0
        %3894 = vmatpush2.xpose.msra.mxu0 0.0
        %3895 = vmatprep.subr.mxu0 0.0
        %3896 = vmatpush2.xpose.msra.mxu0 0.0
        %3897 = vmatprep.subr.mxu0 0.0
        %3898 = vmatpush2.xpose.msra.mxu0 0.0
        %3899 = vmatprep.subr.mxu0 0.0
        %3900 = vmatpush2.xpose.msra.mxu0 0.0
        %3901 = vmatprep.subr.mxu0 0.0
        %3902 = vmatpush2.xpose.msra.mxu0 0.0
        %3903 = vmatprep.subr.mxu0 0.0
        %3904 = vmatpush2.xpose.msra.mxu0 0.0
        %3905 = vmatprep.subr.mxu0 0.0
        %3906 = vmatpush2.xpose.msra.mxu0 0.0
        %3907 = vmatprep.subr.mxu0 0.0
        %3908 = vmatpush2.xpose.msra.mxu0 0.0
        %3909 = vmatprep.subr.mxu0 0.0
        %3910 = vmatpush2.xpose.msra.mxu0 0.0
        %3911 = vmatprep.subr.mxu0 0.0
        %3912 = vmatpush2.xpose.msra.mxu0 0.0
        %3913 = vmatprep.subr.mxu0 0.0
        %3914 = vmatpush2.xpose.msra.mxu0 0.0
        %3915 = vmatprep.subr.mxu0 0.0
        %3916 = vmatpush2.xpose.msra.mxu0 0.0
        %3917 = vmatprep.subr.mxu0 0.0
        %3918 = vmatpush2.xpose.msra.mxu0 0.0
        %3919 = vmatprep.subr.mxu0 0.0
        %3920 = vmatpush2.xpose.msra.mxu0 0.0
        %3921 = vmatprep.subr.mxu0 0.0
        %3922 = vmatpush2.xpose.msra.mxu0 0.0
        %3923 = vmatprep.subr.mxu0 0.0
        %3924 = vmatpush2.xpose.msra.mxu0 0.0
        %3925 = vmatprep.mubr.f32.mxu0 0.0
        %3926 = vmatmul.mubr.f32.gmra.mxu0 %v3855
        %v3927 = vpop.f32.mrf.mxu0
        %v3928 = vadd.f32 0.0, %v3927
        %v3929 = vpop.f32.mrf.mxu0
        %3930 = vdwg.mxu0
        %v3931 = vmul.f32 %v3846, 0.35355338
        %v3932 = vmul.f32 %v3928, 0.35355338
        %v3933 = vsel %vm2719, -1e+09, %v3931
        %v3934 = vsel %vm2720, -1e+09, %v3932
        %v3935 = vsel %vm2446, %v3933, -inf
        %3936 = vmax.xlane.f32.xlu0 %v3935
        %v3937 = vpop.xlane.xlu0 %3936
        %v3938 = vsel %vm2446, %v3934, -inf
        %3939 = vmax.xlane.f32.xlu0 %v3938
        %v3940 = vpop.xlane.xlu0 %3939
        %v3941 = vsub.f32 %v3933, %v3937
        %v3942 = vsub.f32 %v3934, %v3940
        %v3943 = vmul.f32 %v3941, 1.442695
        %v3944 = vpow.pop %v3943
        %v3945 = vmul.f32 %v3942, 1.442695
        %v3946 = vpow.pop %v3945
        %v3947 = vsel %vm2446, %v3944, 0.0
        %3948 = vadd.xlane.f32.xlu0 %v3947
        %v3949 = vpop.xlane.xlu0 %3948
        %v3950 = vsel %vm2446, %v3946, 0.0
        %3951 = vadd.xlane.f32.xlu0 %v3950
        %v3952 = vpop.xlane.xlu0 %3951
        %v3953 = vrcp.pop %v3949
        %v3954 = vmul.f32 %v3944, %v3953
        %v3955 = vrcp.pop %v3952
        %v3956 = vmul.f32 %v3946, %v3955
        %s3957 = scalar_lea.vmem %s24, 48
        %3958 = vst.msk [vmem:[%s3957] sm:$0xff] %vm2446, %v3954
        %3959 = vst.msk [vmem:[%s3957 + $0x8] sm:$0xff] %vm2446, %v3956
        %3960 = vrot.lane.b32.xlu0 %v2685, 72
        %v3961 = vpop.permute.xlu0 %3960
        %3962 = vrot.lane.b32.xlu0 %v2690, 72
        %v3963 = vpop.permute.xlu0 %3962
        %v3967 = vsel %vm2446, %v3954, 0
        %3969 = vmatprep.subr.mxu0 0.0
        %3970 = vmatpush1.msra.mxu0 0.0
        %3971 = vmatprep.subr.mxu0 0.0
        %3972 = vmatpush1.msra.mxu0 0.0
        %3973 = vmatprep.subr.mxu0 0.0
        %3974 = vmatpush1.msra.mxu0 0.0
        %3975 = vmatprep.subr.mxu0 0.0
        %3976 = vmatpush1.msra.mxu0 0.0
        %3977 = vmatprep.subr.mxu0 0.0
        %3978 = vmatpush1.msra.mxu0 0.0
        %3979 = vmatprep.subr.mxu0 0.0
        %3980 = vmatpush1.msra.mxu0 0.0
        %3981 = vmatprep.subr.mxu0 0.0
        %3982 = vmatpush1.msra.mxu0 0.0
        %3983 = vmatprep.subr.mxu0 0.0
        %3984 = vmatpush1.msra.mxu0 0.0
        %3985 = vmatprep.subr.mxu0 0.0
        %3986 = vmatpush1.msra.mxu0 0.0
        %3987 = vmatprep.subr.mxu0 0.0
        %3988 = vmatpush1.msra.mxu0 0.0
        %3989 = vmatprep.subr.mxu0 0.0
        %3990 = vmatpush1.msra.mxu0 0.0
        %3991 = vmatprep.subr.mxu0 0.0
        %3992 = vmatpush1.msra.mxu0 0.0
        %3993 = vmatprep.subr.mxu0 0.0
        %3994 = vmatpush1.msra.mxu0 0.0
        %3995 = vmatprep.subr.mxu0 0.0
        %3996 = vmatpush1.msra.mxu0 0.0
        %3997 = vmatprep.subr.mxu0 0.0
        %3998 = vmatpush1.msra.mxu0 %v3963
        %3999 = vmatprep.subr.mxu0 0.0
        %4000 = vmatpush1.msra.mxu0 %v3961
        %4001 = vmatprep.subr.mxu0 0.0
        %4002 = vmatpush2.msra.mxu0 0.0
        %4003 = vmatprep.subr.mxu0 0.0
        %4004 = vmatpush2.msra.mxu0 0.0
        %4005 = vmatprep.subr.mxu0 0.0
        %4006 = vmatpush2.msra.mxu0 0.0
        %4007 = vmatprep.subr.mxu0 0.0
        %4008 = vmatpush2.msra.mxu0 0.0
        %4009 = vmatprep.subr.mxu0 0.0
        %4010 = vmatpush2.msra.mxu0 0.0
        %4011 = vmatprep.subr.mxu0 0.0
        %4012 = vmatpush2.msra.mxu0 0.0
        %4013 = vmatprep.subr.mxu0 0.0
        %4014 = vmatpush2.msra.mxu0 0.0
        %4015 = vmatprep.subr.mxu0 0.0
        %4016 = vmatpush2.msra.mxu0 0.0
        %4017 = vmatprep.subr.mxu0 0.0
        %4018 = vmatpush2.msra.mxu0 0.0
        %4019 = vmatprep.subr.mxu0 0.0
        %4020 = vmatpush2.msra.mxu0 0.0
        %4021 = vmatprep.subr.mxu0 0.0
        %4022 = vmatpush2.msra.mxu0 0.0
        %4023 = vmatprep.subr.mxu0 0.0
        %4024 = vmatpush2.msra.mxu0 0.0
        %4025 = vmatprep.subr.mxu0 0.0
        %4026 = vmatpush2.msra.mxu0 0.0
        %4027 = vmatprep.subr.mxu0 0.0
        %4028 = vmatpush2.msra.mxu0 0.0
        %4029 = vmatprep.subr.mxu0 0.0
        %4030 = vmatpush2.msra.mxu0 0.0
        %4031 = vmatprep.subr.mxu0 0.0
        %4032 = vmatpush2.msra.mxu0 0.0
        %4033 = vmatprep.mubr.f32.mxu0 0.0
        %4034 = vmatmul.mubr.f32.gmra.mxu0 %v3967
        %v4035 = vpop.f32.mrf.mxu0
        %v4036 = vadd.f32 0.0, %v4035
        %v4037 = vpop.f32.mrf.mxu0
        %4038 = vdwg.mxu0
        %4039 = vrot.lane.b32.xlu0 %v2695, 72
        %v4040 = vpop.permute.xlu0 %4039
        %4041 = vrot.lane.b32.xlu0 %v2700, 72
        %v4042 = vpop.permute.xlu0 %4041
        %v4046 = vsel %vm2446, %v3956, 0
        %4048 = vmatprep.subr.mxu0 0.0
        %4049 = vmatpush1.msra.mxu0 0.0
        %4050 = vmatprep.subr.mxu0 0.0
        %4051 = vmatpush1.msra.mxu0 0.0
        %4052 = vmatprep.subr.mxu0 0.0
        %4053 = vmatpush1.msra.mxu0 0.0
        %4054 = vmatprep.subr.mxu0 0.0
        %4055 = vmatpush1.msra.mxu0 0.0
        %4056 = vmatprep.subr.mxu0 0.0
        %4057 = vmatpush1.msra.mxu0 0.0
        %4058 = vmatprep.subr.mxu0 0.0
        %4059 = vmatpush1.msra.mxu0 0.0
        %4060 = vmatprep.subr.mxu0 0.0
        %4061 = vmatpush1.msra.mxu0 0.0
        %4062 = vmatprep.subr.mxu0 0.0
        %4063 = vmatpush1.msra.mxu0 0.0
        %4064 = vmatprep.subr.mxu0 0.0
        %4065 = vmatpush1.msra.mxu0 0.0
        %4066 = vmatprep.subr.mxu0 0.0
        %4067 = vmatpush1.msra.mxu0 0.0
        %4068 = vmatprep.subr.mxu0 0.0
        %4069 = vmatpush1.msra.mxu0 0.0
        %4070 = vmatprep.subr.mxu0 0.0
        %4071 = vmatpush1.msra.mxu0 0.0
        %4072 = vmatprep.subr.mxu0 0.0
        %4073 = vmatpush1.msra.mxu0 0.0
        %4074 = vmatprep.subr.mxu0 0.0
        %4075 = vmatpush1.msra.mxu0 0.0
        %4076 = vmatprep.subr.mxu0 0.0
        %4077 = vmatpush1.msra.mxu0 %v4042
        %4078 = vmatprep.subr.mxu0 0.0
        %4079 = vmatpush1.msra.mxu0 %v4040
        %4080 = vmatprep.subr.mxu0 0.0
        %4081 = vmatpush2.msra.mxu0 0.0
        %4082 = vmatprep.subr.mxu0 0.0
        %4083 = vmatpush2.msra.mxu0 0.0
        %4084 = vmatprep.subr.mxu0 0.0
        %4085 = vmatpush2.msra.mxu0 0.0
        %4086 = vmatprep.subr.mxu0 0.0
        %4087 = vmatpush2.msra.mxu0 0.0
        %4088 = vmatprep.subr.mxu0 0.0
        %4089 = vmatpush2.msra.mxu0 0.0
        %4090 = vmatprep.subr.mxu0 0.0
        %4091 = vmatpush2.msra.mxu0 0.0
        %4092 = vmatprep.subr.mxu0 0.0
        %4093 = vmatpush2.msra.mxu0 0.0
        %4094 = vmatprep.subr.mxu0 0.0
        %4095 = vmatpush2.msra.mxu0 0.0
        %4096 = vmatprep.subr.mxu0 0.0
        %4097 = vmatpush2.msra.mxu0 0.0
        %4098 = vmatprep.subr.mxu0 0.0
        %4099 = vmatpush2.msra.mxu0 0.0
        %4100 = vmatprep.subr.mxu0 0.0
        %4101 = vmatpush2.msra.mxu0 0.0
        %4102 = vmatprep.subr.mxu0 0.0
        %4103 = vmatpush2.msra.mxu0 0.0
        %4104 = vmatprep.subr.mxu0 0.0
        %4105 = vmatpush2.msra.mxu0 0.0
        %4106 = vmatprep.subr.mxu0 0.0
        %4107 = vmatpush2.msra.mxu0 0.0
        %4108 = vmatprep.subr.mxu0 0.0
        %4109 = vmatpush2.msra.mxu0 0.0
        %4110 = vmatprep.subr.mxu0 0.0
        %4111 = vmatpush2.msra.mxu0 0.0
        %4112 = vmatprep.mubr.f32.mxu0 0.0
        %4113 = vmatmul.mubr.f32.gmra.mxu0 %v4046
        %v4114 = vpop.f32.mrf.mxu0
        %v4115 = vadd.f32 0.0, %v4114
        %v4116 = vpop.f32.mrf.mxu0
        %4117 = vdwg.mxu0
        %4120 = vrot.lane.b32.xlu0 %v3334, 8
        %v4121 = vpop.permute.xlu0 %4120
        %4122 = vrot.lane.b32.xlu0 %v3413, 8
        %v4123 = vpop.permute.xlu0 %4122
        %4128 = vrot.lane.b32.xlu0 %v3685, 16
        %v4129 = vpop.permute.xlu0 %4128
        %4130 = vrot.lane.b32.xlu0 %v3764, 16
        %v4131 = vpop.permute.xlu0 %4130
        %4136 = vrot.lane.b32.xlu0 %v4036, 24
        %v4137 = vpop.permute.xlu0 %4136
        %4138 = vrot.lane.b32.xlu0 %v4115, 24
        %v4139 = vpop.permute.xlu0 %4138
        %v4142 = vsel %vm1088, %v2983, %v4121
        %v4143 = vsel %vm1088, %v3062, %v4123
        %v4144 = vsel %vm2446, %v4142, %v4129
        %v4145 = vsel %vm2446, %v4143, %v4131
        %v4146 = vsel %vm2449, %v4144, %v4137
        %v4147 = vsel %vm2449, %v4145, %v4139
        %v4148 = vadd.f32 %v4146, %v2497
        %v4149 = vadd.f32 %v4147, %v2498
        %v4150 = vld [vmem:[%s930] sm:$0x1]
        %v4151 = vld [vmem:[%s933] sm:$0x1]
        %v4152 = vsel %vm978, %v4148, 0.0
        %4153 = vadd.xlane.f32.xlu0 %v4152
        %v4154 = vpop.xlane.xlu0 %4153
        %v4155 = vsel %vm978, %v4149, 0.0
        %4156 = vadd.xlane.f32.xlu0 %v4155
        %v4157 = vpop.xlane.xlu0 %4156
        %v4158 = vmul.f32 %v4154, %v2462
        %v4159 = vmul.f32 %v4157, %v2462
        %v4160 = vsub.f32 %v4148, %v4158
        %v4161 = vsub.f32 %v4149, %v4159
        %v4162 = vmul.f32 %v4160, %v4160
        %v4163 = vmul.f32 %v4161, %v4161
        %v4164 = vsel %vm978, %v4162, 0.0
        %4165 = vadd.xlane.f32.xlu0 %v4164
        %v4166 = vpop.xlane.xlu0 %4165
        %v4167 = vsel %vm978, %v4163, 0.0
        %4168 = vadd.xlane.f32.xlu0 %v4167
        %v4169 = vpop.xlane.xlu0 %4168
        %v4170 = vmul.f32 %v4166, %v2462
        %v4171 = vmul.f32 %v4169, %v2462
        %v4172 = vadd.f32 %v4170, 1e-05
        %v4173 = vadd.f32 %v4171, 1e-05
        %v4174 = vrsqrt.pop %v4172
        %v4175 = vrsqrt.pop %v4173
        %v4176 = vmul.f32 %v4160, %v4174
        %v4177 = vmul.f32 %v4161, %v4175
        %v4179 = vlaneseq
        %v4180 = vshrl.u32 %v4179, 7
        %v4181 = vsub.s32 0, %v4180
        %v4182 = vrot.slane %v4150, %v4181
        %v4184 = vmul.f32 %v4176, %v4182
        %v4185 = vmul.f32 %v4177, %v4182
        %v4187 = vlaneseq
        %v4188 = vshrl.u32 %v4187, 7
        %v4189 = vsub.s32 0, %v4188
        %v4190 = vrot.slane %v4151, %v4189
        %v4192 = vadd.f32 %v4184, %v4190
        %v4193 = vadd.f32 %v4185, %v4190
        %v4194 = vld [vmem:[%s938] sm:$0xff]
        %v4195 = vld [vmem:[%s938 + $0x8] sm:$0xff]
        %v4196 = vld [vmem:[%s938 + $0x10] sm:$0xff]
        %v4197 = vld [vmem:[%s938 + $0x18] sm:$0xff]
        %v4198 = vld [vmem:[%s941] sm:$0x1]
        %v4200 = vlaneseq
        %v4201 = vshrl.u32 %v4200, 7
        %v4202 = vsub.s32 0, %v4201
        %v4203 = vrot.slane %v4198, %v4202
        %v4206 = vsel %vm978, %v4192, 0
        %v4209 = vsel %vm978, %v4193, 0
        %4211 = vmatprep.subr.mxu0 0.0
        %4212 = vmatpush1.msra.mxu0 0.0
        %4213 = vmatprep.subr.mxu0 0.0
        %4214 = vmatpush1.msra.mxu0 0.0
        %4215 = vmatprep.subr.mxu0 0.0
        %4216 = vmatpush1.msra.mxu0 0.0
        %4217 = vmatprep.subr.mxu0 0.0
        %4218 = vmatpush1.msra.mxu0 0.0
        %4219 = vmatprep.subr.mxu0 0.0
        %4220 = vmatpush1.msra.mxu0 0.0
        %4221 = vmatprep.subr.mxu0 0.0
        %4222 = vmatpush1.msra.mxu0 0.0
        %4223 = vmatprep.subr.mxu0 0.0
        %4224 = vmatpush1.msra.mxu0 0.0
        %4225 = vmatprep.subr.mxu0 0.0
        %4226 = vmatpush1.msra.mxu0 0.0
        %4227 = vmatprep.subr.mxu0 0.0
        %4228 = vmatpush1.msra.mxu0 0.0
        %4229 = vmatprep.subr.mxu0 0.0
        %4230 = vmatpush1.msra.mxu0 0.0
        %4231 = vmatprep.subr.mxu0 0.0
        %4232 = vmatpush1.msra.mxu0 0.0
        %4233 = vmatprep.subr.mxu0 0.0
        %4234 = vmatpush1.msra.mxu0 0.0
        %4235 = vmatprep.subr.mxu0 0.0
        %4236 = vmatpush1.msra.mxu0 %v4197
        %4237 = vmatprep.subr.mxu0 0.0
        %4238 = vmatpush1.msra.mxu0 %v4196
        %4239 = vmatprep.subr.mxu0 0.0
        %4240 = vmatpush1.msra.mxu0 %v4195
        %4241 = vmatprep.subr.mxu0 0.0
        %4242 = vmatpush1.msra.mxu0 %v4194
        %4243 = vmatprep.subr.mxu0 0.0
        %4244 = vmatpush2.msra.mxu0 0.0
        %4245 = vmatprep.subr.mxu0 0.0
        %4246 = vmatpush2.msra.mxu0 0.0
        %4247 = vmatprep.subr.mxu0 0.0
        %4248 = vmatpush2.msra.mxu0 0.0
        %4249 = vmatprep.subr.mxu0 0.0
        %4250 = vmatpush2.msra.mxu0 0.0
        %4251 = vmatprep.subr.mxu0 0.0
        %4252 = vmatpush2.msra.mxu0 0.0
        %4253 = vmatprep.subr.mxu0 0.0
        %4254 = vmatpush2.msra.mxu0 0.0
        %4255 = vmatprep.subr.mxu0 0.0
        %4256 = vmatpush2.msra.mxu0 0.0
        %4257 = vmatprep.subr.mxu0 0.0
        %4258 = vmatpush2.msra.mxu0 0.0
        %4259 = vmatprep.subr.mxu0 0.0
        %4260 = vmatpush2.msra.mxu0 0.0
        %4261 = vmatprep.subr.mxu0 0.0
        %4262 = vmatpush2.msra.mxu0 0.0
        %4263 = vmatprep.subr.mxu0 0.0
        %4264 = vmatpush2.msra.mxu0 0.0
        %4265 = vmatprep.subr.mxu0 0.0
        %4266 = vmatpush2.msra.mxu0 0.0
        %4267 = vmatprep.subr.mxu0 0.0
        %4268 = vmatpush2.msra.mxu0 0.0
        %4269 = vmatprep.subr.mxu0 0.0
        %4270 = vmatpush2.msra.mxu0 0.0
        %4271 = vmatprep.subr.mxu0 0.0
        %4272 = vmatpush2.msra.mxu0 0.0
        %4273 = vmatprep.subr.mxu0 0.0
        %4274 = vmatpush2.msra.mxu0 0.0
        %4275 = vmatprep.mubr.f32.mxu0 0.0
        %4276 = vmatmul.mubr.f32.gmra.mxu0 %v4206
        %v4277 = vpop.f32.mrf.mxu0
        %v4278 = vadd.f32 %v4203, %v4277
        %v4279 = vpop.f32.mrf.mxu0
        %4280 = vmatprep.mubr.f32.mxu0 0.0
        %4281 = vmatmul.mubr.f32.gmra.mxu0 %v4209
        %v4282 = vpop.f32.mrf.mxu0
        %v4283 = vadd.f32 %v4203, %v4282
        %v4284 = vpop.f32.mrf.mxu0
        %4285 = vdwg.mxu0
        %v4286 = vmax.f32 %v4278, 0.0
        %v4287 = vmax.f32 %v4283, 0.0
        %v4288 = vld [vmem:[%s946] sm:$0xff]
        %v4289 = vld [vmem:[%s946 + $0x8] sm:$0xff]
        %v4290 = vld [vmem:[%s946 + $0x10] sm:$0xff]
        %v4291 = vld [vmem:[%s946 + $0x18] sm:$0xff]
        %v4292 = vld [vmem:[%s946 + $0x20] sm:$0xff]
        %v4293 = vld [vmem:[%s946 + $0x28] sm:$0xff]
        %v4294 = vld [vmem:[%s946 + $0x30] sm:$0xff]
        %v4295 = vld [vmem:[%s946 + $0x38] sm:$0xff]
        %v4296 = vld [vmem:[%s949] sm:$0x1]
        %v4298 = vlaneseq
        %v4299 = vshrl.u32 %v4298, 7
        %v4300 = vsub.s32 0, %v4299
        %v4301 = vrot.slane %v4296, %v4300
        %vm4303 = vcmask 523264
        %v4305 = vsel %vm4303, %v4286, 0
        %v4308 = vsel %vm4303, %v4287, 0
        %4310 = vmatprep.subr.mxu0 0.0
        %4311 = vmatpush1.msra.mxu0 0.0
        %4312 = vmatprep.subr.mxu0 0.0
        %4313 = vmatpush1.msra.mxu0 0.0
        %4314 = vmatprep.subr.mxu0 0.0
        %4315 = vmatpush1.msra.mxu0 0.0
        %4316 = vmatprep.subr.mxu0 0.0
        %4317 = vmatpush1.msra.mxu0 0.0
        %4318 = vmatprep.subr.mxu0 0.0
        %4319 = vmatpush1.msra.mxu0 0.0
        %4320 = vmatprep.subr.mxu0 0.0
        %4321 = vmatpush1.msra.mxu0 0.0
        %4322 = vmatprep.subr.mxu0 0.0
        %4323 = vmatpush1.msra.mxu0 0.0
        %4324 = vmatprep.subr.mxu0 0.0
        %4325 = vmatpush1.msra.mxu0 0.0
        %4326 = vmatprep.subr.mxu0 0.0
        %4327 = vmatpush1.msra.mxu0 %v4295
        %4328 = vmatprep.subr.mxu0 0.0
        %4329 = vmatpush1.msra.mxu0 %v4294
        %4330 = vmatprep.subr.mxu0 0.0
        %4331 = vmatpush1.msra.mxu0 %v4293
        %4332 = vmatprep.subr.mxu0 0.0
        %4333 = vmatpush1.msra.mxu0 %v4292
        %4334 = vmatprep.subr.mxu0 0.0
        %4335 = vmatpush1.msra.mxu0 %v4291
        %4336 = vmatprep.subr.mxu0 0.0
        %4337 = vmatpush1.msra.mxu0 %v4290
        %4338 = vmatprep.subr.mxu0 0.0
        %4339 = vmatpush1.msra.mxu0 %v4289
        %4340 = vmatprep.subr.mxu0 0.0
        %4341 = vmatpush1.msra.mxu0 %v4288
        %4342 = vmatprep.subr.mxu0 0.0
        %4343 = vmatpush2.msra.mxu0 0.0
        %4344 = vmatprep.subr.mxu0 0.0
        %4345 = vmatpush2.msra.mxu0 0.0
        %4346 = vmatprep.subr.mxu0 0.0
        %4347 = vmatpush2.msra.mxu0 0.0
        %4348 = vmatprep.subr.mxu0 0.0
        %4349 = vmatpush2.msra.mxu0 0.0
        %4350 = vmatprep.subr.mxu0 0.0
        %4351 = vmatpush2.msra.mxu0 0.0
        %4352 = vmatprep.subr.mxu0 0.0
        %4353 = vmatpush2.msra.mxu0 0.0
        %4354 = vmatprep.subr.mxu0 0.0
        %4355 = vmatpush2.msra.mxu0 0.0
        %4356 = vmatprep.subr.mxu0 0.0
        %4357 = vmatpush2.msra.mxu0 0.0
        %4358 = vmatprep.subr.mxu0 0.0
        %4359 = vmatpush2.msra.mxu0 0.0
        %4360 = vmatprep.subr.mxu0 0.0
        %4361 = vmatpush2.msra.mxu0 0.0
        %4362 = vmatprep.subr.mxu0 0.0
        %4363 = vmatpush2.msra.mxu0 0.0
        %4364 = vmatprep.subr.mxu0 0.0
        %4365 = vmatpush2.msra.mxu0 0.0
        %4366 = vmatprep.subr.mxu0 0.0
        %4367 = vmatpush2.msra.mxu0 0.0
        %4368 = vmatprep.subr.mxu0 0.0
        %4369 = vmatpush2.msra.mxu0 0.0
        %4370 = vmatprep.subr.mxu0 0.0
        %4371 = vmatpush2.msra.mxu0 0.0
        %4372 = vmatprep.subr.mxu0 0.0
        %4373 = vmatpush2.msra.mxu0 0.0
        %4374 = vmatprep.mubr.f32.mxu0 0.0
        %4375 = vmatmul.mubr.f32.gmra.mxu0 %v4305
        %v4376 = vpop.f32.mrf.mxu0
        %v4377 = vadd.f32 %v4301, %v4376
        %v4378 = vpop.f32.mrf.mxu0
        %4379 = vmatprep.mubr.f32.mxu0 0.0
        %4380 = vmatmul.mubr.f32.gmra.mxu0 %v4308
        %v4381 = vpop.f32.mrf.mxu0
        %v4382 = vadd.f32 %v4301, %v4381
        %v4383 = vpop.f32.mrf.mxu0
        %4384 = vdwg.mxu0
        %v4385 = vadd.f32 %v4377, %v4192
        %v4386 = vadd.f32 %v4382, %v4193
        %v4387 = vld [vmem:[%s952] sm:$0x1]
        %v4388 = vld [vmem:[%s955] sm:$0x1]
        %v4389 = vsel %vm978, %v4385, 0.0
        %4390 = vadd.xlane.f32.xlu0 %v4389
        %v4391 = vpop.xlane.xlu0 %4390
        %v4392 = vsel %vm978, %v4386, 0.0
        %4393 = vadd.xlane.f32.xlu0 %v4392
        %v4394 = vpop.xlane.xlu0 %4393
        %v4395 = vmul.f32 %v4391, %v2462
        %v4396 = vmul.f32 %v4394, %v2462
        %v4397 = vsub.f32 %v4385, %v4395
        %v4398 = vsub.f32 %v4386, %v4396
        %v4399 = vmul.f32 %v4397, %v4397
        %v4400 = vmul.f32 %v4398, %v4398
        %v4401 = vsel %vm978, %v4399, 0.0
        %4402 = vadd.xlane.f32.xlu0 %v4401
        %v4403 = vpop.xlane.xlu0 %4402
        %v4404 = vsel %vm978, %v4400, 0.0
        %4405 = vadd.xlane.f32.xlu0 %v4404
        %v4406 = vpop.xlane.xlu0 %4405
        %v4407 = vmul.f32 %v4403, %v2462
        %v4408 = vmul.f32 %v4406, %v2462
        %v4409 = vadd.f32 %v4407, 1e-05
        %v4410 = vadd.f32 %v4408, 1e-05
        %v4411 = vrsqrt.pop %v4409
        %v4412 = vrsqrt.pop %v4410
        %v4413 = vmul.f32 %v4397, %v4411
        %v4414 = vmul.f32 %v4398, %v4412
        %v4416 = vlaneseq
        %v4417 = vshrl.u32 %v4416, 7
        %v4418 = vsub.s32 0, %v4417
        %v4419 = vrot.slane %v4387, %v4418
        %v4421 = vmul.f32 %v4413, %v4419
        %v4422 = vmul.f32 %v4414, %v4419
        %v4424 = vlaneseq
        %v4425 = vshrl.u32 %v4424, 7
        %v4426 = vsub.s32 0, %v4425
        %v4427 = vrot.slane %v4388, %v4426
        %v4429 = vadd.f32 %v4421, %v4427
        %v4430 = vadd.f32 %v4422, %v4427
        %4431 = vst.msk [vmem:[#allocation2] sm:$0xff] %vm978, %v4429
        %4432 = vst.msk [vmem:[#allocation2 + $0x8] sm:$0xff] %vm978, %v4430
        %p4433 = scmp.eq.s32.totalorder %s37, 1
        // Predicated region
        $region117: #{speech_transformer_decoder_forward.1} parent=111 // pred_check
          %p4434 = pneg %p4433
        $region118: #{speech_transformer_decoder_forward.1} parent=111 // pred_check_branch
          %4436 = sbr.rel (%p4434) target = $region120
        $region119: #{speech_transformer_decoder_forward.1} parent=111 // pred_region
          %v4437 = vld [vmem:[%s20] sm:$0x1]
          %v4438 = vld [vmem:[%s21] sm:$0x1]
          %v4439 = vsel %vm978, %v4429, 0.0
          %4440 = vadd.xlane.f32.xlu0 %v4439
          %v4441 = vpop.xlane.xlu0 %4440
          %v4442 = vsel %vm978, %v4430, 0.0
          %4443 = vadd.xlane.f32.xlu0 %v4442
          %v4444 = vpop.xlane.xlu0 %4443
          %v4445 = vmul.f32 %v4441, %v2462
          %v4446 = vmul.f32 %v4444, %v2462
          %v4447 = vsub.f32 %v4429, %v4445
          %v4448 = vsub.f32 %v4430, %v4446
          %v4449 = vmul.f32 %v4447, %v4447
          %v4450 = vmul.f32 %v4448, %v4448
          %v4451 = vsel %vm978, %v4449, 0.0
          %4452 = vadd.xlane.f32.xlu0 %v4451
          %v4453 = vpop.xlane.xlu0 %4452
          %v4454 = vsel %vm978, %v4450, 0.0
          %4455 = vadd.xlane.f32.xlu0 %v4454
          %v4456 = vpop.xlane.xlu0 %4455
          %v4457 = vmul.f32 %v4453, %v2462
          %v4458 = vmul.f32 %v4456, %v2462
          %v4459 = vadd.f32 %v4457, 1e-05
          %v4460 = vadd.f32 %v4458, 1e-05
          %v4461 = vrsqrt.pop %v4459
          %v4462 = vrsqrt.pop %v4460
          %v4463 = vmul.f32 %v4447, %v4461
          %v4464 = vmul.f32 %v4448, %v4462
          %v4466 = vlaneseq
          %v4467 = vshrl.u32 %v4466, 7
          %v4468 = vsub.s32 0, %v4467
          %v4469 = vrot.slane %v4437, %v4468
          %v4471 = vmul.f32 %v4463, %v4469
          %v4472 = vmul.f32 %v4464, %v4469
          %v4474 = vlaneseq
          %v4475 = vshrl.u32 %v4474, 7
          %v4476 = vsub.s32 0, %v4475
          %v4477 = vrot.slane %v4438, %v4476
          %v4479 = vadd.f32 %v4471, %v4477
          %v4480 = vadd.f32 %v4472, %v4477
          %v4481 = vld [vmem:[%s22] sm:$0xff]
          %v4482 = vld [vmem:[%s22 + $0x8] sm:$0xff]
          %v4483 = vld [vmem:[%s22 + $0x10] sm:$0xff]
          %v4484 = vld [vmem:[%s22 + $0x18] sm:$0xff]
          %v4486 = vsel %vm978, %v4479, 0
          %v4489 = vsel %vm978, %v4480, 0
          %4491 = vmatprep.subr.mxu0 0.0
          %4492 = vmatpush1.msra.mxu0 0.0
          %4493 = vmatprep.subr.mxu0 0.0
          %4494 = vmatpush1.msra.mxu0 0.0
          %4495 = vmatprep.subr.mxu0 0.0
          %4496 = vmatpush1.msra.mxu0 0.0
          %4497 = vmatprep.subr.mxu0 0.0
          %4498 = vmatpush1.msra.mxu0 0.0
          %4499 = vmatprep.subr.mxu0 0.0
          %4500 = vmatpush1.msra.mxu0 0.0
          %4501 = vmatprep.subr.mxu0 0.0
          %4502 = vmatpush1.msra.mxu0 0.0
          %4503 = vmatprep.subr.mxu0 0.0
          %4504 = vmatpush1.msra.mxu0 0.0
          %4505 = vmatprep.subr.mxu0 0.0
          %4506 = vmatpush1.msra.mxu0 0.0
          %4507 = vmatprep.subr.mxu0 0.0
          %4508 = vmatpush1.msra.mxu0 0.0
          %4509 = vmatprep.subr.mxu0 0.0
          %4510 = vmatpush1.msra.mxu0 0.0
          %4511 = vmatprep.subr.mxu0 0.0
          %4512 = vmatpush1.msra.mxu0 0.0
          %4513 = vmatprep.subr.mxu0 0.0
          %4514 = vmatpush1.msra.mxu0 0.0
          %4515 = vmatprep.subr.mxu0 0.0
          %4516 = vmatpush1.msra.mxu0 %v4484
          %4517 = vmatprep.subr.mxu0 0.0
          %4518 = vmatpush1.msra.mxu0 %v4483
          %4519 = vmatprep.subr.mxu0 0.0
          %4520 = vmatpush1.msra.mxu0 %v4482
          %4521 = vmatprep.subr.mxu0 0.0
          %4522 = vmatpush1.msra.mxu0 %v4481
          %4523 = vmatprep.subr.mxu0 0.0
          %4524 = vmatpush2.msra.mxu0 0.0
          %4525 = vmatprep.subr.mxu0 0.0
          %4526 = vmatpush2.msra.mxu0 0.0
          %4527 = vmatprep.subr.mxu0 0.0
          %4528 = vmatpush2.msra.mxu0 0.0
          %4529 = vmatprep.subr.mxu0 0.0
          %4530 = vmatpush2.msra.mxu0 0.0
          %4531 = vmatprep.subr.mxu0 0.0
          %4532 = vmatpush2.msra.mxu0 0.0
          %4533 = vmatprep.subr.mxu0 0.0
          %4534 = vmatpush2.msra.mxu0 0.0
          %4535 = vmatprep.subr.mxu0 0.0
          %4536 = vmatpush2.msra.mxu0 0.0
          %4537 = vmatprep.subr.mxu0 0.0
          %4538 = vmatpush2.msra.mxu0 0.0
          %4539 = vmatprep.subr.mxu0 0.0
          %4540 = vmatpush2.msra.mxu0 0.0
          %4541 = vmatprep.subr.mxu0 0.0
          %4542 = vmatpush2.msra.mxu0 0.0
          %4543 = vmatprep.subr.mxu0 0.0
          %4544 = vmatpush2.msra.mxu0 0.0
          %4545 = vmatprep.subr.mxu0 0.0
          %4546 = vmatpush2.msra.mxu0 0.0
          %4547 = vmatprep.subr.mxu0 0.0
          %4548 = vmatpush2.msra.mxu0 0.0
          %4549 = vmatprep.subr.mxu0 0.0
          %4550 = vmatpush2.msra.mxu0 0.0
          %4551 = vmatprep.subr.mxu0 0.0
          %4552 = vmatpush2.msra.mxu0 0.0
          %4553 = vmatprep.subr.mxu0 0.0
          %4554 = vmatpush2.msra.mxu0 0.0
          %4555 = vmatprep.mubr.f32.mxu0 0.0
          %4556 = vmatmul.mubr.f32.gmra.mxu0 %v4486
          %v4557 = vpop.f32.mrf.mxu0
          %v4558 = vadd.f32 0.0, %v4557
          %v4559 = vpop.f32.mrf.mxu0
          %4560 = vmatprep.mubr.f32.mxu0 0.0
          %4561 = vmatmul.mubr.f32.gmra.mxu0 %v4489
          %v4562 = vpop.f32.mrf.mxu0
          %v4563 = vadd.f32 0.0, %v4562
          %v4564 = vpop.f32.mrf.mxu0
          %4565 = vdwg.mxu0
          %v4566 = vsel %vm978, %v4558, -inf
          %4567 = vmax.xlane.f32.xlu0 %v4566
          %v4568 = vpop.xlane.xlu0 %4567
          %v4569 = vsel %vm978, %v4563, -inf
          %4570 = vmax.xlane.f32.xlu0 %v4569
          %v4571 = vpop.xlane.xlu0 %4570
          %v4572 = vsub.f32 %v4558, %v4568
          %v4573 = vsub.f32 %v4563, %v4571
          %v4574 = vmul.f32 %v4572, 1.442695
          %v4575 = vpow.pop %v4574
          %v4576 = vmul.f32 %v4573, 1.442695
          %v4577 = vpow.pop %v4576
          %v4578 = vsel %vm978, %v4575, 0.0
          %4579 = vadd.xlane.f32.xlu0 %v4578
          %v4580 = vpop.xlane.xlu0 %4579
          %v4581 = vsel %vm978, %v4577, 0.0
          %4582 = vadd.xlane.f32.xlu0 %v4581
          %v4583 = vpop.xlane.xlu0 %4582
          %v4584 = vlog2.pop %v4580
          %v4585 = vmul.f32 %v4584, 0.6931472
          %v4586 = vlog2.pop %v4583
          %v4587 = vmul.f32 %v4586, 0.6931472
          %v4588 = vsub.f32 %v4572, %v4585
          %v4589 = vsub.f32 %v4573, %v4587
          %4590 = vst.msk [vmem:[#allocation3] sm:$0xff] %vm978, %v4588
          %4591 = vst.msk [vmem:[#allocation3 + $0x8] sm:$0xff] %vm978, %v4589
        $region120: #{speech_transformer_decoder_forward.1} parent=111 // pred_fallthru
          _
        // Predicated region
        $region121: #{speech_transformer_decoder_forward.1} parent=111 // pred_check
          %p4592 = pneg %p613
        $region122: #{speech_transformer_decoder_forward.1} parent=111 // pred_check_branch
          %4594 = sbr.rel (%p4592) target = $region124
        $region123: #{speech_transformer_decoder_forward.1} parent=111 // pred_region
          %s4596 = ssub.s32 256, 256
          %4597 = vsyncadd [#allocation4], %s4596
          %s4598 = sshll.u32 [#allocation3], 4
          %s4599 = int_to_ptr.vmem [resolvable:$true] %s4598
          %4604 = dma.vmem_to_hbm [thread:$0]  %s4599, 256, %s23, [#allocation4], 128, 128, 8
        $region124: #{speech_transformer_decoder_forward.1} parent=111 // pred_fallthru
          _
        // Predicated region
        $region125: #{speech_transformer_decoder_forward.1} parent=111 // pred_check
          %p4605 = pneg %p634
        $region126: #{speech_transformer_decoder_forward.1} parent=111 // pred_check_branch
          %4607 = sbr.rel (%p4605) target = $region128
        $region127: #{speech_transformer_decoder_forward.1} parent=111 // pred_region
          _
        $region128: #{speech_transformer_decoder_forward.1} parent=111 // pred_fallthru
          _
        // Predicated region
        $region129: #{speech_transformer_decoder_forward.1} parent=111 // pred_check
          %p4608 = pneg %p613
        $region130: #{speech_transformer_decoder_forward.1} parent=111 // pred_check_branch
          %4610 = sbr.rel (%p4608) target = $region132
        $region131: #{speech_transformer_decoder_forward.1} parent=111 // pred_region
          %4611 = dma.done [#allocation4], 256
        $region132: #{speech_transformer_decoder_forward.1} parent=111 // pred_fallthru
          _
        // Predicated region
        $region133: #{speech_transformer_decoder_forward.1} parent=111 // pred_check
          %p4612 = pneg %p634
        $region134: #{speech_transformer_decoder_forward.1} parent=111 // pred_check_branch
          %4614 = sbr.rel (%p4612) target = $region136
        $region135: #{speech_transformer_decoder_forward.1} parent=111 // pred_region
          _
        $region136: #{speech_transformer_decoder_forward.1} parent=111 // pred_fallthru
          _
      $region112: #{speech_transformer_decoder_forward.1} parent=5 // pred_fallthru
        _
      %p4615 = scmp.le.s32.totalorder 2, %s32
      // Predicated region
      $region137: #{speech_transformer_decoder_forward.1} parent=5 // pred_check
        %p4616 = pneg %p4615
      $region138: #{speech_transformer_decoder_forward.1} parent=5 // pred_check_branch
        %4618 = sbr.rel (%p4616) target = $region140
      $region139: #{speech_transformer_decoder_forward.1} parent=5 // pred_region
        %s4619 = ssub.s32 %s32, 2
      $region140: #{speech_transformer_decoder_forward.1} parent=5 // pred_fallthru
        _
    $region6: #{speech_transformer_decoder_forward.1} parent=1 // loop_footer
      %s36 = sadd.s32 1, %s32
    $region7: #{speech_transformer_decoder_forward.1} parent=1 // loop_footer_branch
      %31 = sbr.rel target = $region3
    $region8: #{speech_transformer_decoder_forward.1} parent=1 // loop_exit
      _
    %4620 = vsyncpa [#allocation4], 1
    %s4621 = scalar_lea.sflag [#allocation4], 1
    %4622 = vsyncpa %s4621, 1

</llo_original>
